<compile_context>
chip_gen: v7x
topology: tpu7x:2x2x1
jax: 0.10.0
libtpu: 0.0.40
codegen_flags: <defaults>
</compile_context>

<pallas_src>
import jax
import jax.numpy as jnp
from jax.experimental import pallas as pl
from jax.experimental.pallas import tpu as pltpu

B = 2            # batch
K = 16384        # flattened input features (1 * 128 * 128)
H1 = 128         # fc11 out
H2 = 64          # fc12 out
OUT = 10         # fc13 out (assumed, see TODO above)
TK = 8192        # reduction tile along K for fc11 (2 grid steps; ~4.6 MiB VMEM)


def mlp_kernel(x_ref, w1_ref, b1_ref, w2_ref, b2_ref, w3_ref, b3_ref,
               out_ref, acc_ref):
    """Fused 3-layer MLP. Grid axis 0 tiles the fc11 reduction dim (K)."""
    k = pl.program_id(0)

    @pl.when(k == 0)
    def _():
        acc_ref[...] = jnp.zeros_like(acc_ref)

    # x is fully resident in VMEM; slice the current K-window out of it.
    start = pl.multiple_of(k * TK, TK)
    x_tile = x_ref[:, pl.ds(start, TK)].astype(jnp.bfloat16)   # (B, TK) bf16

    # fc11 partial matmul: bf16 x bf16 -> f32 accumulate on the MXU.
    acc_ref[...] += jnp.dot(x_tile, w1_ref[...],
                            preferred_element_type=jnp.float32)

    @pl.when(k == pl.num_programs(0) - 1)
    def _():
        h1 = jnp.maximum(acc_ref[...] + b1_ref[...], 0.0)          # relu(fc11)
        h2 = jnp.maximum(
            jnp.dot(h1, w2_ref[...], preferred_element_type=jnp.float32)
            + b2_ref[...], 0.0)                                     # relu(fc12)
        y = jnp.dot(h2, w3_ref[...],
                    preferred_element_type=jnp.float32) + b3_ref[...]  # fc13
        out_ref[...] = y.astype(out_ref.dtype)


def model_forward(x_nchw, params):
    w1, b1, w2, b2, w3, b3 = params
    x = x_nchw.reshape(x_nchw.shape[0], -1)           # flatten(start_dim=1)
    assert x.shape == (B, K)
    # W1 should already be stored as bf16 (see quantize_params) so the 4 MiB
    # stream is what hits HBM; the astype is a no-op in that case.
    w1 = w1.astype(jnp.bfloat16)

    grid = (K // TK,)

    # Advisory cost estimate: this call is dominated by the bf16 W1 HBM read.
    flops = 2 * B * K * H1 + 2 * B * H1 * H2 + 2 * B * H2 * OUT
    bytes_accessed = (4 * B * K                       # x (f32)
                      + 2 * K * H1                    # W1 (bf16)
                      + 4 * (H1                       # b1
                             + H1 * H2 + H2           # W2, b2
                             + H2 * OUT + OUT         # W3, b3
                             + B * OUT))              # out
    cost = pl.CostEstimate(flops=flops, transcendentals=0,
                           bytes_accessed=bytes_accessed)

    return pl.pallas_call(
        mlp_kernel,
        out_shape=jax.ShapeDtypeStruct((B, OUT), jnp.float32),
        grid_spec=pltpu.PrefetchScalarGridSpec(
            num_scalar_prefetch=0,
            grid=grid,
            in_specs=[
                pl.BlockSpec((B, K), lambda k: (0, 0)),     # x (fully resident)
                pl.BlockSpec((TK, H1), lambda k: (k, 0)),   # W1 bf16 tile along K
                pl.BlockSpec((1, H1), lambda k: (0, 0)),    # b1 (resident)
                pl.BlockSpec((H1, H2), lambda k: (0, 0)),   # W2 (resident)
                pl.BlockSpec((1, H2), lambda k: (0, 0)),    # b2 (resident)
                pl.BlockSpec((H2, OUT), lambda k: (0, 0)),  # W3 (resident)
                pl.BlockSpec((1, OUT), lambda k: (0, 0)),   # b3 (resident)
            ],
            out_specs=pl.BlockSpec((B, OUT), lambda k: (0, 0)),
            scratch_shapes=[pltpu.VMEM((B, H1), jnp.float32)],
        ),
        compiler_params=pltpu.CompilerParams(
            dimension_semantics=("arbitrary",),   # K is a reduction axis
        ),
        cost_estimate=cost,
    )(x, w1, b1, w2, b2, w3, b3)


def init_params(key):
    """Deterministic f32 master params (uniform, matches the Linear shapes)."""
    ks = jax.random.split(key, 6)

    def lin(kw, kb, fan_in, fan_out):
        bound = 1.0 / jnp.sqrt(fan_in)
        w = jax.random.uniform(kw, (fan_in, fan_out), jnp.float32, -bound, bound)
        b = jax.random.uniform(kb, (1, fan_out), jnp.float32, -bound, bound)
        return w, b

    w1, b1 = lin(ks[0], ks[1], K, H1)     # fc11: Linear(16384, 128)
    w2, b2 = lin(ks[2], ks[3], H1, H2)    # fc12: Linear(128, 64)
    w3, b3 = lin(ks[4], ks[5], H2, OUT)   # fc13: Linear(64, 10)  (assumed)
    return (w1, b1, w2, b2, w3, b3)


def quantize_params(params_f32):
    """Kernel-side params: W1 stored as bf16 (halves the HBM stream)."""
    w1, b1, w2, b2, w3, b3 = params_f32
    return (w1.astype(jnp.bfloat16), b1, w2, b2, w3, b3)


def reference_forward(x_nchw, params_f32):
    w1, b1, w2, b2, w3, b3 = params_f32
    x = x_nchw.reshape(x_nchw.shape[0], -1)
    h1 = jax.nn.relu(x @ w1 + b1)
    h2 = jax.nn.relu(h1 @ w2 + b2)
    return h2 @ w3 + b3


if __name__ == "__main__":
    key = jax.random.PRNGKey(0)
    k_x, k_p = jax.random.split(key)

    # Input consistent with fc11's 16384 features: [B, 1, 128, 128] (NCHW)
    x = jax.random.normal(k_x, (B, 1, 128, 128), jnp.float32)
    params_f32 = init_params(k_p)
    params_kernel = quantize_params(params_f32)

    out = model_forward(x, params_kernel)
    out = jax.block_until_ready(out)

    ref = reference_forward(x, params_f32)
    assert out.shape == (B, OUT)
    # Accuracy gate for the bf16 W1/x streaming vs the pure-f32 reference
    # (observed deviation ~1e-4; 2e-3 is a conservative bound).
    assert jnp.allclose(out, ref, atol=2e-3, rtol=2e-3), "mismatch vs reference"

    print("KERNEL_OK")
</pallas_src>

<mosaic_0001>
module attributes {stable_mosaic.version = 11 : i64} {
  func.func @mlp_kernel(%arg0: i32, %arg1: memref<2x16384xf32, #tpu.memory_space<vmem>>, %arg2: memref<8192x128xbf16, #tpu.memory_space<vmem>>, %arg3: memref<1x128xf32, #tpu.memory_space<vmem>>, %arg4: memref<128x64xf32, #tpu.memory_space<vmem>>, %arg5: memref<1x64xf32, #tpu.memory_space<vmem>>, %arg6: memref<64x10xf32, #tpu.memory_space<vmem>>, %arg7: memref<1x10xf32, #tpu.memory_space<vmem>>, %arg8: memref<2x10xf32, #tpu.memory_space<vmem>>, %arg9: memref<2x128xf32, #tpu.memory_space<vmem>>) attributes {dimension_semantics = [#tpu.dimension_semantics<arbitrary>], iteration_bounds = array<i64: 2>, scalar_prefetch = 0 : i64, scratch_operands = 1 : i64, tpu.core_type = #tpu.core_type<tc>, window_params = [{pipeline_mode = #tpu.pipeline_mode<synchronous>, transform_indices = @transform_0, window_bounds = array<i64: 2, 16384>}, {transform_indices = @transform_1, window_bounds = array<i64: 8192, 128>}, {pipeline_mode = #tpu.pipeline_mode<synchronous>, transform_indices = @transform_2, window_bounds = array<i64: 1, 128>}, {pipeline_mode = #tpu.pipeline_mode<synchronous>, transform_indices = @transform_3, window_bounds = array<i64: 128, 64>}, {pipeline_mode = #tpu.pipeline_mode<synchronous>, transform_indices = @transform_4, window_bounds = array<i64: 1, 64>}, {pipeline_mode = #tpu.pipeline_mode<synchronous>, transform_indices = @transform_5, window_bounds = array<i64: 64, 10>}, {pipeline_mode = #tpu.pipeline_mode<synchronous>, transform_indices = @transform_6, window_bounds = array<i64: 1, 10>}, {pipeline_mode = #tpu.pipeline_mode<synchronous>, transform_indices = @transform_7, window_bounds = array<i64: 2, 10>}]} {
    %c0_i32 = arith.constant 0 : i32
    %0 = arith.cmpi eq, %arg0, %c0_i32 : i32
    %1 = arith.extui %0 : i1 to i32
    %c0_i32_0 = arith.constant 0 : i32
    %2 = arith.cmpi ne, %1, %c0_i32_0 : i32
    scf.if %2 {
      %cst_8 = arith.constant 0.000000e+00 : f32
      %16 = vector.broadcast %cst_8 : f32 to vector<2x128xf32>
      %c0_9 = arith.constant 0 : index
      %c0_10 = arith.constant 0 : index
      %17 = vector.load %arg9[%c0_9, %c0_10] : memref<2x128xf32, #tpu.memory_space<vmem>>, vector<2x128xf32>
      tpu.vector_store %arg9[%c0_9, %c0_10], %16 {strides = array<i32>} : memref<2x128xf32, #tpu.memory_space<vmem>>, vector<2x128xf32>,
    } else {
    }
    %c8192_i32 = arith.constant 8192 : i32
    %3 = arith.muli %arg0, %c8192_i32 : i32
    %4 = tpu.assume_multiple %3, 8192 : i32
    %c0 = arith.constant 0 : index
    %5 = arith.index_cast %4 : i32 to index
    %6 = vector.load %arg1[%c0, %5] : memref<2x16384xf32, #tpu.memory_space<vmem>>, vector<2x8192xf32>
    %7 = arith.truncf %6 : vector<2x8192xf32> to vector<2x8192xbf16>
    %c0_1 = arith.constant 0 : index
    %c0_2 = arith.constant 0 : index
    %8 = vector.load %arg9[%c0_1, %c0_2] : memref<2x128xf32, #tpu.memory_space<vmem>>, vector<2x128xf32>
    %c0_3 = arith.constant 0 : index
    %c0_4 = arith.constant 0 : index
    %9 = vector.load %arg2[%c0_3, %c0_4] : memref<8192x128xbf16, #tpu.memory_space<vmem>>, vector<8192x128xbf16>
    %cst = arith.constant dense<0.000000e+00> : vector<2x128xf32>
    %10 = tpu.matmul %7, %9, %cst {dimension_numbers = #tpu.dot_dimension_numbers<[1], [0], [0], [1], [0, 0, 1, 1], [], []>} : vector<2x8192xbf16>, vector<8192x128xbf16>, vector<2x128xf32> -> vector<2x128xf32>
    %11 = arith.addf %8, %10 : vector<2x128xf32>
    %c0_5 = arith.constant 0 : index
    %c0_6 = arith.constant 0 : index
    %12 = vector.load %arg9[%c0_5, %c0_6] : memref<2x128xf32, #tpu.memory_space<vmem>>, vector<2x128xf32>
    tpu.vector_store %arg9[%c0_5, %c0_6], %11 {strides = array<i32>} : memref<2x128xf32, #tpu.memory_space<vmem>>, vector<2x128xf32>,
    %c1_i32 = arith.constant 1 : i32
    %13 = arith.cmpi eq, %arg0, %c1_i32 : i32
    %14 = arith.extui %13 : i1 to i32
    %c0_i32_7 = arith.constant 0 : i32
    %15 = arith.cmpi ne, %14, %c0_i32_7 : i32
    scf.if %15 {
      %c0_8 = arith.constant 0 : index
      %c0_9 = arith.constant 0 : index
      %16 = vector.load %arg9[%c0_8, %c0_9] : memref<2x128xf32, #tpu.memory_space<vmem>>, vector<2x128xf32>
      %c0_10 = arith.constant 0 : index
      %c0_11 = arith.constant 0 : index
      %17 = vector.load %arg3[%c0_10, %c0_11] : memref<1x128xf32, #tpu.memory_space<vmem>>, vector<1x128xf32>
      %18 = vector.broadcast %17 : vector<1x128xf32> to vector<2x128xf32>
      %19 = arith.addf %16, %18 : vector<2x128xf32>
      %cst_12 = arith.constant 0.000000e+00 : f32
      %20 = vector.broadcast %cst_12 : f32 to vector<2x128xf32>
      %21 = arith.maximumf %19, %20 : vector<2x128xf32>
      %c0_13 = arith.constant 0 : index
      %c0_14 = arith.constant 0 : index
      %22 = vector.load %arg4[%c0_13, %c0_14] : memref<128x64xf32, #tpu.memory_space<vmem>>, vector<128x64xf32>
      %cst_15 = arith.constant dense<0.000000e+00> : vector<2x64xf32>
      %23 = tpu.matmul %21, %22, %cst_15 {dimension_numbers = #tpu.dot_dimension_numbers<[1], [0], [0], [1], [0, 0, 1, 1], [], []>} : vector<2x128xf32>, vector<128x64xf32>, vector<2x64xf32> -> vector<2x64xf32>
      %c0_16 = arith.constant 0 : index
      %c0_17 = arith.constant 0 : index
      %24 = vector.load %arg5[%c0_16, %c0_17] : memref<1x64xf32, #tpu.memory_space<vmem>>, vector<1x64xf32>
      %25 = vector.broadcast %24 : vector<1x64xf32> to vector<2x64xf32>
      %26 = arith.addf %23, %25 : vector<2x64xf32>
      %cst_18 = arith.constant 0.000000e+00 : f32
      %27 = vector.broadcast %cst_18 : f32 to vector<2x64xf32>
      %28 = arith.maximumf %26, %27 : vector<2x64xf32>
      %c0_19 = arith.constant 0 : index
      %c0_20 = arith.constant 0 : index
      %29 = vector.load %arg6[%c0_19, %c0_20] : memref<64x10xf32, #tpu.memory_space<vmem>>, vector<64x10xf32>
      %cst_21 = arith.constant dense<0.000000e+00> : vector<2x10xf32>
      %30 = tpu.matmul %28, %29, %cst_21 {dimension_numbers = #tpu.dot_dimension_numbers<[1], [0], [0], [1], [0, 0, 1, 1], [], []>} : vector<2x64xf32>, vector<64x10xf32>, vector<2x10xf32> -> vector<2x10xf32>
      %c0_22 = arith.constant 0 : index
      %c0_23 = arith.constant 0 : index
      %31 = vector.load %arg7[%c0_22, %c0_23] : memref<1x10xf32, #tpu.memory_space<vmem>>, vector<1x10xf32>
      %32 = vector.broadcast %31 : vector<1x10xf32> to vector<2x10xf32>
      %33 = arith.addf %30, %32 : vector<2x10xf32>
      %c0_24 = arith.constant 0 : index
      %c0_25 = arith.constant 0 : index
      %34 = vector.load %arg8[%c0_24, %c0_25] : memref<2x10xf32, #tpu.memory_space<vmem>>, vector<2x10xf32>
      tpu.vector_store %arg8[%c0_24, %c0_25], %33 {strides = array<i32>} : memref<2x10xf32, #tpu.memory_space<vmem>>, vector<2x10xf32>,
    } else {
    }
    return
  }
  func.func @transform_0(%arg0: i32) -> (i32, i32) {
    %c0_i32 = arith.constant 0 : i32
    %c0_i32_0 = arith.constant 0 : i32
    %c0_i32_1 = arith.constant 0 : i32
    return %c0_i32, %c0_i32_0 : i32, i32
  }
  func.func @transform_1(%arg0: i32) -> (i32, i32) {
    %c0_i32 = arith.constant 0 : i32
    %c0_i32_0 = arith.constant 0 : i32
    return %arg0, %c0_i32 : i32, i32
  }
  func.func @transform_2(%arg0: i32) -> (i32, i32) {
    %c0_i32 = arith.constant 0 : i32
    %c0_i32_0 = arith.constant 0 : i32
    %c0_i32_1 = arith.constant 0 : i32
    return %c0_i32, %c0_i32_0 : i32, i32
  }
  func.func @transform_3(%arg0: i32) -> (i32, i32) {
    %c0_i32 = arith.constant 0 : i32
    %c0_i32_0 = arith.constant 0 : i32
    %c0_i32_1 = arith.constant 0 : i32
    return %c0_i32, %c0_i32_0 : i32, i32
  }
  func.func @transform_4(%arg0: i32) -> (i32, i32) {
    %c0_i32 = arith.constant 0 : i32
    %c0_i32_0 = arith.constant 0 : i32
    %c0_i32_1 = arith.constant 0 : i32
    return %c0_i32, %c0_i32_0 : i32, i32
  }
  func.func @transform_5(%arg0: i32) -> (i32, i32) {
    %c0_i32 = arith.constant 0 : i32
    %c0_i32_0 = arith.constant 0 : i32
    %c0_i32_1 = arith.constant 0 : i32
    return %c0_i32, %c0_i32_0 : i32, i32
  }
  func.func @transform_6(%arg0: i32) -> (i32, i32) {
    %c0_i32 = arith.constant 0 : i32
    %c0_i32_0 = arith.constant 0 : i32
    %c0_i32_1 = arith.constant 0 : i32
    return %c0_i32, %c0_i32_0 : i32, i32
  }
  func.func @transform_7(%arg0: i32) -> (i32, i32) {
    %c0_i32 = arith.constant 0 : i32
    %c0_i32_0 = arith.constant 0 : i32
    %c0_i32_1 = arith.constant 0 : i32
    return %c0_i32, %c0_i32_0 : i32, i32
  }
}

</mosaic_0001>

<llo_original>
// kernel: tpu_custom_call.1
$region0: #{tpu_custom_call.1}
  #allocation0 [shape = 'u32[]', space=smem, size = 0x4, offset = 0x4, fixed_abs, tag = 'smem constant byte address 0x4 - core index']
  #allocation1 [shape = 'u32[144,128]{1,0:T(1,128)}', space=vmem, size = 0x12000, scoped, tag = 'internal scratch']
  #allocation2 [shape = 'f32[2,128]{1,0:T(2,128)}', space=vmem, size = 0x400, scoped, tag = 'scratch operand']
  %s0 = inlined_call_operand.hbm [shape: f32[2,16384], index: 0, kind: input, shape index: {}]
  %s1 = inlined_call_operand.hbm [shape: bf16[16384,128], index: 1, kind: input, shape index: {}]
  %s2 = inlined_call_operand.hbm [shape: f32[1,128], index: 2, kind: input, shape index: {}]
  %s3 = inlined_call_operand.vmem [shape: f32[128,64], index: 3, kind: input, shape index: {}]
  %s4 = inlined_call_operand.hbm [shape: f32[1,64], index: 4, kind: input, shape index: {}]
  %s5 = inlined_call_operand.vmem [shape: f32[64,10], index: 5, kind: input, shape index: {}]
  %s6 = inlined_call_operand.hbm [shape: f32[1,10], index: 6, kind: input, shape index: {}]
  %s7 = inlined_call_operand.hbm [shape: f32[2,10], index: 7, kind: output, shape index: {}]
  %s8 = sld [smem:[#allocation0]]
  $region89: #{tpu_custom_call.1} parent=0
    _
  %s10 = ssub.s32 1, %s8
  %s11 = scalar_select 0, %s10, %s8
  $region1: #{tpu_custom_call.1} parent=0
    #allocation3 [shape = 'u8[131072]{0}', space=vmem, size = 0x20000, scoped, tag = 'input window, operand 0, single buffered']
    #allocation4 [shape = 's32[2]{0}', space=sflag, size = 0x8, scoped, tag = 'scoped memory for tpu_custom_call.1']
    #allocation5 [shape = 's32[2]{0}', space=sflag, size = 0x8, scoped, tag = 'scoped memory for tpu_custom_call.1']
    #allocation6 [shape = 'u8[4194304]{0}', space=vmem, size = 0x400000, scoped, tag = 'input window, operand 1']
    #allocation7 [shape = 's32[2]{0}', space=sflag, size = 0x8, scoped, tag = 'scoped memory for tpu_custom_call.1']
    #allocation8 [shape = 'u8[512]{0}', space=vmem, size = 0x400, scoped, tag = 'input window, operand 2, single buffered']
    #allocation9 [shape = 'u8[512]{0}', space=vmem, size = 0x400, scoped, tag = 'input window, operand 4, single buffered']
    #allocation10 [shape = 's32[1]{0}', space=sflag, size = 0x4, scoped, tag = 'scoped memory for tpu_custom_call.1']
    #allocation11 [shape = 'u8[512]{0}', space=vmem, size = 0x400, scoped, tag = 'input window, operand 6, single buffered']
    #allocation12 [shape = 'u8[1024]{0}', space=vmem, size = 0x400, scoped, tag = 'output window, operand 0, single buffered']
    %12 = vsyncpa [#allocation4], 0
    %13 = vsyncpa [#allocation7], 0
    %s14 = scalar_lea.sflag [#allocation7], 1
    %15 = vsyncpa %s14, 0
    %16 = vsyncpa [#allocation10], 0
    %17 = vsyncpa [#allocation5], 0
    loop: start=0, step=1, limit=4
    $region2: #{tpu_custom_call.1} parent=1 // loop_pre_header
      _
    $region3: #{tpu_custom_call.1} parent=1 // loop_header
      %s19 = sphi 0, %s23
      %p20 = scmp.ge.s32.totalorder %s19, 4
      %s27 = sphi 0, %s27
      %s29 = sphi 0, %s27
      %s30 = sphi 0, %s29
      %s44 = sphi 0, %s30
      %s50 = sphi 0, %s52
      %s53 = sphi 0, %s50
      %s54 = sphi 0, %s53
      %s70 = sphi 0, %s54
      %s74 = sphi 0, %s74
      %s76 = sphi 0, %s74
      %s77 = sphi 0, %s76
      %s91 = sphi 0, %s77
      %s95 = sphi 0, %s95
      %s97 = sphi 0, %s95
      %s98 = sphi 0, %s97
      %s112 = sphi 0, %s98
      %s116 = sphi 0, %s116
      %s118 = sphi 0, %s116
      %s119 = sphi 0, %s118
      %s133 = sphi 0, %s119
      %s137 = sphi 0, %s137
      %s139 = sphi 0, %s137
      %s140 = sphi 0, %s139
      %s154 = sphi 0, %s140
      %s158 = sphi 0, %s158
      %s160 = sphi 0, %s158
      %s161 = sphi 0, %s160
      %s175 = sphi 0, %s161
      %s179 = sphi 0, %s179
      %s181 = sphi 0, %s179
      %s182 = sphi 0, %s181
      %s196 = sphi 0, %s182
    $region4: #{tpu_custom_call.1} parent=1 // loop_header_branch
      %22 = sbr.rel (%p20) target = $region8
    $region5: #{tpu_custom_call.1} parent=1 // loop_body
      %s24 = ssub.s32 %s19, 1
      %s25 = ssub.s32 %s19, 2
      %s26 = sadd.s32 %s19, 1
      %s28 = sadd.s32 %s27, 1
      %p31 = scmp.eq.s32.totalorder %s19, 1
      %p32 = scmp.ne.s32.totalorder %s27, %s29
      %p33 = scmp.eq.s32.totalorder %s19, 0
      %p34 = por %p32, %p33
      %p35 = scmp.ne.s32.totalorder %s27, %s29
      %p36 = scmp.eq.s32.totalorder %s24, 1
      %p37 = por %p35, %p36
      %p38 = scmp.ne.s32.totalorder %s29, %s30
      %p39 = scmp.eq.s32.totalorder %s24, 0
      %p40 = por %p38, %p39
      %p41 = scmp.ne.s32.totalorder %s29, %s30
      %p42 = scmp.eq.s32.totalorder %s25, 1
      %p43 = por %p41, %p42
      %p45 = scmp.ne.s32.totalorder %s30, %s44
      %p46 = scmp.eq.s32.totalorder %s25, 0
      %p47 = por %p45, %p46
      %s48 = ssub.s32 %s19, %s26
      %p49 = scmp.eq.s32.totalorder %s48, 0
      %s51 = sadd.s32 %s50, 1
      %s52 = scalar_select %p49, %s50, %s51
      %p55 = pneg %p49
      %p56 = scmp.eq.s32.totalorder %s19, 1
      %p57 = por %p55, %p56
      %p58 = scmp.ne.s32.totalorder %s50, %s53
      %p59 = scmp.eq.s32.totalorder %s19, 0
      %p60 = por %p58, %p59
      %p61 = scmp.ne.s32.totalorder %s50, %s53
      %p62 = scmp.eq.s32.totalorder %s24, 1
      %p63 = por %p61, %p62
      %p64 = scmp.ne.s32.totalorder %s53, %s54
      %p65 = scmp.eq.s32.totalorder %s24, 0
      %p66 = por %p64, %p65
      %p67 = scmp.ne.s32.totalorder %s53, %s54
      %p68 = scmp.eq.s32.totalorder %s25, 1
      %p69 = por %p67, %p68
      %p71 = scmp.ne.s32.totalorder %s54, %s70
      %p72 = scmp.eq.s32.totalorder %s25, 0
      %p73 = por %p71, %p72
      %s75 = sadd.s32 %s74, 1
      %p78 = scmp.eq.s32.totalorder %s19, 1
      %p79 = scmp.ne.s32.totalorder %s74, %s76
      %p80 = scmp.eq.s32.totalorder %s19, 0
      %p81 = por %p79, %p80
      %p82 = scmp.ne.s32.totalorder %s74, %s76
      %p83 = scmp.eq.s32.totalorder %s24, 1
      %p84 = por %p82, %p83
      %p85 = scmp.ne.s32.totalorder %s76, %s77
      %p86 = scmp.eq.s32.totalorder %s24, 0
      %p87 = por %p85, %p86
      %p88 = scmp.ne.s32.totalorder %s76, %s77
      %p89 = scmp.eq.s32.totalorder %s25, 1
      %p90 = por %p88, %p89
      %p92 = scmp.ne.s32.totalorder %s77, %s91
      %p93 = scmp.eq.s32.totalorder %s25, 0
      %p94 = por %p92, %p93
      %s96 = sadd.s32 %s95, 1
      %p99 = scmp.eq.s32.totalorder %s19, 1
      %p100 = scmp.ne.s32.totalorder %s95, %s97
      %p101 = scmp.eq.s32.totalorder %s19, 0
      %p102 = por %p100, %p101
      %p103 = scmp.ne.s32.totalorder %s95, %s97
      %p104 = scmp.eq.s32.totalorder %s24, 1
      %p105 = por %p103, %p104
      %p106 = scmp.ne.s32.totalorder %s97, %s98
      %p107 = scmp.eq.s32.totalorder %s24, 0
      %p108 = por %p106, %p107
      %p109 = scmp.ne.s32.totalorder %s97, %s98
      %p110 = scmp.eq.s32.totalorder %s25, 1
      %p111 = por %p109, %p110
      %p113 = scmp.ne.s32.totalorder %s98, %s112
      %p114 = scmp.eq.s32.totalorder %s25, 0
      %p115 = por %p113, %p114
      %s117 = sadd.s32 %s116, 1
      %p120 = scmp.eq.s32.totalorder %s19, 1
      %p121 = scmp.ne.s32.totalorder %s116, %s118
      %p122 = scmp.eq.s32.totalorder %s19, 0
      %p123 = por %p121, %p122
      %p124 = scmp.ne.s32.totalorder %s116, %s118
      %p125 = scmp.eq.s32.totalorder %s24, 1
      %p126 = por %p124, %p125
      %p127 = scmp.ne.s32.totalorder %s118, %s119
      %p128 = scmp.eq.s32.totalorder %s24, 0
      %p129 = por %p127, %p128
      %p130 = scmp.ne.s32.totalorder %s118, %s119
      %p131 = scmp.eq.s32.totalorder %s25, 1
      %p132 = por %p130, %p131
      %p134 = scmp.ne.s32.totalorder %s119, %s133
      %p135 = scmp.eq.s32.totalorder %s25, 0
      %p136 = por %p134, %p135
      %s138 = sadd.s32 %s137, 1
      %p141 = scmp.eq.s32.totalorder %s19, 1
      %p142 = scmp.ne.s32.totalorder %s137, %s139
      %p143 = scmp.eq.s32.totalorder %s19, 0
      %p144 = por %p142, %p143
      %p145 = scmp.ne.s32.totalorder %s137, %s139
      %p146 = scmp.eq.s32.totalorder %s24, 1
      %p147 = por %p145, %p146
      %p148 = scmp.ne.s32.totalorder %s139, %s140
      %p149 = scmp.eq.s32.totalorder %s24, 0
      %p150 = por %p148, %p149
      %p151 = scmp.ne.s32.totalorder %s139, %s140
      %p152 = scmp.eq.s32.totalorder %s25, 1
      %p153 = por %p151, %p152
      %p155 = scmp.ne.s32.totalorder %s140, %s154
      %p156 = scmp.eq.s32.totalorder %s25, 0
      %p157 = por %p155, %p156
      %s159 = sadd.s32 %s158, 1
      %p162 = scmp.eq.s32.totalorder %s19, 1
      %p163 = scmp.ne.s32.totalorder %s158, %s160
      %p164 = scmp.eq.s32.totalorder %s19, 0
      %p165 = por %p163, %p164
      %p166 = scmp.ne.s32.totalorder %s158, %s160
      %p167 = scmp.eq.s32.totalorder %s24, 1
      %p168 = por %p166, %p167
      %p169 = scmp.ne.s32.totalorder %s160, %s161
      %p170 = scmp.eq.s32.totalorder %s24, 0
      %p171 = por %p169, %p170
      %p172 = scmp.ne.s32.totalorder %s160, %s161
      %p173 = scmp.eq.s32.totalorder %s25, 1
      %p174 = por %p172, %p173
      %p176 = scmp.ne.s32.totalorder %s161, %s175
      %p177 = scmp.eq.s32.totalorder %s25, 0
      %p178 = por %p176, %p177
      %s180 = sadd.s32 %s179, 1
      %p183 = scmp.eq.s32.totalorder %s19, 1
      %p184 = scmp.ne.s32.totalorder %s179, %s181
      %p185 = scmp.eq.s32.totalorder %s19, 0
      %p186 = por %p184, %p185
      %p187 = scmp.ne.s32.totalorder %s179, %s181
      %p188 = scmp.eq.s32.totalorder %s24, 1
      %p189 = por %p187, %p188
      %p190 = scmp.ne.s32.totalorder %s181, %s182
      %p191 = scmp.eq.s32.totalorder %s24, 0
      %p192 = por %p190, %p191
      %p193 = scmp.ne.s32.totalorder %s181, %s182
      %p194 = scmp.eq.s32.totalorder %s25, 1
      %p195 = por %p193, %p194
      %p197 = scmp.ne.s32.totalorder %s182, %s196
      %p198 = scmp.eq.s32.totalorder %s25, 0
      %p199 = por %p197, %p198
      %p200 = scmp.le.s32.totalorder 1, %s19
      %p201 = scmp.lt.s32.totalorder %s19, 3
      %p202 = pnand %p200, %p201
      %p203 = pneg %p202
      // Predicated region
      $region9: #{tpu_custom_call.1} parent=5 // pred_check
        _
      $region10: #{tpu_custom_call.1} parent=5 // pred_check_branch
        %205 = sbr.rel (%p202) target = $region12
      $region11: #{tpu_custom_call.1} parent=5 // pred_region
        %s206 = ssub.s32 %s19, 1
        // Predicated region
        $region13: #{tpu_custom_call.1} parent=11 // pred_check
          %p207 = pneg %p40
        $region14: #{tpu_custom_call.1} parent=11 // pred_check_branch
          %209 = sbr.rel (%p207) target = $region16
        $region15: #{tpu_custom_call.1} parent=11 // pred_region
          %s211 = ssub.s32 4096, 4096
          %212 = vsyncadd [#allocation4], %s211
          %s214 = sshll.u32 [#allocation3], 4
          %s215 = int_to_ptr.vmem [resolvable:$true] %s214
          %217 = dma.hbm_to_vmem [thread:$0]  %s0, 4096, %s215, [#allocation4]
        $region16: #{tpu_custom_call.1} parent=11 // pred_fallthru
          _
        // Predicated region
        $region17: #{tpu_custom_call.1} parent=11 // pred_check
          %p218 = pneg %p87
        $region18: #{tpu_custom_call.1} parent=11 // pred_check_branch
          %220 = sbr.rel (%p218) target = $region20
        $region19: #{tpu_custom_call.1} parent=11 // pred_region
          %s222 = ssub.s32 16, 16
          %223 = vsyncadd [#allocation7], %s222
          %s225 = sshll.u32 [#allocation8], 4
          %s226 = int_to_ptr.vmem [resolvable:$true] %s225
          %228 = dma.hbm_to_vmem [thread:$0]  %s2, 16, %s226, [#allocation7]
        $region20: #{tpu_custom_call.1} parent=11 // pred_fallthru
          _
        // Predicated region
        $region21: #{tpu_custom_call.1} parent=11 // pred_check
          %p229 = pneg %p108
        $region22: #{tpu_custom_call.1} parent=11 // pred_check_branch
          %231 = sbr.rel (%p229) target = $region24
        $region23: #{tpu_custom_call.1} parent=11 // pred_region
          _
        $region24: #{tpu_custom_call.1} parent=11 // pred_fallthru
          _
        // Predicated region
        $region25: #{tpu_custom_call.1} parent=11 // pred_check
          %p232 = pneg %p129
        $region26: #{tpu_custom_call.1} parent=11 // pred_check_branch
          %234 = sbr.rel (%p232) target = $region28
        $region27: #{tpu_custom_call.1} parent=11 // pred_region
          %s236 = ssub.s32 16, 16
          %237 = vsyncadd [#allocation10], %s236
          %s239 = sshll.u32 [#allocation9], 4
          %s240 = int_to_ptr.vmem [resolvable:$true] %s239
          %242 = dma.hbm_to_vmem [thread:$0]  %s4, 16, %s240, [#allocation10]
        $region28: #{tpu_custom_call.1} parent=11 // pred_fallthru
          _
        // Predicated region
        $region29: #{tpu_custom_call.1} parent=11 // pred_check
          %p243 = pneg %p150
        $region30: #{tpu_custom_call.1} parent=11 // pred_check_branch
          %245 = sbr.rel (%p243) target = $region32
        $region31: #{tpu_custom_call.1} parent=11 // pred_region
          _
        $region32: #{tpu_custom_call.1} parent=11 // pred_fallthru
          _
        // Predicated region
        $region33: #{tpu_custom_call.1} parent=11 // pred_check
          %p246 = pneg %p171
        $region34: #{tpu_custom_call.1} parent=11 // pred_check_branch
          %248 = sbr.rel (%p246) target = $region36
        $region35: #{tpu_custom_call.1} parent=11 // pred_region
          %s250 = ssub.s32 16, 16
          %251 = vsyncadd [#allocation10], %s250
          %s253 = sshll.u32 [#allocation11], 4
          %s254 = int_to_ptr.vmem [resolvable:$true] %s253
          %256 = dma.hbm_to_vmem [thread:$0]  %s6, 16, %s254, [#allocation10]
        $region36: #{tpu_custom_call.1} parent=11 // pred_fallthru
          _
      $region12: #{tpu_custom_call.1} parent=5 // pred_fallthru
        _
      %p257 = scmp.lt.s32.totalorder %s19, 2
      // Predicated region
      $region37: #{tpu_custom_call.1} parent=5 // pred_check
        %p258 = pneg %p257
      $region38: #{tpu_custom_call.1} parent=5 // pred_check_branch
        %260 = sbr.rel (%p258) target = $region40
      $region39: #{tpu_custom_call.1} parent=5 // pred_region
        // Predicated region
        $region41: #{tpu_custom_call.1} parent=39 // pred_check
          %p261 = pneg %p60
        $region42: #{tpu_custom_call.1} parent=39 // pred_check_branch
          %263 = sbr.rel (%p261) target = $region44
        $region43: #{tpu_custom_call.1} parent=39 // pred_region
          %s264 = sand.u32 %s19, 1
          %s265 = scalar_lea.sflag [#allocation7], %s264
          %s266 = sand.u32 %s50, 1
          %s267 = smul.addr %s266, 4096
          %s268 = scalar_lea.vmem [#allocation6], %s267
          %s269 = smul.u32 1024, %s19
          %s271 = ssub.s32 65536, 65536
          %272 = vsyncadd %s265, %s271
          %s273 = smul.addr %s269, 64
          %s274 = scalar_lea.hbm %s1, %s273
          %s275 = sshll.u32 %s268, 4
          %s276 = int_to_ptr.vmem [resolvable:$true] %s275
          %281 = dma.hbm_to_vmem [thread:$0]  %s274, 65536, %s276, %s265, 64, 64, 4
        $region44: #{tpu_custom_call.1} parent=39 // pred_fallthru
          _
      $region40: #{tpu_custom_call.1} parent=5 // pred_fallthru
        _
      %p282 = scmp.le.s32.totalorder 1, %s19
      %p283 = scmp.lt.s32.totalorder %s19, 3
      %p284 = pnand %p282, %p283
      %p285 = pneg %p284
      // Predicated region
      $region45: #{tpu_custom_call.1} parent=5 // pred_check
        _
      $region46: #{tpu_custom_call.1} parent=5 // pred_check_branch
        %287 = sbr.rel (%p284) target = $region48
      $region47: #{tpu_custom_call.1} parent=5 // pred_region
        %s288 = ssub.s32 %s19, 1
        // Predicated region
        $region49: #{tpu_custom_call.1} parent=47 // pred_check
          %p289 = pneg %p40
        $region50: #{tpu_custom_call.1} parent=47 // pred_check_branch
          %291 = sbr.rel (%p289) target = $region52
        $region51: #{tpu_custom_call.1} parent=47 // pred_region
          %292 = dma.done [#allocation4], 4096
        $region52: #{tpu_custom_call.1} parent=47 // pred_fallthru
          _
        %s293 = sand.u32 %s24, 1
        %s294 = scalar_lea.sflag [#allocation7], %s293
        %s295 = sand.u32 %s53, 1
        %s296 = smul.addr %s295, 4096
        %s297 = scalar_lea.vmem [#allocation6], %s296
        // Predicated region
        $region53: #{tpu_custom_call.1} parent=47 // pred_check
          %p298 = pneg %p66
        $region54: #{tpu_custom_call.1} parent=47 // pred_check_branch
          %300 = sbr.rel (%p298) target = $region56
        $region55: #{tpu_custom_call.1} parent=47 // pred_region
          %301 = dma.done %s294, 65536
        $region56: #{tpu_custom_call.1} parent=47 // pred_fallthru
          _
        // Predicated region
        $region57: #{tpu_custom_call.1} parent=47 // pred_check
          %p302 = pneg %p87
        $region58: #{tpu_custom_call.1} parent=47 // pred_check_branch
          %304 = sbr.rel (%p302) target = $region60
        $region59: #{tpu_custom_call.1} parent=47 // pred_region
          %305 = dma.done [#allocation7], 16
        $region60: #{tpu_custom_call.1} parent=47 // pred_fallthru
          _
        // Predicated region
        $region61: #{tpu_custom_call.1} parent=47 // pred_check
          %p306 = pneg %p129
        $region62: #{tpu_custom_call.1} parent=47 // pred_check_branch
          %308 = sbr.rel (%p306) target = $region64
        $region63: #{tpu_custom_call.1} parent=47 // pred_region
          %309 = dma.done [#allocation10], 16
        $region64: #{tpu_custom_call.1} parent=47 // pred_fallthru
          _
        // Predicated region
        $region65: #{tpu_custom_call.1} parent=47 // pred_check
          %p310 = pneg %p171
        $region66: #{tpu_custom_call.1} parent=47 // pred_check_branch
          %312 = sbr.rel (%p310) target = $region68
        $region67: #{tpu_custom_call.1} parent=47 // pred_region
          %313 = dma.done [#allocation10], 16
        $region68: #{tpu_custom_call.1} parent=47 // pred_fallthru
          _
        %p314 = pneg %p40
        %p315 = pneg %p37
        %s316 = sand.u32 %s24, 1
        %s317 = scalar_lea.sflag [#allocation7], %s316
        %s318 = sand.u32 %s53, 1
        %s319 = smul.addr %s318, 4096
        %s320 = scalar_lea.vmem [#allocation6], %s319
        %p321 = pneg %p66
        %p322 = pneg %p63
        %p323 = pneg %p87
        %p324 = pneg %p84
        %p325 = pneg %p108
        %p326 = pneg %p105
        %p327 = pneg %p129
        %p328 = pneg %p126
        %p329 = pneg %p150
        %p330 = pneg %p147
        %p331 = pneg %p171
        %p332 = pneg %p168
        %p333 = pneg %p192
        %p334 = pneg %p189
        %s335 = smul.u32 1024, %s24
        %p337 = scmp.eq.s32.totalorder %s24, 0
        // Predicated region
        $region69: #{tpu_custom_call.1} parent=47 // pred_check
          %p338 = pneg %p337
        $region70: #{tpu_custom_call.1} parent=47 // pred_check_branch
          %340 = sbr.rel (%p338) target = $region72
        $region71: #{tpu_custom_call.1} parent=47 // pred_region
          %341 = vst [vmem:[#allocation2] sm:$0x3] 0.0
        $region72: #{tpu_custom_call.1} parent=47 // pred_fallthru
          _
        %s342 = smul.u32 %s24, 8192
        %s343 = sshra.s32 %s342, 7
        %s344 = sand.u32 %s342, 127
        %s345 = smul.addr %s343, 2
        %s346 = scalar_lea.vmem [#allocation3], %s345
        %v347 = vld [vmem:[%s346] sm:$0xff]
        %v348 = vld [vmem:[%s346 + $0x8] sm:$0xff]
        %v349 = vld [vmem:[%s346 + $0x10] sm:$0xff]
        %v350 = vld [vmem:[%s346 + $0x18] sm:$0xff]
        %v351 = vld [vmem:[%s346 + $0x20] sm:$0xff]
        %v352 = vld [vmem:[%s346 + $0x28] sm:$0xff]
        %v353 = vld [vmem:[%s346 + $0x30] sm:$0xff]
        %v354 = vld [vmem:[%s346 + $0x38] sm:$0xff]
        %v355 = vld [vmem:[%s346 + $0x40] sm:$0xff]
        %v356 = vld [vmem:[%s346 + $0x48] sm:$0xff]
        %v357 = vld [vmem:[%s346 + $0x50] sm:$0xff]
        %v358 = vld [vmem:[%s346 + $0x58] sm:$0xff]
        %v359 = vld [vmem:[%s346 + $0x60] sm:$0xff]
        %v360 = vld [vmem:[%s346 + $0x68] sm:$0xff]
        %v361 = vld [vmem:[%s346 + $0x70] sm:$0xff]
        %v362 = vld [vmem:[%s346 + $0x78] sm:$0xff]
        %v379 = vcombine.high %v347, %v347
        %v381 = vunpack.c.l.s4 1983009808
        %v382 = vunpack.c.0.s8 %v381
        %v383 = vlaneseq
        %v384 = vshrl.u32 %v383, 7
        %v385 = vsub.s32 %v382, %v384
        %v386 = vrot.slane %v347, %v385
        %v388 = vunpack.c.l.s4 1983009808
        %v389 = vunpack.c.0.s8 %v388
        %v390 = vlaneseq
        %v391 = vshrl.u32 %v390, 7
        %v392 = vsub.s32 %v389, %v391
        %v393 = vrot.slane %v379, %v392
        %v394 = vcombine.high %v386, %v386
        %v395 = vcombine.high %v393, %v393
        %v396 = vcombine.high %v348, %v348
        %v398 = vunpack.c.l.s4 1983009808
        %v399 = vunpack.c.0.s8 %v398
        %v400 = vlaneseq
        %v401 = vshrl.u32 %v400, 7
        %v402 = vsub.s32 %v399, %v401
        %v403 = vrot.slane %v348, %v402
        %v405 = vunpack.c.l.s4 1983009808
        %v406 = vunpack.c.0.s8 %v405
        %v407 = vlaneseq
        %v408 = vshrl.u32 %v407, 7
        %v409 = vsub.s32 %v406, %v408
        %v410 = vrot.slane %v396, %v409
        %v411 = vcombine.high %v403, %v403
        %v412 = vcombine.high %v410, %v410
        %v413 = vcombine.high %v349, %v349
        %v415 = vunpack.c.l.s4 1983009808
        %v416 = vunpack.c.0.s8 %v415
        %v417 = vlaneseq
        %v418 = vshrl.u32 %v417, 7
        %v419 = vsub.s32 %v416, %v418
        %v420 = vrot.slane %v349, %v419
        %v422 = vunpack.c.l.s4 1983009808
        %v423 = vunpack.c.0.s8 %v422
        %v424 = vlaneseq
        %v425 = vshrl.u32 %v424, 7
        %v426 = vsub.s32 %v423, %v425
        %v427 = vrot.slane %v413, %v426
        %v428 = vcombine.high %v420, %v420
        %v429 = vcombine.high %v427, %v427
        %v430 = vcombine.high %v350, %v350
        %v432 = vunpack.c.l.s4 1983009808
        %v433 = vunpack.c.0.s8 %v432
        %v434 = vlaneseq
        %v435 = vshrl.u32 %v434, 7
        %v436 = vsub.s32 %v433, %v435
        %v437 = vrot.slane %v350, %v436
        %v439 = vunpack.c.l.s4 1983009808
        %v440 = vunpack.c.0.s8 %v439
        %v441 = vlaneseq
        %v442 = vshrl.u32 %v441, 7
        %v443 = vsub.s32 %v440, %v442
        %v444 = vrot.slane %v430, %v443
        %v445 = vcombine.high %v437, %v437
        %v446 = vcombine.high %v444, %v444
        %v447 = vcombine.high %v351, %v351
        %v449 = vunpack.c.l.s4 1983009808
        %v450 = vunpack.c.0.s8 %v449
        %v451 = vlaneseq
        %v452 = vshrl.u32 %v451, 7
        %v453 = vsub.s32 %v450, %v452
        %v454 = vrot.slane %v351, %v453
        %v456 = vunpack.c.l.s4 1983009808
        %v457 = vunpack.c.0.s8 %v456
        %v458 = vlaneseq
        %v459 = vshrl.u32 %v458, 7
        %v460 = vsub.s32 %v457, %v459
        %v461 = vrot.slane %v447, %v460
        %v462 = vcombine.high %v454, %v454
        %v463 = vcombine.high %v461, %v461
        %v464 = vcombine.high %v352, %v352
        %v466 = vunpack.c.l.s4 1983009808
        %v467 = vunpack.c.0.s8 %v466
        %v468 = vlaneseq
        %v469 = vshrl.u32 %v468, 7
        %v470 = vsub.s32 %v467, %v469
        %v471 = vrot.slane %v352, %v470
        %v473 = vunpack.c.l.s4 1983009808
        %v474 = vunpack.c.0.s8 %v473
        %v475 = vlaneseq
        %v476 = vshrl.u32 %v475, 7
        %v477 = vsub.s32 %v474, %v476
        %v478 = vrot.slane %v464, %v477
        %v479 = vcombine.high %v471, %v471
        %v480 = vcombine.high %v478, %v478
        %v481 = vcombine.high %v353, %v353
        %v483 = vunpack.c.l.s4 1983009808
        %v484 = vunpack.c.0.s8 %v483
        %v485 = vlaneseq
        %v486 = vshrl.u32 %v485, 7
        %v487 = vsub.s32 %v484, %v486
        %v488 = vrot.slane %v353, %v487
        %v490 = vunpack.c.l.s4 1983009808
        %v491 = vunpack.c.0.s8 %v490
        %v492 = vlaneseq
        %v493 = vshrl.u32 %v492, 7
        %v494 = vsub.s32 %v491, %v493
        %v495 = vrot.slane %v481, %v494
        %v496 = vcombine.high %v488, %v488
        %v497 = vcombine.high %v495, %v495
        %v498 = vcombine.high %v354, %v354
        %v500 = vunpack.c.l.s4 1983009808
        %v501 = vunpack.c.0.s8 %v500
        %v502 = vlaneseq
        %v503 = vshrl.u32 %v502, 7
        %v504 = vsub.s32 %v501, %v503
        %v505 = vrot.slane %v354, %v504
        %v507 = vunpack.c.l.s4 1983009808
        %v508 = vunpack.c.0.s8 %v507
        %v509 = vlaneseq
        %v510 = vshrl.u32 %v509, 7
        %v511 = vsub.s32 %v508, %v510
        %v512 = vrot.slane %v498, %v511
        %v513 = vcombine.high %v505, %v505
        %v514 = vcombine.high %v512, %v512
        %v515 = vcombine.high %v355, %v355
        %v517 = vunpack.c.l.s4 1983009808
        %v518 = vunpack.c.0.s8 %v517
        %v519 = vlaneseq
        %v520 = vshrl.u32 %v519, 7
        %v521 = vsub.s32 %v518, %v520
        %v522 = vrot.slane %v355, %v521
        %v524 = vunpack.c.l.s4 1983009808
        %v525 = vunpack.c.0.s8 %v524
        %v526 = vlaneseq
        %v527 = vshrl.u32 %v526, 7
        %v528 = vsub.s32 %v525, %v527
        %v529 = vrot.slane %v515, %v528
        %v530 = vcombine.high %v522, %v522
        %v531 = vcombine.high %v529, %v529
        %v532 = vcombine.high %v356, %v356
        %v534 = vunpack.c.l.s4 1983009808
        %v535 = vunpack.c.0.s8 %v534
        %v536 = vlaneseq
        %v537 = vshrl.u32 %v536, 7
        %v538 = vsub.s32 %v535, %v537
        %v539 = vrot.slane %v356, %v538
        %v541 = vunpack.c.l.s4 1983009808
        %v542 = vunpack.c.0.s8 %v541
        %v543 = vlaneseq
        %v544 = vshrl.u32 %v543, 7
        %v545 = vsub.s32 %v542, %v544
        %v546 = vrot.slane %v532, %v545
        %v547 = vcombine.high %v539, %v539
        %v548 = vcombine.high %v546, %v546
        %v549 = vcombine.high %v357, %v357
        %v551 = vunpack.c.l.s4 1983009808
        %v552 = vunpack.c.0.s8 %v551
        %v553 = vlaneseq
        %v554 = vshrl.u32 %v553, 7
        %v555 = vsub.s32 %v552, %v554
        %v556 = vrot.slane %v357, %v555
        %v558 = vunpack.c.l.s4 1983009808
        %v559 = vunpack.c.0.s8 %v558
        %v560 = vlaneseq
        %v561 = vshrl.u32 %v560, 7
        %v562 = vsub.s32 %v559, %v561
        %v563 = vrot.slane %v549, %v562
        %v564 = vcombine.high %v556, %v556
        %v565 = vcombine.high %v563, %v563
        %v566 = vcombine.high %v358, %v358
        %v568 = vunpack.c.l.s4 1983009808
        %v569 = vunpack.c.0.s8 %v568
        %v570 = vlaneseq
        %v571 = vshrl.u32 %v570, 7
        %v572 = vsub.s32 %v569, %v571
        %v573 = vrot.slane %v358, %v572
        %v575 = vunpack.c.l.s4 1983009808
        %v576 = vunpack.c.0.s8 %v575
        %v577 = vlaneseq
        %v578 = vshrl.u32 %v577, 7
        %v579 = vsub.s32 %v576, %v578
        %v580 = vrot.slane %v566, %v579
        %v581 = vcombine.high %v573, %v573
        %v582 = vcombine.high %v580, %v580
        %v583 = vcombine.high %v359, %v359
        %v585 = vunpack.c.l.s4 1983009808
        %v586 = vunpack.c.0.s8 %v585
        %v587 = vlaneseq
        %v588 = vshrl.u32 %v587, 7
        %v589 = vsub.s32 %v586, %v588
        %v590 = vrot.slane %v359, %v589
        %v592 = vunpack.c.l.s4 1983009808
        %v593 = vunpack.c.0.s8 %v592
        %v594 = vlaneseq
        %v595 = vshrl.u32 %v594, 7
        %v596 = vsub.s32 %v593, %v595
        %v597 = vrot.slane %v583, %v596
        %v598 = vcombine.high %v590, %v590
        %v599 = vcombine.high %v597, %v597
        %v600 = vcombine.high %v360, %v360
        %v602 = vunpack.c.l.s4 1983009808
        %v603 = vunpack.c.0.s8 %v602
        %v604 = vlaneseq
        %v605 = vshrl.u32 %v604, 7
        %v606 = vsub.s32 %v603, %v605
        %v607 = vrot.slane %v360, %v606
        %v609 = vunpack.c.l.s4 1983009808
        %v610 = vunpack.c.0.s8 %v609
        %v611 = vlaneseq
        %v612 = vshrl.u32 %v611, 7
        %v613 = vsub.s32 %v610, %v612
        %v614 = vrot.slane %v600, %v613
        %v615 = vcombine.high %v607, %v607
        %v616 = vcombine.high %v614, %v614
        %v617 = vcombine.high %v361, %v361
        %v619 = vunpack.c.l.s4 1983009808
        %v620 = vunpack.c.0.s8 %v619
        %v621 = vlaneseq
        %v622 = vshrl.u32 %v621, 7
        %v623 = vsub.s32 %v620, %v622
        %v624 = vrot.slane %v361, %v623
        %v626 = vunpack.c.l.s4 1983009808
        %v627 = vunpack.c.0.s8 %v626
        %v628 = vlaneseq
        %v629 = vshrl.u32 %v628, 7
        %v630 = vsub.s32 %v627, %v629
        %v631 = vrot.slane %v617, %v630
        %v632 = vcombine.high %v624, %v624
        %v633 = vcombine.high %v631, %v631
        %v634 = vcombine.high %v362, %v362
        %v636 = vunpack.c.l.s4 1983009808
        %v637 = vunpack.c.0.s8 %v636
        %v638 = vlaneseq
        %v639 = vshrl.u32 %v638, 7
        %v640 = vsub.s32 %v637, %v639
        %v641 = vrot.slane %v362, %v640
        %v643 = vunpack.c.l.s4 1983009808
        %v644 = vunpack.c.0.s8 %v643
        %v645 = vlaneseq
        %v646 = vshrl.u32 %v645, 7
        %v647 = vsub.s32 %v644, %v646
        %v648 = vrot.slane %v634, %v647
        %v649 = vcombine.high %v641, %v641
        %v650 = vcombine.high %v648, %v648
        %v715 = vpack.c.bf16 %v386, %v386
        %v716 = vpack.c.bf16 %v394, %v394
        %v717 = vpack.c.bf16 %v393, %v393
        %v718 = vpack.c.bf16 %v395, %v395
        %v719 = vpack.c.bf16 %v403, %v403
        %v720 = vpack.c.bf16 %v411, %v411
        %v721 = vpack.c.bf16 %v410, %v410
        %v722 = vpack.c.bf16 %v412, %v412
        %v723 = vpack.c.bf16 %v420, %v420
        %v724 = vpack.c.bf16 %v428, %v428
        %v725 = vpack.c.bf16 %v427, %v427
        %v726 = vpack.c.bf16 %v429, %v429
        %v727 = vpack.c.bf16 %v437, %v437
        %v728 = vpack.c.bf16 %v445, %v445
        %v729 = vpack.c.bf16 %v444, %v444
        %v730 = vpack.c.bf16 %v446, %v446
        %v731 = vpack.c.bf16 %v454, %v454
        %v732 = vpack.c.bf16 %v462, %v462
        %v733 = vpack.c.bf16 %v461, %v461
        %v734 = vpack.c.bf16 %v463, %v463
        %v735 = vpack.c.bf16 %v471, %v471
        %v736 = vpack.c.bf16 %v479, %v479
        %v737 = vpack.c.bf16 %v478, %v478
        %v738 = vpack.c.bf16 %v480, %v480
        %v739 = vpack.c.bf16 %v488, %v488
        %v740 = vpack.c.bf16 %v496, %v496
        %v741 = vpack.c.bf16 %v495, %v495
        %v742 = vpack.c.bf16 %v497, %v497
        %v743 = vpack.c.bf16 %v505, %v505
        %v744 = vpack.c.bf16 %v513, %v513
        %v745 = vpack.c.bf16 %v512, %v512
        %v746 = vpack.c.bf16 %v514, %v514
        %v747 = vpack.c.bf16 %v522, %v522
        %v748 = vpack.c.bf16 %v530, %v530
        %v749 = vpack.c.bf16 %v529, %v529
        %v750 = vpack.c.bf16 %v531, %v531
        %v751 = vpack.c.bf16 %v539, %v539
        %v752 = vpack.c.bf16 %v547, %v547
        %v753 = vpack.c.bf16 %v546, %v546
        %v754 = vpack.c.bf16 %v548, %v548
        %v755 = vpack.c.bf16 %v556, %v556
        %v756 = vpack.c.bf16 %v564, %v564
        %v757 = vpack.c.bf16 %v563, %v563
        %v758 = vpack.c.bf16 %v565, %v565
        %v759 = vpack.c.bf16 %v573, %v573
        %v760 = vpack.c.bf16 %v581, %v581
        %v761 = vpack.c.bf16 %v580, %v580
        %v762 = vpack.c.bf16 %v582, %v582
        %v763 = vpack.c.bf16 %v590, %v590
        %v764 = vpack.c.bf16 %v598, %v598
        %v765 = vpack.c.bf16 %v597, %v597
        %v766 = vpack.c.bf16 %v599, %v599
        %v767 = vpack.c.bf16 %v607, %v607
        %v768 = vpack.c.bf16 %v615, %v615
        %v769 = vpack.c.bf16 %v614, %v614
        %v770 = vpack.c.bf16 %v616, %v616
        %v771 = vpack.c.bf16 %v624, %v624
        %v772 = vpack.c.bf16 %v632, %v632
        %v773 = vpack.c.bf16 %v631, %v631
        %v774 = vpack.c.bf16 %v633, %v633
        %v775 = vpack.c.bf16 %v641, %v641
        %v776 = vpack.c.bf16 %v649, %v649
        %v777 = vpack.c.bf16 %v648, %v648
        %v778 = vpack.c.bf16 %v650, %v650
        %v779 = vld [vmem:[#allocation2] sm:$0x3]
        %v780 = vld [vmem:[%s297] sm:$0xf]
        %v781 = vld [vmem:[%s297 + $0x4] sm:$0xf]
        %v782 = vld [vmem:[%s297 + $0x8] sm:$0xf]
        %v783 = vld [vmem:[%s297 + $0xc] sm:$0xf]
        %v784 = vld [vmem:[%s297 + $0x10] sm:$0xf]
        %v785 = vld [vmem:[%s297 + $0x14] sm:$0xf]
        %v786 = vld [vmem:[%s297 + $0x18] sm:$0xf]
        %v787 = vld [vmem:[%s297 + $0x1c] sm:$0xf]
        %v788 = vld [vmem:[%s297 + $0x20] sm:$0xf]
        %v789 = vld [vmem:[%s297 + $0x24] sm:$0xf]
        %v790 = vld [vmem:[%s297 + $0x28] sm:$0xf]
        %v791 = vld [vmem:[%s297 + $0x2c] sm:$0xf]
        %v792 = vld [vmem:[%s297 + $0x30] sm:$0xf]
        %v793 = vld [vmem:[%s297 + $0x34] sm:$0xf]
        %v794 = vld [vmem:[%s297 + $0x38] sm:$0xf]
        %v795 = vld [vmem:[%s297 + $0x3c] sm:$0xf]
        %v796 = vld [vmem:[%s297 + $0x40] sm:$0xf]
        %v797 = vld [vmem:[%s297 + $0x44] sm:$0xf]
        %v798 = vld [vmem:[%s297 + $0x48] sm:$0xf]
        %v799 = vld [vmem:[%s297 + $0x4c] sm:$0xf]
        %v800 = vld [vmem:[%s297 + $0x50] sm:$0xf]
        %v801 = vld [vmem:[%s297 + $0x54] sm:$0xf]
        %v802 = vld [vmem:[%s297 + $0x58] sm:$0xf]
        %v803 = vld [vmem:[%s297 + $0x5c] sm:$0xf]
        %v804 = vld [vmem:[%s297 + $0x60] sm:$0xf]
        %v805 = vld [vmem:[%s297 + $0x64] sm:$0xf]
        %v806 = vld [vmem:[%s297 + $0x68] sm:$0xf]
        %v807 = vld [vmem:[%s297 + $0x6c] sm:$0xf]
        %v808 = vld [vmem:[%s297 + $0x70] sm:$0xf]
        %v809 = vld [vmem:[%s297 + $0x74] sm:$0xf]
        %v810 = vld [vmem:[%s297 + $0x78] sm:$0xf]
        %v811 = vld [vmem:[%s297 + $0x7c] sm:$0xf]
        %v812 = vld [vmem:[%s297 + $0x80] sm:$0xf]
        %v813 = vld [vmem:[%s297 + $0x84] sm:$0xf]
        %v814 = vld [vmem:[%s297 + $0x88] sm:$0xf]
        %v815 = vld [vmem:[%s297 + $0x8c] sm:$0xf]
        %v816 = vld [vmem:[%s297 + $0x90] sm:$0xf]
        %v817 = vld [vmem:[%s297 + $0x94] sm:$0xf]
        %v818 = vld [vmem:[%s297 + $0x98] sm:$0xf]
        %v819 = vld [vmem:[%s297 + $0x9c] sm:$0xf]
        %v820 = vld [vmem:[%s297 + $0xa0] sm:$0xf]
        %v821 = vld [vmem:[%s297 + $0xa4] sm:$0xf]
        %v822 = vld [vmem:[%s297 + $0xa8] sm:$0xf]
        %v823 = vld [vmem:[%s297 + $0xac] sm:$0xf]
        %v824 = vld [vmem:[%s297 + $0xb0] sm:$0xf]
        %v825 = vld [vmem:[%s297 + $0xb4] sm:$0xf]
        %v826 = vld [vmem:[%s297 + $0xb8] sm:$0xf]
        %v827 = vld [vmem:[%s297 + $0xbc] sm:$0xf]
        %v828 = vld [vmem:[%s297 + $0xc0] sm:$0xf]
        %v829 = vld [vmem:[%s297 + $0xc4] sm:$0xf]
        %v830 = vld [vmem:[%s297 + $0xc8] sm:$0xf]
        %v831 = vld [vmem:[%s297 + $0xcc] sm:$0xf]
        %v832 = vld [vmem:[%s297 + $0xd0] sm:$0xf]
        %v833 = vld [vmem:[%s297 + $0xd4] sm:$0xf]
        %v834 = vld [vmem:[%s297 + $0xd8] sm:$0xf]
        %v835 = vld [vmem:[%s297 + $0xdc] sm:$0xf]
        %v836 = vld [vmem:[%s297 + $0xe0] sm:$0xf]
        %v837 = vld [vmem:[%s297 + $0xe4] sm:$0xf]
        %v838 = vld [vmem:[%s297 + $0xe8] sm:$0xf]
        %v839 = vld [vmem:[%s297 + $0xec] sm:$0xf]
        %v840 = vld [vmem:[%s297 + $0xf0] sm:$0xf]
        %v841 = vld [vmem:[%s297 + $0xf4] sm:$0xf]
        %v842 = vld [vmem:[%s297 + $0xf8] sm:$0xf]
        %v843 = vld [vmem:[%s297 + $0xfc] sm:$0xf]
        %v844 = vld [vmem:[%s297 + $0x100] sm:$0xf]
        %v845 = vld [vmem:[%s297 + $0x104] sm:$0xf]
        %v846 = vld [vmem:[%s297 + $0x108] sm:$0xf]
        %v847 = vld [vmem:[%s297 + $0x10c] sm:$0xf]
        %v848 = vld [vmem:[%s297 + $0x110] sm:$0xf]
        %v849 = vld [vmem:[%s297 + $0x114] sm:$0xf]
        %v850 = vld [vmem:[%s297 + $0x118] sm:$0xf]
        %v851 = vld [vmem:[%s297 + $0x11c] sm:$0xf]
        %v852 = vld [vmem:[%s297 + $0x120] sm:$0xf]
        %v853 = vld [vmem:[%s297 + $0x124] sm:$0xf]
        %v854 = vld [vmem:[%s297 + $0x128] sm:$0xf]
        %v855 = vld [vmem:[%s297 + $0x12c] sm:$0xf]
        %v856 = vld [vmem:[%s297 + $0x130] sm:$0xf]
        %v857 = vld [vmem:[%s297 + $0x134] sm:$0xf]
        %v858 = vld [vmem:[%s297 + $0x138] sm:$0xf]
        %v859 = vld [vmem:[%s297 + $0x13c] sm:$0xf]
        %v860 = vld [vmem:[%s297 + $0x140] sm:$0xf]
        %v861 = vld [vmem:[%s297 + $0x144] sm:$0xf]
        %v862 = vld [vmem:[%s297 + $0x148] sm:$0xf]
        %v863 = vld [vmem:[%s297 + $0x14c] sm:$0xf]
        %v864 = vld [vmem:[%s297 + $0x150] sm:$0xf]
        %v865 = vld [vmem:[%s297 + $0x154] sm:$0xf]
        %v866 = vld [vmem:[%s297 + $0x158] sm:$0xf]
        %v867 = vld [vmem:[%s297 + $0x15c] sm:$0xf]
        %v868 = vld [vmem:[%s297 + $0x160] sm:$0xf]
        %v869 = vld [vmem:[%s297 + $0x164] sm:$0xf]
        %v870 = vld [vmem:[%s297 + $0x168] sm:$0xf]
        %v871 = vld [vmem:[%s297 + $0x16c] sm:$0xf]
        %v872 = vld [vmem:[%s297 + $0x170] sm:$0xf]
        %v873 = vld [vmem:[%s297 + $0x174] sm:$0xf]
        %v874 = vld [vmem:[%s297 + $0x178] sm:$0xf]
        %v875 = vld [vmem:[%s297 + $0x17c] sm:$0xf]
        %v876 = vld [vmem:[%s297 + $0x180] sm:$0xf]
        %v877 = vld [vmem:[%s297 + $0x184] sm:$0xf]
        %v878 = vld [vmem:[%s297 + $0x188] sm:$0xf]
        %v879 = vld [vmem:[%s297 + $0x18c] sm:$0xf]
        %v880 = vld [vmem:[%s297 + $0x190] sm:$0xf]
        %v881 = vld [vmem:[%s297 + $0x194] sm:$0xf]
        %v882 = vld [vmem:[%s297 + $0x198] sm:$0xf]
        %v883 = vld [vmem:[%s297 + $0x19c] sm:$0xf]
        %v884 = vld [vmem:[%s297 + $0x1a0] sm:$0xf]
        %v885 = vld [vmem:[%s297 + $0x1a4] sm:$0xf]
        %v886 = vld [vmem:[%s297 + $0x1a8] sm:$0xf]
        %v887 = vld [vmem:[%s297 + $0x1ac] sm:$0xf]
        %v888 = vld [vmem:[%s297 + $0x1b0] sm:$0xf]
        %v889 = vld [vmem:[%s297 + $0x1b4] sm:$0xf]
        %v890 = vld [vmem:[%s297 + $0x1b8] sm:$0xf]
        %v891 = vld [vmem:[%s297 + $0x1bc] sm:$0xf]
        %v892 = vld [vmem:[%s297 + $0x1c0] sm:$0xf]
        %v893 = vld [vmem:[%s297 + $0x1c4] sm:$0xf]
        %v894 = vld [vmem:[%s297 + $0x1c8] sm:$0xf]
        %v895 = vld [vmem:[%s297 + $0x1cc] sm:$0xf]
        %v896 = vld [vmem:[%s297 + $0x1d0] sm:$0xf]
        %v897 = vld [vmem:[%s297 + $0x1d4] sm:$0xf]
        %v898 = vld [vmem:[%s297 + $0x1d8] sm:$0xf]
        %v899 = vld [vmem:[%s297 + $0x1dc] sm:$0xf]
        %v900 = vld [vmem:[%s297 + $0x1e0] sm:$0xf]
        %v901 = vld [vmem:[%s297 + $0x1e4] sm:$0xf]
        %v902 = vld [vmem:[%s297 + $0x1e8] sm:$0xf]
        %v903 = vld [vmem:[%s297 + $0x1ec] sm:$0xf]
        %v904 = vld [vmem:[%s297 + $0x1f0] sm:$0xf]
        %v905 = vld [vmem:[%s297 + $0x1f4] sm:$0xf]
        %v906 = vld [vmem:[%s297 + $0x1f8] sm:$0xf]
        %v907 = vld [vmem:[%s297 + $0x1fc] sm:$0xf]
        %v908 = vld [vmem:[%s297 + $0x200] sm:$0xf]
        %v909 = vld [vmem:[%s297 + $0x204] sm:$0xf]
        %v910 = vld [vmem:[%s297 + $0x208] sm:$0xf]
        %v911 = vld [vmem:[%s297 + $0x20c] sm:$0xf]
        %v912 = vld [vmem:[%s297 + $0x210] sm:$0xf]
        %v913 = vld [vmem:[%s297 + $0x214] sm:$0xf]
        %v914 = vld [vmem:[%s297 + $0x218] sm:$0xf]
        %v915 = vld [vmem:[%s297 + $0x21c] sm:$0xf]
        %v916 = vld [vmem:[%s297 + $0x220] sm:$0xf]
        %v917 = vld [vmem:[%s297 + $0x224] sm:$0xf]
        %v918 = vld [vmem:[%s297 + $0x228] sm:$0xf]
        %v919 = vld [vmem:[%s297 + $0x22c] sm:$0xf]
        %v920 = vld [vmem:[%s297 + $0x230] sm:$0xf]
        %v921 = vld [vmem:[%s297 + $0x234] sm:$0xf]
        %v922 = vld [vmem:[%s297 + $0x238] sm:$0xf]
        %v923 = vld [vmem:[%s297 + $0x23c] sm:$0xf]
        %v924 = vld [vmem:[%s297 + $0x240] sm:$0xf]
        %v925 = vld [vmem:[%s297 + $0x244] sm:$0xf]
        %v926 = vld [vmem:[%s297 + $0x248] sm:$0xf]
        %v927 = vld [vmem:[%s297 + $0x24c] sm:$0xf]
        %v928 = vld [vmem:[%s297 + $0x250] sm:$0xf]
        %v929 = vld [vmem:[%s297 + $0x254] sm:$0xf]
        %v930 = vld [vmem:[%s297 + $0x258] sm:$0xf]
        %v931 = vld [vmem:[%s297 + $0x25c] sm:$0xf]
        %v932 = vld [vmem:[%s297 + $0x260] sm:$0xf]
        %v933 = vld [vmem:[%s297 + $0x264] sm:$0xf]
        %v934 = vld [vmem:[%s297 + $0x268] sm:$0xf]
        %v935 = vld [vmem:[%s297 + $0x26c] sm:$0xf]
        %v936 = vld [vmem:[%s297 + $0x270] sm:$0xf]
        %v937 = vld [vmem:[%s297 + $0x274] sm:$0xf]
        %v938 = vld [vmem:[%s297 + $0x278] sm:$0xf]
        %v939 = vld [vmem:[%s297 + $0x27c] sm:$0xf]
        %v940 = vld [vmem:[%s297 + $0x280] sm:$0xf]
        %v941 = vld [vmem:[%s297 + $0x284] sm:$0xf]
        %v942 = vld [vmem:[%s297 + $0x288] sm:$0xf]
        %v943 = vld [vmem:[%s297 + $0x28c] sm:$0xf]
        %v944 = vld [vmem:[%s297 + $0x290] sm:$0xf]
        %v945 = vld [vmem:[%s297 + $0x294] sm:$0xf]
        %v946 = vld [vmem:[%s297 + $0x298] sm:$0xf]
        %v947 = vld [vmem:[%s297 + $0x29c] sm:$0xf]
        %v948 = vld [vmem:[%s297 + $0x2a0] sm:$0xf]
        %v949 = vld [vmem:[%s297 + $0x2a4] sm:$0xf]
        %v950 = vld [vmem:[%s297 + $0x2a8] sm:$0xf]
        %v951 = vld [vmem:[%s297 + $0x2ac] sm:$0xf]
        %v952 = vld [vmem:[%s297 + $0x2b0] sm:$0xf]
        %v953 = vld [vmem:[%s297 + $0x2b4] sm:$0xf]
        %v954 = vld [vmem:[%s297 + $0x2b8] sm:$0xf]
        %v955 = vld [vmem:[%s297 + $0x2bc] sm:$0xf]
        %v956 = vld [vmem:[%s297 + $0x2c0] sm:$0xf]
        %v957 = vld [vmem:[%s297 + $0x2c4] sm:$0xf]
        %v958 = vld [vmem:[%s297 + $0x2c8] sm:$0xf]
        %v959 = vld [vmem:[%s297 + $0x2cc] sm:$0xf]
        %v960 = vld [vmem:[%s297 + $0x2d0] sm:$0xf]
        %v961 = vld [vmem:[%s297 + $0x2d4] sm:$0xf]
        %v962 = vld [vmem:[%s297 + $0x2d8] sm:$0xf]
        %v963 = vld [vmem:[%s297 + $0x2dc] sm:$0xf]
        %v964 = vld [vmem:[%s297 + $0x2e0] sm:$0xf]
        %v965 = vld [vmem:[%s297 + $0x2e4] sm:$0xf]
        %v966 = vld [vmem:[%s297 + $0x2e8] sm:$0xf]
        %v967 = vld [vmem:[%s297 + $0x2ec] sm:$0xf]
        %v968 = vld [vmem:[%s297 + $0x2f0] sm:$0xf]
        %v969 = vld [vmem:[%s297 + $0x2f4] sm:$0xf]
        %v970 = vld [vmem:[%s297 + $0x2f8] sm:$0xf]
        %v971 = vld [vmem:[%s297 + $0x2fc] sm:$0xf]
        %v972 = vld [vmem:[%s297 + $0x300] sm:$0xf]
        %v973 = vld [vmem:[%s297 + $0x304] sm:$0xf]
        %v974 = vld [vmem:[%s297 + $0x308] sm:$0xf]
        %v975 = vld [vmem:[%s297 + $0x30c] sm:$0xf]
        %v976 = vld [vmem:[%s297 + $0x310] sm:$0xf]
        %v977 = vld [vmem:[%s297 + $0x314] sm:$0xf]
        %v978 = vld [vmem:[%s297 + $0x318] sm:$0xf]
        %v979 = vld [vmem:[%s297 + $0x31c] sm:$0xf]
        %v980 = vld [vmem:[%s297 + $0x320] sm:$0xf]
        %v981 = vld [vmem:[%s297 + $0x324] sm:$0xf]
        %v982 = vld [vmem:[%s297 + $0x328] sm:$0xf]
        %v983 = vld [vmem:[%s297 + $0x32c] sm:$0xf]
        %v984 = vld [vmem:[%s297 + $0x330] sm:$0xf]
        %v985 = vld [vmem:[%s297 + $0x334] sm:$0xf]
        %v986 = vld [vmem:[%s297 + $0x338] sm:$0xf]
        %v987 = vld [vmem:[%s297 + $0x33c] sm:$0xf]
        %v988 = vld [vmem:[%s297 + $0x340] sm:$0xf]
        %v989 = vld [vmem:[%s297 + $0x344] sm:$0xf]
        %v990 = vld [vmem:[%s297 + $0x348] sm:$0xf]
        %v991 = vld [vmem:[%s297 + $0x34c] sm:$0xf]
        %v992 = vld [vmem:[%s297 + $0x350] sm:$0xf]
        %v993 = vld [vmem:[%s297 + $0x354] sm:$0xf]
        %v994 = vld [vmem:[%s297 + $0x358] sm:$0xf]
        %v995 = vld [vmem:[%s297 + $0x35c] sm:$0xf]
        %v996 = vld [vmem:[%s297 + $0x360] sm:$0xf]
        %v997 = vld [vmem:[%s297 + $0x364] sm:$0xf]
        %v998 = vld [vmem:[%s297 + $0x368] sm:$0xf]
        %v999 = vld [vmem:[%s297 + $0x36c] sm:$0xf]
        %v1000 = vld [vmem:[%s297 + $0x370] sm:$0xf]
        %v1001 = vld [vmem:[%s297 + $0x374] sm:$0xf]
        %v1002 = vld [vmem:[%s297 + $0x378] sm:$0xf]
        %v1003 = vld [vmem:[%s297 + $0x37c] sm:$0xf]
        %v1004 = vld [vmem:[%s297 + $0x380] sm:$0xf]
        %v1005 = vld [vmem:[%s297 + $0x384] sm:$0xf]
        %v1006 = vld [vmem:[%s297 + $0x388] sm:$0xf]
        %v1007 = vld [vmem:[%s297 + $0x38c] sm:$0xf]
        %v1008 = vld [vmem:[%s297 + $0x390] sm:$0xf]
        %v1009 = vld [vmem:[%s297 + $0x394] sm:$0xf]
        %v1010 = vld [vmem:[%s297 + $0x398] sm:$0xf]
        %v1011 = vld [vmem:[%s297 + $0x39c] sm:$0xf]
        %v1012 = vld [vmem:[%s297 + $0x3a0] sm:$0xf]
        %v1013 = vld [vmem:[%s297 + $0x3a4] sm:$0xf]
        %v1014 = vld [vmem:[%s297 + $0x3a8] sm:$0xf]
        %v1015 = vld [vmem:[%s297 + $0x3ac] sm:$0xf]
        %v1016 = vld [vmem:[%s297 + $0x3b0] sm:$0xf]
        %v1017 = vld [vmem:[%s297 + $0x3b4] sm:$0xf]
        %v1018 = vld [vmem:[%s297 + $0x3b8] sm:$0xf]
        %v1019 = vld [vmem:[%s297 + $0x3bc] sm:$0xf]
        %v1020 = vld [vmem:[%s297 + $0x3c0] sm:$0xf]
        %v1021 = vld [vmem:[%s297 + $0x3c4] sm:$0xf]
        %v1022 = vld [vmem:[%s297 + $0x3c8] sm:$0xf]
        %v1023 = vld [vmem:[%s297 + $0x3cc] sm:$0xf]
        %v1024 = vld [vmem:[%s297 + $0x3d0] sm:$0xf]
        %v1025 = vld [vmem:[%s297 + $0x3d4] sm:$0xf]
        %v1026 = vld [vmem:[%s297 + $0x3d8] sm:$0xf]
        %v1027 = vld [vmem:[%s297 + $0x3dc] sm:$0xf]
        %v1028 = vld [vmem:[%s297 + $0x3e0] sm:$0xf]
        %v1029 = vld [vmem:[%s297 + $0x3e4] sm:$0xf]
        %v1030 = vld [vmem:[%s297 + $0x3e8] sm:$0xf]
        %v1031 = vld [vmem:[%s297 + $0x3ec] sm:$0xf]
        %v1032 = vld [vmem:[%s297 + $0x3f0] sm:$0xf]
        %v1033 = vld [vmem:[%s297 + $0x3f4] sm:$0xf]
        %v1034 = vld [vmem:[%s297 + $0x3f8] sm:$0xf]
        %v1035 = vld [vmem:[%s297 + $0x3fc] sm:$0xf]
        %v1036 = vld [vmem:[%s297 + $0x400] sm:$0xf]
        %v1037 = vld [vmem:[%s297 + $0x404] sm:$0xf]
        %v1038 = vld [vmem:[%s297 + $0x408] sm:$0xf]
        %v1039 = vld [vmem:[%s297 + $0x40c] sm:$0xf]
        %v1040 = vld [vmem:[%s297 + $0x410] sm:$0xf]
        %v1041 = vld [vmem:[%s297 + $0x414] sm:$0xf]
        %v1042 = vld [vmem:[%s297 + $0x418] sm:$0xf]
        %v1043 = vld [vmem:[%s297 + $0x41c] sm:$0xf]
        %v1044 = vld [vmem:[%s297 + $0x420] sm:$0xf]
        %v1045 = vld [vmem:[%s297 + $0x424] sm:$0xf]
        %v1046 = vld [vmem:[%s297 + $0x428] sm:$0xf]
        %v1047 = vld [vmem:[%s297 + $0x42c] sm:$0xf]
        %v1048 = vld [vmem:[%s297 + $0x430] sm:$0xf]
        %v1049 = vld [vmem:[%s297 + $0x434] sm:$0xf]
        %v1050 = vld [vmem:[%s297 + $0x438] sm:$0xf]
        %v1051 = vld [vmem:[%s297 + $0x43c] sm:$0xf]
        %v1052 = vld [vmem:[%s297 + $0x440] sm:$0xf]
        %v1053 = vld [vmem:[%s297 + $0x444] sm:$0xf]
        %v1054 = vld [vmem:[%s297 + $0x448] sm:$0xf]
        %v1055 = vld [vmem:[%s297 + $0x44c] sm:$0xf]
        %v1056 = vld [vmem:[%s297 + $0x450] sm:$0xf]
        %v1057 = vld [vmem:[%s297 + $0x454] sm:$0xf]
        %v1058 = vld [vmem:[%s297 + $0x458] sm:$0xf]
        %v1059 = vld [vmem:[%s297 + $0x45c] sm:$0xf]
        %v1060 = vld [vmem:[%s297 + $0x460] sm:$0xf]
        %v1061 = vld [vmem:[%s297 + $0x464] sm:$0xf]
        %v1062 = vld [vmem:[%s297 + $0x468] sm:$0xf]
        %v1063 = vld [vmem:[%s297 + $0x46c] sm:$0xf]
        %v1064 = vld [vmem:[%s297 + $0x470] sm:$0xf]
        %v1065 = vld [vmem:[%s297 + $0x474] sm:$0xf]
        %v1066 = vld [vmem:[%s297 + $0x478] sm:$0xf]
        %v1067 = vld [vmem:[%s297 + $0x47c] sm:$0xf]
        %v1068 = vld [vmem:[%s297 + $0x480] sm:$0xf]
        %v1069 = vld [vmem:[%s297 + $0x484] sm:$0xf]
        %v1070 = vld [vmem:[%s297 + $0x488] sm:$0xf]
        %v1071 = vld [vmem:[%s297 + $0x48c] sm:$0xf]
        %v1072 = vld [vmem:[%s297 + $0x490] sm:$0xf]
        %v1073 = vld [vmem:[%s297 + $0x494] sm:$0xf]
        %v1074 = vld [vmem:[%s297 + $0x498] sm:$0xf]
        %v1075 = vld [vmem:[%s297 + $0x49c] sm:$0xf]
        %v1076 = vld [vmem:[%s297 + $0x4a0] sm:$0xf]
        %v1077 = vld [vmem:[%s297 + $0x4a4] sm:$0xf]
        %v1078 = vld [vmem:[%s297 + $0x4a8] sm:$0xf]
        %v1079 = vld [vmem:[%s297 + $0x4ac] sm:$0xf]
        %v1080 = vld [vmem:[%s297 + $0x4b0] sm:$0xf]
        %v1081 = vld [vmem:[%s297 + $0x4b4] sm:$0xf]
        %v1082 = vld [vmem:[%s297 + $0x4b8] sm:$0xf]
        %v1083 = vld [vmem:[%s297 + $0x4bc] sm:$0xf]
        %v1084 = vld [vmem:[%s297 + $0x4c0] sm:$0xf]
        %v1085 = vld [vmem:[%s297 + $0x4c4] sm:$0xf]
        %v1086 = vld [vmem:[%s297 + $0x4c8] sm:$0xf]
        %v1087 = vld [vmem:[%s297 + $0x4cc] sm:$0xf]
        %v1088 = vld [vmem:[%s297 + $0x4d0] sm:$0xf]
        %v1089 = vld [vmem:[%s297 + $0x4d4] sm:$0xf]
        %v1090 = vld [vmem:[%s297 + $0x4d8] sm:$0xf]
        %v1091 = vld [vmem:[%s297 + $0x4dc] sm:$0xf]
        %v1092 = vld [vmem:[%s297 + $0x4e0] sm:$0xf]
        %v1093 = vld [vmem:[%s297 + $0x4e4] sm:$0xf]
        %v1094 = vld [vmem:[%s297 + $0x4e8] sm:$0xf]
        %v1095 = vld [vmem:[%s297 + $0x4ec] sm:$0xf]
        %v1096 = vld [vmem:[%s297 + $0x4f0] sm:$0xf]
        %v1097 = vld [vmem:[%s297 + $0x4f4] sm:$0xf]
        %v1098 = vld [vmem:[%s297 + $0x4f8] sm:$0xf]
        %v1099 = vld [vmem:[%s297 + $0x4fc] sm:$0xf]
        %v1100 = vld [vmem:[%s297 + $0x500] sm:$0xf]
        %v1101 = vld [vmem:[%s297 + $0x504] sm:$0xf]
        %v1102 = vld [vmem:[%s297 + $0x508] sm:$0xf]
        %v1103 = vld [vmem:[%s297 + $0x50c] sm:$0xf]
        %v1104 = vld [vmem:[%s297 + $0x510] sm:$0xf]
        %v1105 = vld [vmem:[%s297 + $0x514] sm:$0xf]
        %v1106 = vld [vmem:[%s297 + $0x518] sm:$0xf]
        %v1107 = vld [vmem:[%s297 + $0x51c] sm:$0xf]
        %v1108 = vld [vmem:[%s297 + $0x520] sm:$0xf]
        %v1109 = vld [vmem:[%s297 + $0x524] sm:$0xf]
        %v1110 = vld [vmem:[%s297 + $0x528] sm:$0xf]
        %v1111 = vld [vmem:[%s297 + $0x52c] sm:$0xf]
        %v1112 = vld [vmem:[%s297 + $0x530] sm:$0xf]
        %v1113 = vld [vmem:[%s297 + $0x534] sm:$0xf]
        %v1114 = vld [vmem:[%s297 + $0x538] sm:$0xf]
        %v1115 = vld [vmem:[%s297 + $0x53c] sm:$0xf]
        %v1116 = vld [vmem:[%s297 + $0x540] sm:$0xf]
        %v1117 = vld [vmem:[%s297 + $0x544] sm:$0xf]
        %v1118 = vld [vmem:[%s297 + $0x548] sm:$0xf]
        %v1119 = vld [vmem:[%s297 + $0x54c] sm:$0xf]
        %v1120 = vld [vmem:[%s297 + $0x550] sm:$0xf]
        %v1121 = vld [vmem:[%s297 + $0x554] sm:$0xf]
        %v1122 = vld [vmem:[%s297 + $0x558] sm:$0xf]
        %v1123 = vld [vmem:[%s297 + $0x55c] sm:$0xf]
        %v1124 = vld [vmem:[%s297 + $0x560] sm:$0xf]
        %v1125 = vld [vmem:[%s297 + $0x564] sm:$0xf]
        %v1126 = vld [vmem:[%s297 + $0x568] sm:$0xf]
        %v1127 = vld [vmem:[%s297 + $0x56c] sm:$0xf]
        %v1128 = vld [vmem:[%s297 + $0x570] sm:$0xf]
        %v1129 = vld [vmem:[%s297 + $0x574] sm:$0xf]
        %v1130 = vld [vmem:[%s297 + $0x578] sm:$0xf]
        %v1131 = vld [vmem:[%s297 + $0x57c] sm:$0xf]
        %v1132 = vld [vmem:[%s297 + $0x580] sm:$0xf]
        %v1133 = vld [vmem:[%s297 + $0x584] sm:$0xf]
        %v1134 = vld [vmem:[%s297 + $0x588] sm:$0xf]
        %v1135 = vld [vmem:[%s297 + $0x58c] sm:$0xf]
        %v1136 = vld [vmem:[%s297 + $0x590] sm:$0xf]
        %v1137 = vld [vmem:[%s297 + $0x594] sm:$0xf]
        %v1138 = vld [vmem:[%s297 + $0x598] sm:$0xf]
        %v1139 = vld [vmem:[%s297 + $0x59c] sm:$0xf]
        %v1140 = vld [vmem:[%s297 + $0x5a0] sm:$0xf]
        %v1141 = vld [vmem:[%s297 + $0x5a4] sm:$0xf]
        %v1142 = vld [vmem:[%s297 + $0x5a8] sm:$0xf]
        %v1143 = vld [vmem:[%s297 + $0x5ac] sm:$0xf]
        %v1144 = vld [vmem:[%s297 + $0x5b0] sm:$0xf]
        %v1145 = vld [vmem:[%s297 + $0x5b4] sm:$0xf]
        %v1146 = vld [vmem:[%s297 + $0x5b8] sm:$0xf]
        %v1147 = vld [vmem:[%s297 + $0x5bc] sm:$0xf]
        %v1148 = vld [vmem:[%s297 + $0x5c0] sm:$0xf]
        %v1149 = vld [vmem:[%s297 + $0x5c4] sm:$0xf]
        %v1150 = vld [vmem:[%s297 + $0x5c8] sm:$0xf]
        %v1151 = vld [vmem:[%s297 + $0x5cc] sm:$0xf]
        %v1152 = vld [vmem:[%s297 + $0x5d0] sm:$0xf]
        %v1153 = vld [vmem:[%s297 + $0x5d4] sm:$0xf]
        %v1154 = vld [vmem:[%s297 + $0x5d8] sm:$0xf]
        %v1155 = vld [vmem:[%s297 + $0x5dc] sm:$0xf]
        %v1156 = vld [vmem:[%s297 + $0x5e0] sm:$0xf]
        %v1157 = vld [vmem:[%s297 + $0x5e4] sm:$0xf]
        %v1158 = vld [vmem:[%s297 + $0x5e8] sm:$0xf]
        %v1159 = vld [vmem:[%s297 + $0x5ec] sm:$0xf]
        %v1160 = vld [vmem:[%s297 + $0x5f0] sm:$0xf]
        %v1161 = vld [vmem:[%s297 + $0x5f4] sm:$0xf]
        %v1162 = vld [vmem:[%s297 + $0x5f8] sm:$0xf]
        %v1163 = vld [vmem:[%s297 + $0x5fc] sm:$0xf]
        %v1164 = vld [vmem:[%s297 + $0x600] sm:$0xf]
        %v1165 = vld [vmem:[%s297 + $0x604] sm:$0xf]
        %v1166 = vld [vmem:[%s297 + $0x608] sm:$0xf]
        %v1167 = vld [vmem:[%s297 + $0x60c] sm:$0xf]
        %v1168 = vld [vmem:[%s297 + $0x610] sm:$0xf]
        %v1169 = vld [vmem:[%s297 + $0x614] sm:$0xf]
        %v1170 = vld [vmem:[%s297 + $0x618] sm:$0xf]
        %v1171 = vld [vmem:[%s297 + $0x61c] sm:$0xf]
        %v1172 = vld [vmem:[%s297 + $0x620] sm:$0xf]
        %v1173 = vld [vmem:[%s297 + $0x624] sm:$0xf]
        %v1174 = vld [vmem:[%s297 + $0x628] sm:$0xf]
        %v1175 = vld [vmem:[%s297 + $0x62c] sm:$0xf]
        %v1176 = vld [vmem:[%s297 + $0x630] sm:$0xf]
        %v1177 = vld [vmem:[%s297 + $0x634] sm:$0xf]
        %v1178 = vld [vmem:[%s297 + $0x638] sm:$0xf]
        %v1179 = vld [vmem:[%s297 + $0x63c] sm:$0xf]
        %v1180 = vld [vmem:[%s297 + $0x640] sm:$0xf]
        %v1181 = vld [vmem:[%s297 + $0x644] sm:$0xf]
        %v1182 = vld [vmem:[%s297 + $0x648] sm:$0xf]
        %v1183 = vld [vmem:[%s297 + $0x64c] sm:$0xf]
        %v1184 = vld [vmem:[%s297 + $0x650] sm:$0xf]
        %v1185 = vld [vmem:[%s297 + $0x654] sm:$0xf]
        %v1186 = vld [vmem:[%s297 + $0x658] sm:$0xf]
        %v1187 = vld [vmem:[%s297 + $0x65c] sm:$0xf]
        %v1188 = vld [vmem:[%s297 + $0x660] sm:$0xf]
        %v1189 = vld [vmem:[%s297 + $0x664] sm:$0xf]
        %v1190 = vld [vmem:[%s297 + $0x668] sm:$0xf]
        %v1191 = vld [vmem:[%s297 + $0x66c] sm:$0xf]
        %v1192 = vld [vmem:[%s297 + $0x670] sm:$0xf]
        %v1193 = vld [vmem:[%s297 + $0x674] sm:$0xf]
        %v1194 = vld [vmem:[%s297 + $0x678] sm:$0xf]
        %v1195 = vld [vmem:[%s297 + $0x67c] sm:$0xf]
        %v1196 = vld [vmem:[%s297 + $0x680] sm:$0xf]
        %v1197 = vld [vmem:[%s297 + $0x684] sm:$0xf]
        %v1198 = vld [vmem:[%s297 + $0x688] sm:$0xf]
        %v1199 = vld [vmem:[%s297 + $0x68c] sm:$0xf]
        %v1200 = vld [vmem:[%s297 + $0x690] sm:$0xf]
        %v1201 = vld [vmem:[%s297 + $0x694] sm:$0xf]
        %v1202 = vld [vmem:[%s297 + $0x698] sm:$0xf]
        %v1203 = vld [vmem:[%s297 + $0x69c] sm:$0xf]
        %v1204 = vld [vmem:[%s297 + $0x6a0] sm:$0xf]
        %v1205 = vld [vmem:[%s297 + $0x6a4] sm:$0xf]
        %v1206 = vld [vmem:[%s297 + $0x6a8] sm:$0xf]
        %v1207 = vld [vmem:[%s297 + $0x6ac] sm:$0xf]
        %v1208 = vld [vmem:[%s297 + $0x6b0] sm:$0xf]
        %v1209 = vld [vmem:[%s297 + $0x6b4] sm:$0xf]
        %v1210 = vld [vmem:[%s297 + $0x6b8] sm:$0xf]
        %v1211 = vld [vmem:[%s297 + $0x6bc] sm:$0xf]
        %v1212 = vld [vmem:[%s297 + $0x6c0] sm:$0xf]
        %v1213 = vld [vmem:[%s297 + $0x6c4] sm:$0xf]
        %v1214 = vld [vmem:[%s297 + $0x6c8] sm:$0xf]
        %v1215 = vld [vmem:[%s297 + $0x6cc] sm:$0xf]
        %v1216 = vld [vmem:[%s297 + $0x6d0] sm:$0xf]
        %v1217 = vld [vmem:[%s297 + $0x6d4] sm:$0xf]
        %v1218 = vld [vmem:[%s297 + $0x6d8] sm:$0xf]
        %v1219 = vld [vmem:[%s297 + $0x6dc] sm:$0xf]
        %v1220 = vld [vmem:[%s297 + $0x6e0] sm:$0xf]
        %v1221 = vld [vmem:[%s297 + $0x6e4] sm:$0xf]
        %v1222 = vld [vmem:[%s297 + $0x6e8] sm:$0xf]
        %v1223 = vld [vmem:[%s297 + $0x6ec] sm:$0xf]
        %v1224 = vld [vmem:[%s297 + $0x6f0] sm:$0xf]
        %v1225 = vld [vmem:[%s297 + $0x6f4] sm:$0xf]
        %v1226 = vld [vmem:[%s297 + $0x6f8] sm:$0xf]
        %v1227 = vld [vmem:[%s297 + $0x6fc] sm:$0xf]
        %v1228 = vld [vmem:[%s297 + $0x700] sm:$0xf]
        %v1229 = vld [vmem:[%s297 + $0x704] sm:$0xf]
        %v1230 = vld [vmem:[%s297 + $0x708] sm:$0xf]
        %v1231 = vld [vmem:[%s297 + $0x70c] sm:$0xf]
        %v1232 = vld [vmem:[%s297 + $0x710] sm:$0xf]
        %v1233 = vld [vmem:[%s297 + $0x714] sm:$0xf]
        %v1234 = vld [vmem:[%s297 + $0x718] sm:$0xf]
        %v1235 = vld [vmem:[%s297 + $0x71c] sm:$0xf]
        %v1236 = vld [vmem:[%s297 + $0x720] sm:$0xf]
        %v1237 = vld [vmem:[%s297 + $0x724] sm:$0xf]
        %v1238 = vld [vmem:[%s297 + $0x728] sm:$0xf]
        %v1239 = vld [vmem:[%s297 + $0x72c] sm:$0xf]
        %v1240 = vld [vmem:[%s297 + $0x730] sm:$0xf]
        %v1241 = vld [vmem:[%s297 + $0x734] sm:$0xf]
        %v1242 = vld [vmem:[%s297 + $0x738] sm:$0xf]
        %v1243 = vld [vmem:[%s297 + $0x73c] sm:$0xf]
        %v1244 = vld [vmem:[%s297 + $0x740] sm:$0xf]
        %v1245 = vld [vmem:[%s297 + $0x744] sm:$0xf]
        %v1246 = vld [vmem:[%s297 + $0x748] sm:$0xf]
        %v1247 = vld [vmem:[%s297 + $0x74c] sm:$0xf]
        %v1248 = vld [vmem:[%s297 + $0x750] sm:$0xf]
        %v1249 = vld [vmem:[%s297 + $0x754] sm:$0xf]
        %v1250 = vld [vmem:[%s297 + $0x758] sm:$0xf]
        %v1251 = vld [vmem:[%s297 + $0x75c] sm:$0xf]
        %v1252 = vld [vmem:[%s297 + $0x760] sm:$0xf]
        %v1253 = vld [vmem:[%s297 + $0x764] sm:$0xf]
        %v1254 = vld [vmem:[%s297 + $0x768] sm:$0xf]
        %v1255 = vld [vmem:[%s297 + $0x76c] sm:$0xf]
        %v1256 = vld [vmem:[%s297 + $0x770] sm:$0xf]
        %v1257 = vld [vmem:[%s297 + $0x774] sm:$0xf]
        %v1258 = vld [vmem:[%s297 + $0x778] sm:$0xf]
        %v1259 = vld [vmem:[%s297 + $0x77c] sm:$0xf]
        %v1260 = vld [vmem:[%s297 + $0x780] sm:$0xf]
        %v1261 = vld [vmem:[%s297 + $0x784] sm:$0xf]
        %v1262 = vld [vmem:[%s297 + $0x788] sm:$0xf]
        %v1263 = vld [vmem:[%s297 + $0x78c] sm:$0xf]
        %v1264 = vld [vmem:[%s297 + $0x790] sm:$0xf]
        %v1265 = vld [vmem:[%s297 + $0x794] sm:$0xf]
        %v1266 = vld [vmem:[%s297 + $0x798] sm:$0xf]
        %v1267 = vld [vmem:[%s297 + $0x79c] sm:$0xf]
        %v1268 = vld [vmem:[%s297 + $0x7a0] sm:$0xf]
        %v1269 = vld [vmem:[%s297 + $0x7a4] sm:$0xf]
        %v1270 = vld [vmem:[%s297 + $0x7a8] sm:$0xf]
        %v1271 = vld [vmem:[%s297 + $0x7ac] sm:$0xf]
        %v1272 = vld [vmem:[%s297 + $0x7b0] sm:$0xf]
        %v1273 = vld [vmem:[%s297 + $0x7b4] sm:$0xf]
        %v1274 = vld [vmem:[%s297 + $0x7b8] sm:$0xf]
        %v1275 = vld [vmem:[%s297 + $0x7bc] sm:$0xf]
        %v1276 = vld [vmem:[%s297 + $0x7c0] sm:$0xf]
        %v1277 = vld [vmem:[%s297 + $0x7c4] sm:$0xf]
        %v1278 = vld [vmem:[%s297 + $0x7c8] sm:$0xf]
        %v1279 = vld [vmem:[%s297 + $0x7cc] sm:$0xf]
        %v1280 = vld [vmem:[%s297 + $0x7d0] sm:$0xf]
        %v1281 = vld [vmem:[%s297 + $0x7d4] sm:$0xf]
        %v1282 = vld [vmem:[%s297 + $0x7d8] sm:$0xf]
        %v1283 = vld [vmem:[%s297 + $0x7dc] sm:$0xf]
        %v1284 = vld [vmem:[%s297 + $0x7e0] sm:$0xf]
        %v1285 = vld [vmem:[%s297 + $0x7e4] sm:$0xf]
        %v1286 = vld [vmem:[%s297 + $0x7e8] sm:$0xf]
        %v1287 = vld [vmem:[%s297 + $0x7ec] sm:$0xf]
        %v1288 = vld [vmem:[%s297 + $0x7f0] sm:$0xf]
        %v1289 = vld [vmem:[%s297 + $0x7f4] sm:$0xf]
        %v1290 = vld [vmem:[%s297 + $0x7f8] sm:$0xf]
        %v1291 = vld [vmem:[%s297 + $0x7fc] sm:$0xf]
        %v1292 = vld [vmem:[%s297 + $0x800] sm:$0xf]
        %v1293 = vld [vmem:[%s297 + $0x804] sm:$0xf]
        %v1294 = vld [vmem:[%s297 + $0x808] sm:$0xf]
        %v1295 = vld [vmem:[%s297 + $0x80c] sm:$0xf]
        %v1296 = vld [vmem:[%s297 + $0x810] sm:$0xf]
        %v1297 = vld [vmem:[%s297 + $0x814] sm:$0xf]
        %v1298 = vld [vmem:[%s297 + $0x818] sm:$0xf]
        %v1299 = vld [vmem:[%s297 + $0x81c] sm:$0xf]
        %v1300 = vld [vmem:[%s297 + $0x820] sm:$0xf]
        %v1301 = vld [vmem:[%s297 + $0x824] sm:$0xf]
        %v1302 = vld [vmem:[%s297 + $0x828] sm:$0xf]
        %v1303 = vld [vmem:[%s297 + $0x82c] sm:$0xf]
        %v1304 = vld [vmem:[%s297 + $0x830] sm:$0xf]
        %v1305 = vld [vmem:[%s297 + $0x834] sm:$0xf]
        %v1306 = vld [vmem:[%s297 + $0x838] sm:$0xf]
        %v1307 = vld [vmem:[%s297 + $0x83c] sm:$0xf]
        %v1308 = vld [vmem:[%s297 + $0x840] sm:$0xf]
        %v1309 = vld [vmem:[%s297 + $0x844] sm:$0xf]
        %v1310 = vld [vmem:[%s297 + $0x848] sm:$0xf]
        %v1311 = vld [vmem:[%s297 + $0x84c] sm:$0xf]
        %v1312 = vld [vmem:[%s297 + $0x850] sm:$0xf]
        %v1313 = vld [vmem:[%s297 + $0x854] sm:$0xf]
        %v1314 = vld [vmem:[%s297 + $0x858] sm:$0xf]
        %v1315 = vld [vmem:[%s297 + $0x85c] sm:$0xf]
        %v1316 = vld [vmem:[%s297 + $0x860] sm:$0xf]
        %v1317 = vld [vmem:[%s297 + $0x864] sm:$0xf]
        %v1318 = vld [vmem:[%s297 + $0x868] sm:$0xf]
        %v1319 = vld [vmem:[%s297 + $0x86c] sm:$0xf]
        %v1320 = vld [vmem:[%s297 + $0x870] sm:$0xf]
        %v1321 = vld [vmem:[%s297 + $0x874] sm:$0xf]
        %v1322 = vld [vmem:[%s297 + $0x878] sm:$0xf]
        %v1323 = vld [vmem:[%s297 + $0x87c] sm:$0xf]
        %v1324 = vld [vmem:[%s297 + $0x880] sm:$0xf]
        %v1325 = vld [vmem:[%s297 + $0x884] sm:$0xf]
        %v1326 = vld [vmem:[%s297 + $0x888] sm:$0xf]
        %v1327 = vld [vmem:[%s297 + $0x88c] sm:$0xf]
        %v1328 = vld [vmem:[%s297 + $0x890] sm:$0xf]
        %v1329 = vld [vmem:[%s297 + $0x894] sm:$0xf]
        %v1330 = vld [vmem:[%s297 + $0x898] sm:$0xf]
        %v1331 = vld [vmem:[%s297 + $0x89c] sm:$0xf]
        %v1332 = vld [vmem:[%s297 + $0x8a0] sm:$0xf]
        %v1333 = vld [vmem:[%s297 + $0x8a4] sm:$0xf]
        %v1334 = vld [vmem:[%s297 + $0x8a8] sm:$0xf]
        %v1335 = vld [vmem:[%s297 + $0x8ac] sm:$0xf]
        %v1336 = vld [vmem:[%s297 + $0x8b0] sm:$0xf]
        %v1337 = vld [vmem:[%s297 + $0x8b4] sm:$0xf]
        %v1338 = vld [vmem:[%s297 + $0x8b8] sm:$0xf]
        %v1339 = vld [vmem:[%s297 + $0x8bc] sm:$0xf]
        %v1340 = vld [vmem:[%s297 + $0x8c0] sm:$0xf]
        %v1341 = vld [vmem:[%s297 + $0x8c4] sm:$0xf]
        %v1342 = vld [vmem:[%s297 + $0x8c8] sm:$0xf]
        %v1343 = vld [vmem:[%s297 + $0x8cc] sm:$0xf]
        %v1344 = vld [vmem:[%s297 + $0x8d0] sm:$0xf]
        %v1345 = vld [vmem:[%s297 + $0x8d4] sm:$0xf]
        %v1346 = vld [vmem:[%s297 + $0x8d8] sm:$0xf]
        %v1347 = vld [vmem:[%s297 + $0x8dc] sm:$0xf]
        %v1348 = vld [vmem:[%s297 + $0x8e0] sm:$0xf]
        %v1349 = vld [vmem:[%s297 + $0x8e4] sm:$0xf]
        %v1350 = vld [vmem:[%s297 + $0x8e8] sm:$0xf]
        %v1351 = vld [vmem:[%s297 + $0x8ec] sm:$0xf]
        %v1352 = vld [vmem:[%s297 + $0x8f0] sm:$0xf]
        %v1353 = vld [vmem:[%s297 + $0x8f4] sm:$0xf]
        %v1354 = vld [vmem:[%s297 + $0x8f8] sm:$0xf]
        %v1355 = vld [vmem:[%s297 + $0x8fc] sm:$0xf]
        %v1356 = vld [vmem:[%s297 + $0x900] sm:$0xf]
        %v1357 = vld [vmem:[%s297 + $0x904] sm:$0xf]
        %v1358 = vld [vmem:[%s297 + $0x908] sm:$0xf]
        %v1359 = vld [vmem:[%s297 + $0x90c] sm:$0xf]
        %v1360 = vld [vmem:[%s297 + $0x910] sm:$0xf]
        %v1361 = vld [vmem:[%s297 + $0x914] sm:$0xf]
        %v1362 = vld [vmem:[%s297 + $0x918] sm:$0xf]
        %v1363 = vld [vmem:[%s297 + $0x91c] sm:$0xf]
        %v1364 = vld [vmem:[%s297 + $0x920] sm:$0xf]
        %v1365 = vld [vmem:[%s297 + $0x924] sm:$0xf]
        %v1366 = vld [vmem:[%s297 + $0x928] sm:$0xf]
        %v1367 = vld [vmem:[%s297 + $0x92c] sm:$0xf]
        %v1368 = vld [vmem:[%s297 + $0x930] sm:$0xf]
        %v1369 = vld [vmem:[%s297 + $0x934] sm:$0xf]
        %v1370 = vld [vmem:[%s297 + $0x938] sm:$0xf]
        %v1371 = vld [vmem:[%s297 + $0x93c] sm:$0xf]
        %v1372 = vld [vmem:[%s297 + $0x940] sm:$0xf]
        %v1373 = vld [vmem:[%s297 + $0x944] sm:$0xf]
        %v1374 = vld [vmem:[%s297 + $0x948] sm:$0xf]
        %v1375 = vld [vmem:[%s297 + $0x94c] sm:$0xf]
        %v1376 = vld [vmem:[%s297 + $0x950] sm:$0xf]
        %v1377 = vld [vmem:[%s297 + $0x954] sm:$0xf]
        %v1378 = vld [vmem:[%s297 + $0x958] sm:$0xf]
        %v1379 = vld [vmem:[%s297 + $0x95c] sm:$0xf]
        %v1380 = vld [vmem:[%s297 + $0x960] sm:$0xf]
        %v1381 = vld [vmem:[%s297 + $0x964] sm:$0xf]
        %v1382 = vld [vmem:[%s297 + $0x968] sm:$0xf]
        %v1383 = vld [vmem:[%s297 + $0x96c] sm:$0xf]
        %v1384 = vld [vmem:[%s297 + $0x970] sm:$0xf]
        %v1385 = vld [vmem:[%s297 + $0x974] sm:$0xf]
        %v1386 = vld [vmem:[%s297 + $0x978] sm:$0xf]
        %v1387 = vld [vmem:[%s297 + $0x97c] sm:$0xf]
        %v1388 = vld [vmem:[%s297 + $0x980] sm:$0xf]
        %v1389 = vld [vmem:[%s297 + $0x984] sm:$0xf]
        %v1390 = vld [vmem:[%s297 + $0x988] sm:$0xf]
        %v1391 = vld [vmem:[%s297 + $0x98c] sm:$0xf]
        %v1392 = vld [vmem:[%s297 + $0x990] sm:$0xf]
        %v1393 = vld [vmem:[%s297 + $0x994] sm:$0xf]
        %v1394 = vld [vmem:[%s297 + $0x998] sm:$0xf]
        %v1395 = vld [vmem:[%s297 + $0x99c] sm:$0xf]
        %v1396 = vld [vmem:[%s297 + $0x9a0] sm:$0xf]
        %v1397 = vld [vmem:[%s297 + $0x9a4] sm:$0xf]
        %v1398 = vld [vmem:[%s297 + $0x9a8] sm:$0xf]
        %v1399 = vld [vmem:[%s297 + $0x9ac] sm:$0xf]
        %v1400 = vld [vmem:[%s297 + $0x9b0] sm:$0xf]
        %v1401 = vld [vmem:[%s297 + $0x9b4] sm:$0xf]
        %v1402 = vld [vmem:[%s297 + $0x9b8] sm:$0xf]
        %v1403 = vld [vmem:[%s297 + $0x9bc] sm:$0xf]
        %v1404 = vld [vmem:[%s297 + $0x9c0] sm:$0xf]
        %v1405 = vld [vmem:[%s297 + $0x9c4] sm:$0xf]
        %v1406 = vld [vmem:[%s297 + $0x9c8] sm:$0xf]
        %v1407 = vld [vmem:[%s297 + $0x9cc] sm:$0xf]
        %v1408 = vld [vmem:[%s297 + $0x9d0] sm:$0xf]
        %v1409 = vld [vmem:[%s297 + $0x9d4] sm:$0xf]
        %v1410 = vld [vmem:[%s297 + $0x9d8] sm:$0xf]
        %v1411 = vld [vmem:[%s297 + $0x9dc] sm:$0xf]
        %v1412 = vld [vmem:[%s297 + $0x9e0] sm:$0xf]
        %v1413 = vld [vmem:[%s297 + $0x9e4] sm:$0xf]
        %v1414 = vld [vmem:[%s297 + $0x9e8] sm:$0xf]
        %v1415 = vld [vmem:[%s297 + $0x9ec] sm:$0xf]
        %v1416 = vld [vmem:[%s297 + $0x9f0] sm:$0xf]
        %v1417 = vld [vmem:[%s297 + $0x9f4] sm:$0xf]
        %v1418 = vld [vmem:[%s297 + $0x9f8] sm:$0xf]
        %v1419 = vld [vmem:[%s297 + $0x9fc] sm:$0xf]
        %v1420 = vld [vmem:[%s297 + $0xa00] sm:$0xf]
        %v1421 = vld [vmem:[%s297 + $0xa04] sm:$0xf]
        %v1422 = vld [vmem:[%s297 + $0xa08] sm:$0xf]
        %v1423 = vld [vmem:[%s297 + $0xa0c] sm:$0xf]
        %v1424 = vld [vmem:[%s297 + $0xa10] sm:$0xf]
        %v1425 = vld [vmem:[%s297 + $0xa14] sm:$0xf]
        %v1426 = vld [vmem:[%s297 + $0xa18] sm:$0xf]
        %v1427 = vld [vmem:[%s297 + $0xa1c] sm:$0xf]
        %v1428 = vld [vmem:[%s297 + $0xa20] sm:$0xf]
        %v1429 = vld [vmem:[%s297 + $0xa24] sm:$0xf]
        %v1430 = vld [vmem:[%s297 + $0xa28] sm:$0xf]
        %v1431 = vld [vmem:[%s297 + $0xa2c] sm:$0xf]
        %v1432 = vld [vmem:[%s297 + $0xa30] sm:$0xf]
        %v1433 = vld [vmem:[%s297 + $0xa34] sm:$0xf]
        %v1434 = vld [vmem:[%s297 + $0xa38] sm:$0xf]
        %v1435 = vld [vmem:[%s297 + $0xa3c] sm:$0xf]
        %v1436 = vld [vmem:[%s297 + $0xa40] sm:$0xf]
        %v1437 = vld [vmem:[%s297 + $0xa44] sm:$0xf]
        %v1438 = vld [vmem:[%s297 + $0xa48] sm:$0xf]
        %v1439 = vld [vmem:[%s297 + $0xa4c] sm:$0xf]
        %v1440 = vld [vmem:[%s297 + $0xa50] sm:$0xf]
        %v1441 = vld [vmem:[%s297 + $0xa54] sm:$0xf]
        %v1442 = vld [vmem:[%s297 + $0xa58] sm:$0xf]
        %v1443 = vld [vmem:[%s297 + $0xa5c] sm:$0xf]
        %v1444 = vld [vmem:[%s297 + $0xa60] sm:$0xf]
        %v1445 = vld [vmem:[%s297 + $0xa64] sm:$0xf]
        %v1446 = vld [vmem:[%s297 + $0xa68] sm:$0xf]
        %v1447 = vld [vmem:[%s297 + $0xa6c] sm:$0xf]
        %v1448 = vld [vmem:[%s297 + $0xa70] sm:$0xf]
        %v1449 = vld [vmem:[%s297 + $0xa74] sm:$0xf]
        %v1450 = vld [vmem:[%s297 + $0xa78] sm:$0xf]
        %v1451 = vld [vmem:[%s297 + $0xa7c] sm:$0xf]
        %v1452 = vld [vmem:[%s297 + $0xa80] sm:$0xf]
        %v1453 = vld [vmem:[%s297 + $0xa84] sm:$0xf]
        %v1454 = vld [vmem:[%s297 + $0xa88] sm:$0xf]
        %v1455 = vld [vmem:[%s297 + $0xa8c] sm:$0xf]
        %v1456 = vld [vmem:[%s297 + $0xa90] sm:$0xf]
        %v1457 = vld [vmem:[%s297 + $0xa94] sm:$0xf]
        %v1458 = vld [vmem:[%s297 + $0xa98] sm:$0xf]
        %v1459 = vld [vmem:[%s297 + $0xa9c] sm:$0xf]
        %v1460 = vld [vmem:[%s297 + $0xaa0] sm:$0xf]
        %v1461 = vld [vmem:[%s297 + $0xaa4] sm:$0xf]
        %v1462 = vld [vmem:[%s297 + $0xaa8] sm:$0xf]
        %v1463 = vld [vmem:[%s297 + $0xaac] sm:$0xf]
        %v1464 = vld [vmem:[%s297 + $0xab0] sm:$0xf]
        %v1465 = vld [vmem:[%s297 + $0xab4] sm:$0xf]
        %v1466 = vld [vmem:[%s297 + $0xab8] sm:$0xf]
        %v1467 = vld [vmem:[%s297 + $0xabc] sm:$0xf]
        %v1468 = vld [vmem:[%s297 + $0xac0] sm:$0xf]
        %v1469 = vld [vmem:[%s297 + $0xac4] sm:$0xf]
        %v1470 = vld [vmem:[%s297 + $0xac8] sm:$0xf]
        %v1471 = vld [vmem:[%s297 + $0xacc] sm:$0xf]
        %v1472 = vld [vmem:[%s297 + $0xad0] sm:$0xf]
        %v1473 = vld [vmem:[%s297 + $0xad4] sm:$0xf]
        %v1474 = vld [vmem:[%s297 + $0xad8] sm:$0xf]
        %v1475 = vld [vmem:[%s297 + $0xadc] sm:$0xf]
        %v1476 = vld [vmem:[%s297 + $0xae0] sm:$0xf]
        %v1477 = vld [vmem:[%s297 + $0xae4] sm:$0xf]
        %v1478 = vld [vmem:[%s297 + $0xae8] sm:$0xf]
        %v1479 = vld [vmem:[%s297 + $0xaec] sm:$0xf]
        %v1480 = vld [vmem:[%s297 + $0xaf0] sm:$0xf]
        %v1481 = vld [vmem:[%s297 + $0xaf4] sm:$0xf]
        %v1482 = vld [vmem:[%s297 + $0xaf8] sm:$0xf]
        %v1483 = vld [vmem:[%s297 + $0xafc] sm:$0xf]
        %v1484 = vld [vmem:[%s297 + $0xb00] sm:$0xf]
        %v1485 = vld [vmem:[%s297 + $0xb04] sm:$0xf]
        %v1486 = vld [vmem:[%s297 + $0xb08] sm:$0xf]
        %v1487 = vld [vmem:[%s297 + $0xb0c] sm:$0xf]
        %v1488 = vld [vmem:[%s297 + $0xb10] sm:$0xf]
        %v1489 = vld [vmem:[%s297 + $0xb14] sm:$0xf]
        %v1490 = vld [vmem:[%s297 + $0xb18] sm:$0xf]
        %v1491 = vld [vmem:[%s297 + $0xb1c] sm:$0xf]
        %v1492 = vld [vmem:[%s297 + $0xb20] sm:$0xf]
        %v1493 = vld [vmem:[%s297 + $0xb24] sm:$0xf]
        %v1494 = vld [vmem:[%s297 + $0xb28] sm:$0xf]
        %v1495 = vld [vmem:[%s297 + $0xb2c] sm:$0xf]
        %v1496 = vld [vmem:[%s297 + $0xb30] sm:$0xf]
        %v1497 = vld [vmem:[%s297 + $0xb34] sm:$0xf]
        %v1498 = vld [vmem:[%s297 + $0xb38] sm:$0xf]
        %v1499 = vld [vmem:[%s297 + $0xb3c] sm:$0xf]
        %v1500 = vld [vmem:[%s297 + $0xb40] sm:$0xf]
        %v1501 = vld [vmem:[%s297 + $0xb44] sm:$0xf]
        %v1502 = vld [vmem:[%s297 + $0xb48] sm:$0xf]
        %v1503 = vld [vmem:[%s297 + $0xb4c] sm:$0xf]
        %v1504 = vld [vmem:[%s297 + $0xb50] sm:$0xf]
        %v1505 = vld [vmem:[%s297 + $0xb54] sm:$0xf]
        %v1506 = vld [vmem:[%s297 + $0xb58] sm:$0xf]
        %v1507 = vld [vmem:[%s297 + $0xb5c] sm:$0xf]
        %v1508 = vld [vmem:[%s297 + $0xb60] sm:$0xf]
        %v1509 = vld [vmem:[%s297 + $0xb64] sm:$0xf]
        %v1510 = vld [vmem:[%s297 + $0xb68] sm:$0xf]
        %v1511 = vld [vmem:[%s297 + $0xb6c] sm:$0xf]
        %v1512 = vld [vmem:[%s297 + $0xb70] sm:$0xf]
        %v1513 = vld [vmem:[%s297 + $0xb74] sm:$0xf]
        %v1514 = vld [vmem:[%s297 + $0xb78] sm:$0xf]
        %v1515 = vld [vmem:[%s297 + $0xb7c] sm:$0xf]
        %v1516 = vld [vmem:[%s297 + $0xb80] sm:$0xf]
        %v1517 = vld [vmem:[%s297 + $0xb84] sm:$0xf]
        %v1518 = vld [vmem:[%s297 + $0xb88] sm:$0xf]
        %v1519 = vld [vmem:[%s297 + $0xb8c] sm:$0xf]
        %v1520 = vld [vmem:[%s297 + $0xb90] sm:$0xf]
        %v1521 = vld [vmem:[%s297 + $0xb94] sm:$0xf]
        %v1522 = vld [vmem:[%s297 + $0xb98] sm:$0xf]
        %v1523 = vld [vmem:[%s297 + $0xb9c] sm:$0xf]
        %v1524 = vld [vmem:[%s297 + $0xba0] sm:$0xf]
        %v1525 = vld [vmem:[%s297 + $0xba4] sm:$0xf]
        %v1526 = vld [vmem:[%s297 + $0xba8] sm:$0xf]
        %v1527 = vld [vmem:[%s297 + $0xbac] sm:$0xf]
        %v1528 = vld [vmem:[%s297 + $0xbb0] sm:$0xf]
        %v1529 = vld [vmem:[%s297 + $0xbb4] sm:$0xf]
        %v1530 = vld [vmem:[%s297 + $0xbb8] sm:$0xf]
        %v1531 = vld [vmem:[%s297 + $0xbbc] sm:$0xf]
        %v1532 = vld [vmem:[%s297 + $0xbc0] sm:$0xf]
        %v1533 = vld [vmem:[%s297 + $0xbc4] sm:$0xf]
        %v1534 = vld [vmem:[%s297 + $0xbc8] sm:$0xf]
        %v1535 = vld [vmem:[%s297 + $0xbcc] sm:$0xf]
        %v1536 = vld [vmem:[%s297 + $0xbd0] sm:$0xf]
        %v1537 = vld [vmem:[%s297 + $0xbd4] sm:$0xf]
        %v1538 = vld [vmem:[%s297 + $0xbd8] sm:$0xf]
        %v1539 = vld [vmem:[%s297 + $0xbdc] sm:$0xf]
        %v1540 = vld [vmem:[%s297 + $0xbe0] sm:$0xf]
        %v1541 = vld [vmem:[%s297 + $0xbe4] sm:$0xf]
        %v1542 = vld [vmem:[%s297 + $0xbe8] sm:$0xf]
        %v1543 = vld [vmem:[%s297 + $0xbec] sm:$0xf]
        %v1544 = vld [vmem:[%s297 + $0xbf0] sm:$0xf]
        %v1545 = vld [vmem:[%s297 + $0xbf4] sm:$0xf]
        %v1546 = vld [vmem:[%s297 + $0xbf8] sm:$0xf]
        %v1547 = vld [vmem:[%s297 + $0xbfc] sm:$0xf]
        %v1548 = vld [vmem:[%s297 + $0xc00] sm:$0xf]
        %v1549 = vld [vmem:[%s297 + $0xc04] sm:$0xf]
        %v1550 = vld [vmem:[%s297 + $0xc08] sm:$0xf]
        %v1551 = vld [vmem:[%s297 + $0xc0c] sm:$0xf]
        %v1552 = vld [vmem:[%s297 + $0xc10] sm:$0xf]
        %v1553 = vld [vmem:[%s297 + $0xc14] sm:$0xf]
        %v1554 = vld [vmem:[%s297 + $0xc18] sm:$0xf]
        %v1555 = vld [vmem:[%s297 + $0xc1c] sm:$0xf]
        %v1556 = vld [vmem:[%s297 + $0xc20] sm:$0xf]
        %v1557 = vld [vmem:[%s297 + $0xc24] sm:$0xf]
        %v1558 = vld [vmem:[%s297 + $0xc28] sm:$0xf]
        %v1559 = vld [vmem:[%s297 + $0xc2c] sm:$0xf]
        %v1560 = vld [vmem:[%s297 + $0xc30] sm:$0xf]
        %v1561 = vld [vmem:[%s297 + $0xc34] sm:$0xf]
        %v1562 = vld [vmem:[%s297 + $0xc38] sm:$0xf]
        %v1563 = vld [vmem:[%s297 + $0xc3c] sm:$0xf]
        %v1564 = vld [vmem:[%s297 + $0xc40] sm:$0xf]
        %v1565 = vld [vmem:[%s297 + $0xc44] sm:$0xf]
        %v1566 = vld [vmem:[%s297 + $0xc48] sm:$0xf]
        %v1567 = vld [vmem:[%s297 + $0xc4c] sm:$0xf]
        %v1568 = vld [vmem:[%s297 + $0xc50] sm:$0xf]
        %v1569 = vld [vmem:[%s297 + $0xc54] sm:$0xf]
        %v1570 = vld [vmem:[%s297 + $0xc58] sm:$0xf]
        %v1571 = vld [vmem:[%s297 + $0xc5c] sm:$0xf]
        %v1572 = vld [vmem:[%s297 + $0xc60] sm:$0xf]
        %v1573 = vld [vmem:[%s297 + $0xc64] sm:$0xf]
        %v1574 = vld [vmem:[%s297 + $0xc68] sm:$0xf]
        %v1575 = vld [vmem:[%s297 + $0xc6c] sm:$0xf]
        %v1576 = vld [vmem:[%s297 + $0xc70] sm:$0xf]
        %v1577 = vld [vmem:[%s297 + $0xc74] sm:$0xf]
        %v1578 = vld [vmem:[%s297 + $0xc78] sm:$0xf]
        %v1579 = vld [vmem:[%s297 + $0xc7c] sm:$0xf]
        %v1580 = vld [vmem:[%s297 + $0xc80] sm:$0xf]
        %v1581 = vld [vmem:[%s297 + $0xc84] sm:$0xf]
        %v1582 = vld [vmem:[%s297 + $0xc88] sm:$0xf]
        %v1583 = vld [vmem:[%s297 + $0xc8c] sm:$0xf]
        %v1584 = vld [vmem:[%s297 + $0xc90] sm:$0xf]
        %v1585 = vld [vmem:[%s297 + $0xc94] sm:$0xf]
        %v1586 = vld [vmem:[%s297 + $0xc98] sm:$0xf]
        %v1587 = vld [vmem:[%s297 + $0xc9c] sm:$0xf]
        %v1588 = vld [vmem:[%s297 + $0xca0] sm:$0xf]
        %v1589 = vld [vmem:[%s297 + $0xca4] sm:$0xf]
        %v1590 = vld [vmem:[%s297 + $0xca8] sm:$0xf]
        %v1591 = vld [vmem:[%s297 + $0xcac] sm:$0xf]
        %v1592 = vld [vmem:[%s297 + $0xcb0] sm:$0xf]
        %v1593 = vld [vmem:[%s297 + $0xcb4] sm:$0xf]
        %v1594 = vld [vmem:[%s297 + $0xcb8] sm:$0xf]
        %v1595 = vld [vmem:[%s297 + $0xcbc] sm:$0xf]
        %v1596 = vld [vmem:[%s297 + $0xcc0] sm:$0xf]
        %v1597 = vld [vmem:[%s297 + $0xcc4] sm:$0xf]
        %v1598 = vld [vmem:[%s297 + $0xcc8] sm:$0xf]
        %v1599 = vld [vmem:[%s297 + $0xccc] sm:$0xf]
        %v1600 = vld [vmem:[%s297 + $0xcd0] sm:$0xf]
        %v1601 = vld [vmem:[%s297 + $0xcd4] sm:$0xf]
        %v1602 = vld [vmem:[%s297 + $0xcd8] sm:$0xf]
        %v1603 = vld [vmem:[%s297 + $0xcdc] sm:$0xf]
        %v1604 = vld [vmem:[%s297 + $0xce0] sm:$0xf]
        %v1605 = vld [vmem:[%s297 + $0xce4] sm:$0xf]
        %v1606 = vld [vmem:[%s297 + $0xce8] sm:$0xf]
        %v1607 = vld [vmem:[%s297 + $0xcec] sm:$0xf]
        %v1608 = vld [vmem:[%s297 + $0xcf0] sm:$0xf]
        %v1609 = vld [vmem:[%s297 + $0xcf4] sm:$0xf]
        %v1610 = vld [vmem:[%s297 + $0xcf8] sm:$0xf]
        %v1611 = vld [vmem:[%s297 + $0xcfc] sm:$0xf]
        %v1612 = vld [vmem:[%s297 + $0xd00] sm:$0xf]
        %v1613 = vld [vmem:[%s297 + $0xd04] sm:$0xf]
        %v1614 = vld [vmem:[%s297 + $0xd08] sm:$0xf]
        %v1615 = vld [vmem:[%s297 + $0xd0c] sm:$0xf]
        %v1616 = vld [vmem:[%s297 + $0xd10] sm:$0xf]
        %v1617 = vld [vmem:[%s297 + $0xd14] sm:$0xf]
        %v1618 = vld [vmem:[%s297 + $0xd18] sm:$0xf]
        %v1619 = vld [vmem:[%s297 + $0xd1c] sm:$0xf]
        %v1620 = vld [vmem:[%s297 + $0xd20] sm:$0xf]
        %v1621 = vld [vmem:[%s297 + $0xd24] sm:$0xf]
        %v1622 = vld [vmem:[%s297 + $0xd28] sm:$0xf]
        %v1623 = vld [vmem:[%s297 + $0xd2c] sm:$0xf]
        %v1624 = vld [vmem:[%s297 + $0xd30] sm:$0xf]
        %v1625 = vld [vmem:[%s297 + $0xd34] sm:$0xf]
        %v1626 = vld [vmem:[%s297 + $0xd38] sm:$0xf]
        %v1627 = vld [vmem:[%s297 + $0xd3c] sm:$0xf]
        %v1628 = vld [vmem:[%s297 + $0xd40] sm:$0xf]
        %v1629 = vld [vmem:[%s297 + $0xd44] sm:$0xf]
        %v1630 = vld [vmem:[%s297 + $0xd48] sm:$0xf]
        %v1631 = vld [vmem:[%s297 + $0xd4c] sm:$0xf]
        %v1632 = vld [vmem:[%s297 + $0xd50] sm:$0xf]
        %v1633 = vld [vmem:[%s297 + $0xd54] sm:$0xf]
        %v1634 = vld [vmem:[%s297 + $0xd58] sm:$0xf]
        %v1635 = vld [vmem:[%s297 + $0xd5c] sm:$0xf]
        %v1636 = vld [vmem:[%s297 + $0xd60] sm:$0xf]
        %v1637 = vld [vmem:[%s297 + $0xd64] sm:$0xf]
        %v1638 = vld [vmem:[%s297 + $0xd68] sm:$0xf]
        %v1639 = vld [vmem:[%s297 + $0xd6c] sm:$0xf]
        %v1640 = vld [vmem:[%s297 + $0xd70] sm:$0xf]
        %v1641 = vld [vmem:[%s297 + $0xd74] sm:$0xf]
        %v1642 = vld [vmem:[%s297 + $0xd78] sm:$0xf]
        %v1643 = vld [vmem:[%s297 + $0xd7c] sm:$0xf]
        %v1644 = vld [vmem:[%s297 + $0xd80] sm:$0xf]
        %v1645 = vld [vmem:[%s297 + $0xd84] sm:$0xf]
        %v1646 = vld [vmem:[%s297 + $0xd88] sm:$0xf]
        %v1647 = vld [vmem:[%s297 + $0xd8c] sm:$0xf]
        %v1648 = vld [vmem:[%s297 + $0xd90] sm:$0xf]
        %v1649 = vld [vmem:[%s297 + $0xd94] sm:$0xf]
        %v1650 = vld [vmem:[%s297 + $0xd98] sm:$0xf]
        %v1651 = vld [vmem:[%s297 + $0xd9c] sm:$0xf]
        %v1652 = vld [vmem:[%s297 + $0xda0] sm:$0xf]
        %v1653 = vld [vmem:[%s297 + $0xda4] sm:$0xf]
        %v1654 = vld [vmem:[%s297 + $0xda8] sm:$0xf]
        %v1655 = vld [vmem:[%s297 + $0xdac] sm:$0xf]
        %v1656 = vld [vmem:[%s297 + $0xdb0] sm:$0xf]
        %v1657 = vld [vmem:[%s297 + $0xdb4] sm:$0xf]
        %v1658 = vld [vmem:[%s297 + $0xdb8] sm:$0xf]
        %v1659 = vld [vmem:[%s297 + $0xdbc] sm:$0xf]
        %v1660 = vld [vmem:[%s297 + $0xdc0] sm:$0xf]
        %v1661 = vld [vmem:[%s297 + $0xdc4] sm:$0xf]
        %v1662 = vld [vmem:[%s297 + $0xdc8] sm:$0xf]
        %v1663 = vld [vmem:[%s297 + $0xdcc] sm:$0xf]
        %v1664 = vld [vmem:[%s297 + $0xdd0] sm:$0xf]
        %v1665 = vld [vmem:[%s297 + $0xdd4] sm:$0xf]
        %v1666 = vld [vmem:[%s297 + $0xdd8] sm:$0xf]
        %v1667 = vld [vmem:[%s297 + $0xddc] sm:$0xf]
        %v1668 = vld [vmem:[%s297 + $0xde0] sm:$0xf]
        %v1669 = vld [vmem:[%s297 + $0xde4] sm:$0xf]
        %v1670 = vld [vmem:[%s297 + $0xde8] sm:$0xf]
        %v1671 = vld [vmem:[%s297 + $0xdec] sm:$0xf]
        %v1672 = vld [vmem:[%s297 + $0xdf0] sm:$0xf]
        %v1673 = vld [vmem:[%s297 + $0xdf4] sm:$0xf]
        %v1674 = vld [vmem:[%s297 + $0xdf8] sm:$0xf]
        %v1675 = vld [vmem:[%s297 + $0xdfc] sm:$0xf]
        %v1676 = vld [vmem:[%s297 + $0xe00] sm:$0xf]
        %v1677 = vld [vmem:[%s297 + $0xe04] sm:$0xf]
        %v1678 = vld [vmem:[%s297 + $0xe08] sm:$0xf]
        %v1679 = vld [vmem:[%s297 + $0xe0c] sm:$0xf]
        %v1680 = vld [vmem:[%s297 + $0xe10] sm:$0xf]
        %v1681 = vld [vmem:[%s297 + $0xe14] sm:$0xf]
        %v1682 = vld [vmem:[%s297 + $0xe18] sm:$0xf]
        %v1683 = vld [vmem:[%s297 + $0xe1c] sm:$0xf]
        %v1684 = vld [vmem:[%s297 + $0xe20] sm:$0xf]
        %v1685 = vld [vmem:[%s297 + $0xe24] sm:$0xf]
        %v1686 = vld [vmem:[%s297 + $0xe28] sm:$0xf]
        %v1687 = vld [vmem:[%s297 + $0xe2c] sm:$0xf]
        %v1688 = vld [vmem:[%s297 + $0xe30] sm:$0xf]
        %v1689 = vld [vmem:[%s297 + $0xe34] sm:$0xf]
        %v1690 = vld [vmem:[%s297 + $0xe38] sm:$0xf]
        %v1691 = vld [vmem:[%s297 + $0xe3c] sm:$0xf]
        %v1692 = vld [vmem:[%s297 + $0xe40] sm:$0xf]
        %v1693 = vld [vmem:[%s297 + $0xe44] sm:$0xf]
        %v1694 = vld [vmem:[%s297 + $0xe48] sm:$0xf]
        %v1695 = vld [vmem:[%s297 + $0xe4c] sm:$0xf]
        %v1696 = vld [vmem:[%s297 + $0xe50] sm:$0xf]
        %v1697 = vld [vmem:[%s297 + $0xe54] sm:$0xf]
        %v1698 = vld [vmem:[%s297 + $0xe58] sm:$0xf]
        %v1699 = vld [vmem:[%s297 + $0xe5c] sm:$0xf]
        %v1700 = vld [vmem:[%s297 + $0xe60] sm:$0xf]
        %v1701 = vld [vmem:[%s297 + $0xe64] sm:$0xf]
        %v1702 = vld [vmem:[%s297 + $0xe68] sm:$0xf]
        %v1703 = vld [vmem:[%s297 + $0xe6c] sm:$0xf]
        %v1704 = vld [vmem:[%s297 + $0xe70] sm:$0xf]
        %v1705 = vld [vmem:[%s297 + $0xe74] sm:$0xf]
        %v1706 = vld [vmem:[%s297 + $0xe78] sm:$0xf]
        %v1707 = vld [vmem:[%s297 + $0xe7c] sm:$0xf]
        %v1708 = vld [vmem:[%s297 + $0xe80] sm:$0xf]
        %v1709 = vld [vmem:[%s297 + $0xe84] sm:$0xf]
        %v1710 = vld [vmem:[%s297 + $0xe88] sm:$0xf]
        %v1711 = vld [vmem:[%s297 + $0xe8c] sm:$0xf]
        %v1712 = vld [vmem:[%s297 + $0xe90] sm:$0xf]
        %v1713 = vld [vmem:[%s297 + $0xe94] sm:$0xf]
        %v1714 = vld [vmem:[%s297 + $0xe98] sm:$0xf]
        %v1715 = vld [vmem:[%s297 + $0xe9c] sm:$0xf]
        %v1716 = vld [vmem:[%s297 + $0xea0] sm:$0xf]
        %v1717 = vld [vmem:[%s297 + $0xea4] sm:$0xf]
        %v1718 = vld [vmem:[%s297 + $0xea8] sm:$0xf]
        %v1719 = vld [vmem:[%s297 + $0xeac] sm:$0xf]
        %v1720 = vld [vmem:[%s297 + $0xeb0] sm:$0xf]
        %v1721 = vld [vmem:[%s297 + $0xeb4] sm:$0xf]
        %v1722 = vld [vmem:[%s297 + $0xeb8] sm:$0xf]
        %v1723 = vld [vmem:[%s297 + $0xebc] sm:$0xf]
        %v1724 = vld [vmem:[%s297 + $0xec0] sm:$0xf]
        %v1725 = vld [vmem:[%s297 + $0xec4] sm:$0xf]
        %v1726 = vld [vmem:[%s297 + $0xec8] sm:$0xf]
        %v1727 = vld [vmem:[%s297 + $0xecc] sm:$0xf]
        %v1728 = vld [vmem:[%s297 + $0xed0] sm:$0xf]
        %v1729 = vld [vmem:[%s297 + $0xed4] sm:$0xf]
        %v1730 = vld [vmem:[%s297 + $0xed8] sm:$0xf]
        %v1731 = vld [vmem:[%s297 + $0xedc] sm:$0xf]
        %v1732 = vld [vmem:[%s297 + $0xee0] sm:$0xf]
        %v1733 = vld [vmem:[%s297 + $0xee4] sm:$0xf]
        %v1734 = vld [vmem:[%s297 + $0xee8] sm:$0xf]
        %v1735 = vld [vmem:[%s297 + $0xeec] sm:$0xf]
        %v1736 = vld [vmem:[%s297 + $0xef0] sm:$0xf]
        %v1737 = vld [vmem:[%s297 + $0xef4] sm:$0xf]
        %v1738 = vld [vmem:[%s297 + $0xef8] sm:$0xf]
        %v1739 = vld [vmem:[%s297 + $0xefc] sm:$0xf]
        %v1740 = vld [vmem:[%s297 + $0xf00] sm:$0xf]
        %v1741 = vld [vmem:[%s297 + $0xf04] sm:$0xf]
        %v1742 = vld [vmem:[%s297 + $0xf08] sm:$0xf]
        %v1743 = vld [vmem:[%s297 + $0xf0c] sm:$0xf]
        %v1744 = vld [vmem:[%s297 + $0xf10] sm:$0xf]
        %v1745 = vld [vmem:[%s297 + $0xf14] sm:$0xf]
        %v1746 = vld [vmem:[%s297 + $0xf18] sm:$0xf]
        %v1747 = vld [vmem:[%s297 + $0xf1c] sm:$0xf]
        %v1748 = vld [vmem:[%s297 + $0xf20] sm:$0xf]
        %v1749 = vld [vmem:[%s297 + $0xf24] sm:$0xf]
        %v1750 = vld [vmem:[%s297 + $0xf28] sm:$0xf]
        %v1751 = vld [vmem:[%s297 + $0xf2c] sm:$0xf]
        %v1752 = vld [vmem:[%s297 + $0xf30] sm:$0xf]
        %v1753 = vld [vmem:[%s297 + $0xf34] sm:$0xf]
        %v1754 = vld [vmem:[%s297 + $0xf38] sm:$0xf]
        %v1755 = vld [vmem:[%s297 + $0xf3c] sm:$0xf]
        %v1756 = vld [vmem:[%s297 + $0xf40] sm:$0xf]
        %v1757 = vld [vmem:[%s297 + $0xf44] sm:$0xf]
        %v1758 = vld [vmem:[%s297 + $0xf48] sm:$0xf]
        %v1759 = vld [vmem:[%s297 + $0xf4c] sm:$0xf]
        %v1760 = vld [vmem:[%s297 + $0xf50] sm:$0xf]
        %v1761 = vld [vmem:[%s297 + $0xf54] sm:$0xf]
        %v1762 = vld [vmem:[%s297 + $0xf58] sm:$0xf]
        %v1763 = vld [vmem:[%s297 + $0xf5c] sm:$0xf]
        %v1764 = vld [vmem:[%s297 + $0xf60] sm:$0xf]
        %v1765 = vld [vmem:[%s297 + $0xf64] sm:$0xf]
        %v1766 = vld [vmem:[%s297 + $0xf68] sm:$0xf]
        %v1767 = vld [vmem:[%s297 + $0xf6c] sm:$0xf]
        %v1768 = vld [vmem:[%s297 + $0xf70] sm:$0xf]
        %v1769 = vld [vmem:[%s297 + $0xf74] sm:$0xf]
        %v1770 = vld [vmem:[%s297 + $0xf78] sm:$0xf]
        %v1771 = vld [vmem:[%s297 + $0xf7c] sm:$0xf]
        %v1772 = vld [vmem:[%s297 + $0xf80] sm:$0xf]
        %v1773 = vld [vmem:[%s297 + $0xf84] sm:$0xf]
        %v1774 = vld [vmem:[%s297 + $0xf88] sm:$0xf]
        %v1775 = vld [vmem:[%s297 + $0xf8c] sm:$0xf]
        %v1776 = vld [vmem:[%s297 + $0xf90] sm:$0xf]
        %v1777 = vld [vmem:[%s297 + $0xf94] sm:$0xf]
        %v1778 = vld [vmem:[%s297 + $0xf98] sm:$0xf]
        %v1779 = vld [vmem:[%s297 + $0xf9c] sm:$0xf]
        %v1780 = vld [vmem:[%s297 + $0xfa0] sm:$0xf]
        %v1781 = vld [vmem:[%s297 + $0xfa4] sm:$0xf]
        %v1782 = vld [vmem:[%s297 + $0xfa8] sm:$0xf]
        %v1783 = vld [vmem:[%s297 + $0xfac] sm:$0xf]
        %v1784 = vld [vmem:[%s297 + $0xfb0] sm:$0xf]
        %v1785 = vld [vmem:[%s297 + $0xfb4] sm:$0xf]
        %v1786 = vld [vmem:[%s297 + $0xfb8] sm:$0xf]
        %v1787 = vld [vmem:[%s297 + $0xfbc] sm:$0xf]
        %v1788 = vld [vmem:[%s297 + $0xfc0] sm:$0xf]
        %v1789 = vld [vmem:[%s297 + $0xfc4] sm:$0xf]
        %v1790 = vld [vmem:[%s297 + $0xfc8] sm:$0xf]
        %v1791 = vld [vmem:[%s297 + $0xfcc] sm:$0xf]
        %v1792 = vld [vmem:[%s297 + $0xfd0] sm:$0xf]
        %v1793 = vld [vmem:[%s297 + $0xfd4] sm:$0xf]
        %v1794 = vld [vmem:[%s297 + $0xfd8] sm:$0xf]
        %v1795 = vld [vmem:[%s297 + $0xfdc] sm:$0xf]
        %v1796 = vld [vmem:[%s297 + $0xfe0] sm:$0xf]
        %v1797 = vld [vmem:[%s297 + $0xfe4] sm:$0xf]
        %v1798 = vld [vmem:[%s297 + $0xfe8] sm:$0xf]
        %v1799 = vld [vmem:[%s297 + $0xfec] sm:$0xf]
        %v1800 = vld [vmem:[%s297 + $0xff0] sm:$0xf]
        %v1801 = vld [vmem:[%s297 + $0xff4] sm:$0xf]
        %v1802 = vld [vmem:[%s297 + $0xff8] sm:$0xf]
        %v1803 = vld [vmem:[%s297 + $0xffc] sm:$0xf]
        %v2828 = vunpack.c.l.b16 %v780
        %v2829 = vunpack.c.l.b16 %v781
        %v2830 = vunpack.c.l.b16 %v782
        %v2831 = vunpack.c.l.b16 %v783
        %v2832 = vunpack.c.l.b16 %v784
        %v2833 = vunpack.c.l.b16 %v785
        %v2834 = vunpack.c.l.b16 %v786
        %v2835 = vunpack.c.l.b16 %v787
        %v2836 = vunpack.c.l.b16 %v788
        %v2837 = vunpack.c.l.b16 %v789
        %v2838 = vunpack.c.l.b16 %v790
        %v2839 = vunpack.c.l.b16 %v791
        %v2840 = vunpack.c.l.b16 %v792
        %v2841 = vunpack.c.l.b16 %v793
        %v2842 = vunpack.c.l.b16 %v794
        %v2843 = vunpack.c.l.b16 %v795
        %v2844 = vunpack.c.l.b16 %v796
        %v2845 = vunpack.c.l.b16 %v797
        %v2846 = vunpack.c.l.b16 %v798
        %v2847 = vunpack.c.l.b16 %v799
        %v2848 = vunpack.c.l.b16 %v800
        %v2849 = vunpack.c.l.b16 %v801
        %v2850 = vunpack.c.l.b16 %v802
        %v2851 = vunpack.c.l.b16 %v803
        %v2852 = vunpack.c.l.b16 %v804
        %v2853 = vunpack.c.l.b16 %v805
        %v2854 = vunpack.c.l.b16 %v806
        %v2855 = vunpack.c.l.b16 %v807
        %v2856 = vunpack.c.l.b16 %v808
        %v2857 = vunpack.c.l.b16 %v809
        %v2858 = vunpack.c.l.b16 %v810
        %v2859 = vunpack.c.l.b16 %v811
        %v2860 = vunpack.c.l.b16 %v812
        %v2861 = vunpack.c.l.b16 %v813
        %v2862 = vunpack.c.l.b16 %v814
        %v2863 = vunpack.c.l.b16 %v815
        %v2864 = vunpack.c.l.b16 %v816
        %v2865 = vunpack.c.l.b16 %v817
        %v2866 = vunpack.c.l.b16 %v818
        %v2867 = vunpack.c.l.b16 %v819
        %v2868 = vunpack.c.l.b16 %v820
        %v2869 = vunpack.c.l.b16 %v821
        %v2870 = vunpack.c.l.b16 %v822
        %v2871 = vunpack.c.l.b16 %v823
        %v2872 = vunpack.c.l.b16 %v824
        %v2873 = vunpack.c.l.b16 %v825
        %v2874 = vunpack.c.l.b16 %v826
        %v2875 = vunpack.c.l.b16 %v827
        %v2876 = vunpack.c.l.b16 %v828
        %v2877 = vunpack.c.l.b16 %v829
        %v2878 = vunpack.c.l.b16 %v830
        %v2879 = vunpack.c.l.b16 %v831
        %v2880 = vunpack.c.l.b16 %v832
        %v2881 = vunpack.c.l.b16 %v833
        %v2882 = vunpack.c.l.b16 %v834
        %v2883 = vunpack.c.l.b16 %v835
        %v2884 = vunpack.c.l.b16 %v836
        %v2885 = vunpack.c.l.b16 %v837
        %v2886 = vunpack.c.l.b16 %v838
        %v2887 = vunpack.c.l.b16 %v839
        %v2888 = vunpack.c.l.b16 %v840
        %v2889 = vunpack.c.l.b16 %v841
        %v2890 = vunpack.c.l.b16 %v842
        %v2891 = vunpack.c.l.b16 %v843
        %v2892 = vunpack.c.l.b16 %v844
        %v2893 = vunpack.c.l.b16 %v845
        %v2894 = vunpack.c.l.b16 %v846
        %v2895 = vunpack.c.l.b16 %v847
        %v2896 = vunpack.c.l.b16 %v848
        %v2897 = vunpack.c.l.b16 %v849
        %v2898 = vunpack.c.l.b16 %v850
        %v2899 = vunpack.c.l.b16 %v851
        %v2900 = vunpack.c.l.b16 %v852
        %v2901 = vunpack.c.l.b16 %v853
        %v2902 = vunpack.c.l.b16 %v854
        %v2903 = vunpack.c.l.b16 %v855
        %v2904 = vunpack.c.l.b16 %v856
        %v2905 = vunpack.c.l.b16 %v857
        %v2906 = vunpack.c.l.b16 %v858
        %v2907 = vunpack.c.l.b16 %v859
        %v2908 = vunpack.c.l.b16 %v860
        %v2909 = vunpack.c.l.b16 %v861
        %v2910 = vunpack.c.l.b16 %v862
        %v2911 = vunpack.c.l.b16 %v863
        %v2912 = vunpack.c.l.b16 %v864
        %v2913 = vunpack.c.l.b16 %v865
        %v2914 = vunpack.c.l.b16 %v866
        %v2915 = vunpack.c.l.b16 %v867
        %v2916 = vunpack.c.l.b16 %v868
        %v2917 = vunpack.c.l.b16 %v869
        %v2918 = vunpack.c.l.b16 %v870
        %v2919 = vunpack.c.l.b16 %v871
        %v2920 = vunpack.c.l.b16 %v872
        %v2921 = vunpack.c.l.b16 %v873
        %v2922 = vunpack.c.l.b16 %v874
        %v2923 = vunpack.c.l.b16 %v875
        %v2924 = vunpack.c.l.b16 %v876
        %v2925 = vunpack.c.l.b16 %v877
        %v2926 = vunpack.c.l.b16 %v878
        %v2927 = vunpack.c.l.b16 %v879
        %v2928 = vunpack.c.l.b16 %v880
        %v2929 = vunpack.c.l.b16 %v881
        %v2930 = vunpack.c.l.b16 %v882
        %v2931 = vunpack.c.l.b16 %v883
        %v2932 = vunpack.c.l.b16 %v884
        %v2933 = vunpack.c.l.b16 %v885
        %v2934 = vunpack.c.l.b16 %v886
        %v2935 = vunpack.c.l.b16 %v887
        %v2936 = vunpack.c.l.b16 %v888
        %v2937 = vunpack.c.l.b16 %v889
        %v2938 = vunpack.c.l.b16 %v890
        %v2939 = vunpack.c.l.b16 %v891
        %v2940 = vunpack.c.l.b16 %v892
        %v2941 = vunpack.c.l.b16 %v893
        %v2942 = vunpack.c.l.b16 %v894
        %v2943 = vunpack.c.l.b16 %v895
        %v2944 = vunpack.c.l.b16 %v896
        %v2945 = vunpack.c.l.b16 %v897
        %v2946 = vunpack.c.l.b16 %v898
        %v2947 = vunpack.c.l.b16 %v899
        %v2948 = vunpack.c.l.b16 %v900
        %v2949 = vunpack.c.l.b16 %v901
        %v2950 = vunpack.c.l.b16 %v902
        %v2951 = vunpack.c.l.b16 %v903
        %v2952 = vunpack.c.l.b16 %v904
        %v2953 = vunpack.c.l.b16 %v905
        %v2954 = vunpack.c.l.b16 %v906
        %v2955 = vunpack.c.l.b16 %v907
        %v2956 = vunpack.c.l.b16 %v908
        %v2957 = vunpack.c.l.b16 %v909
        %v2958 = vunpack.c.l.b16 %v910
        %v2959 = vunpack.c.l.b16 %v911
        %v2960 = vunpack.c.l.b16 %v912
        %v2961 = vunpack.c.l.b16 %v913
        %v2962 = vunpack.c.l.b16 %v914
        %v2963 = vunpack.c.l.b16 %v915
        %v2964 = vunpack.c.l.b16 %v916
        %v2965 = vunpack.c.l.b16 %v917
        %v2966 = vunpack.c.l.b16 %v918
        %v2967 = vunpack.c.l.b16 %v919
        %v2968 = vunpack.c.l.b16 %v920
        %v2969 = vunpack.c.l.b16 %v921
        %v2970 = vunpack.c.l.b16 %v922
        %v2971 = vunpack.c.l.b16 %v923
        %v2972 = vunpack.c.l.b16 %v924
        %v2973 = vunpack.c.l.b16 %v925
        %v2974 = vunpack.c.l.b16 %v926
        %v2975 = vunpack.c.l.b16 %v927
        %v2976 = vunpack.c.l.b16 %v928
        %v2977 = vunpack.c.l.b16 %v929
        %v2978 = vunpack.c.l.b16 %v930
        %v2979 = vunpack.c.l.b16 %v931
        %v2980 = vunpack.c.l.b16 %v932
        %v2981 = vunpack.c.l.b16 %v933
        %v2982 = vunpack.c.l.b16 %v934
        %v2983 = vunpack.c.l.b16 %v935
        %v2984 = vunpack.c.l.b16 %v936
        %v2985 = vunpack.c.l.b16 %v937
        %v2986 = vunpack.c.l.b16 %v938
        %v2987 = vunpack.c.l.b16 %v939
        %v2988 = vunpack.c.l.b16 %v940
        %v2989 = vunpack.c.l.b16 %v941
        %v2990 = vunpack.c.l.b16 %v942
        %v2991 = vunpack.c.l.b16 %v943
        %v2992 = vunpack.c.l.b16 %v944
        %v2993 = vunpack.c.l.b16 %v945
        %v2994 = vunpack.c.l.b16 %v946
        %v2995 = vunpack.c.l.b16 %v947
        %v2996 = vunpack.c.l.b16 %v948
        %v2997 = vunpack.c.l.b16 %v949
        %v2998 = vunpack.c.l.b16 %v950
        %v2999 = vunpack.c.l.b16 %v951
        %v3000 = vunpack.c.l.b16 %v952
        %v3001 = vunpack.c.l.b16 %v953
        %v3002 = vunpack.c.l.b16 %v954
        %v3003 = vunpack.c.l.b16 %v955
        %v3004 = vunpack.c.l.b16 %v956
        %v3005 = vunpack.c.l.b16 %v957
        %v3006 = vunpack.c.l.b16 %v958
        %v3007 = vunpack.c.l.b16 %v959
        %v3008 = vunpack.c.l.b16 %v960
        %v3009 = vunpack.c.l.b16 %v961
        %v3010 = vunpack.c.l.b16 %v962
        %v3011 = vunpack.c.l.b16 %v963
        %v3012 = vunpack.c.l.b16 %v964
        %v3013 = vunpack.c.l.b16 %v965
        %v3014 = vunpack.c.l.b16 %v966
        %v3015 = vunpack.c.l.b16 %v967
        %v3016 = vunpack.c.l.b16 %v968
        %v3017 = vunpack.c.l.b16 %v969
        %v3018 = vunpack.c.l.b16 %v970
        %v3019 = vunpack.c.l.b16 %v971
        %v3020 = vunpack.c.l.b16 %v972
        %v3021 = vunpack.c.l.b16 %v973
        %v3022 = vunpack.c.l.b16 %v974
        %v3023 = vunpack.c.l.b16 %v975
        %v3024 = vunpack.c.l.b16 %v976
        %v3025 = vunpack.c.l.b16 %v977
        %v3026 = vunpack.c.l.b16 %v978
        %v3027 = vunpack.c.l.b16 %v979
        %v3028 = vunpack.c.l.b16 %v980
        %v3029 = vunpack.c.l.b16 %v981
        %v3030 = vunpack.c.l.b16 %v982
        %v3031 = vunpack.c.l.b16 %v983
        %v3032 = vunpack.c.l.b16 %v984
        %v3033 = vunpack.c.l.b16 %v985
        %v3034 = vunpack.c.l.b16 %v986
        %v3035 = vunpack.c.l.b16 %v987
        %v3036 = vunpack.c.l.b16 %v988
        %v3037 = vunpack.c.l.b16 %v989
        %v3038 = vunpack.c.l.b16 %v990
        %v3039 = vunpack.c.l.b16 %v991
        %v3040 = vunpack.c.l.b16 %v992
        %v3041 = vunpack.c.l.b16 %v993
        %v3042 = vunpack.c.l.b16 %v994
        %v3043 = vunpack.c.l.b16 %v995
        %v3044 = vunpack.c.l.b16 %v996
        %v3045 = vunpack.c.l.b16 %v997
        %v3046 = vunpack.c.l.b16 %v998
        %v3047 = vunpack.c.l.b16 %v999
        %v3048 = vunpack.c.l.b16 %v1000
        %v3049 = vunpack.c.l.b16 %v1001
        %v3050 = vunpack.c.l.b16 %v1002
        %v3051 = vunpack.c.l.b16 %v1003
        %v3052 = vunpack.c.l.b16 %v1004
        %v3053 = vunpack.c.l.b16 %v1005
        %v3054 = vunpack.c.l.b16 %v1006
        %v3055 = vunpack.c.l.b16 %v1007
        %v3056 = vunpack.c.l.b16 %v1008
        %v3057 = vunpack.c.l.b16 %v1009
        %v3058 = vunpack.c.l.b16 %v1010
        %v3059 = vunpack.c.l.b16 %v1011
        %v3060 = vunpack.c.l.b16 %v1012
        %v3061 = vunpack.c.l.b16 %v1013
        %v3062 = vunpack.c.l.b16 %v1014
        %v3063 = vunpack.c.l.b16 %v1015
        %v3064 = vunpack.c.l.b16 %v1016
        %v3065 = vunpack.c.l.b16 %v1017
        %v3066 = vunpack.c.l.b16 %v1018
        %v3067 = vunpack.c.l.b16 %v1019
        %v3068 = vunpack.c.l.b16 %v1020
        %v3069 = vunpack.c.l.b16 %v1021
        %v3070 = vunpack.c.l.b16 %v1022
        %v3071 = vunpack.c.l.b16 %v1023
        %v3072 = vunpack.c.l.b16 %v1024
        %v3073 = vunpack.c.l.b16 %v1025
        %v3074 = vunpack.c.l.b16 %v1026
        %v3075 = vunpack.c.l.b16 %v1027
        %v3076 = vunpack.c.l.b16 %v1028
        %v3077 = vunpack.c.l.b16 %v1029
        %v3078 = vunpack.c.l.b16 %v1030
        %v3079 = vunpack.c.l.b16 %v1031
        %v3080 = vunpack.c.l.b16 %v1032
        %v3081 = vunpack.c.l.b16 %v1033
        %v3082 = vunpack.c.l.b16 %v1034
        %v3083 = vunpack.c.l.b16 %v1035
        %v3084 = vunpack.c.l.b16 %v1036
        %v3085 = vunpack.c.l.b16 %v1037
        %v3086 = vunpack.c.l.b16 %v1038
        %v3087 = vunpack.c.l.b16 %v1039
        %v3088 = vunpack.c.l.b16 %v1040
        %v3089 = vunpack.c.l.b16 %v1041
        %v3090 = vunpack.c.l.b16 %v1042
        %v3091 = vunpack.c.l.b16 %v1043
        %v3092 = vunpack.c.l.b16 %v1044
        %v3093 = vunpack.c.l.b16 %v1045
        %v3094 = vunpack.c.l.b16 %v1046
        %v3095 = vunpack.c.l.b16 %v1047
        %v3096 = vunpack.c.l.b16 %v1048
        %v3097 = vunpack.c.l.b16 %v1049
        %v3098 = vunpack.c.l.b16 %v1050
        %v3099 = vunpack.c.l.b16 %v1051
        %v3100 = vunpack.c.l.b16 %v1052
        %v3101 = vunpack.c.l.b16 %v1053
        %v3102 = vunpack.c.l.b16 %v1054
        %v3103 = vunpack.c.l.b16 %v1055
        %v3104 = vunpack.c.l.b16 %v1056
        %v3105 = vunpack.c.l.b16 %v1057
        %v3106 = vunpack.c.l.b16 %v1058
        %v3107 = vunpack.c.l.b16 %v1059
        %v3108 = vunpack.c.l.b16 %v1060
        %v3109 = vunpack.c.l.b16 %v1061
        %v3110 = vunpack.c.l.b16 %v1062
        %v3111 = vunpack.c.l.b16 %v1063
        %v3112 = vunpack.c.l.b16 %v1064
        %v3113 = vunpack.c.l.b16 %v1065
        %v3114 = vunpack.c.l.b16 %v1066
        %v3115 = vunpack.c.l.b16 %v1067
        %v3116 = vunpack.c.l.b16 %v1068
        %v3117 = vunpack.c.l.b16 %v1069
        %v3118 = vunpack.c.l.b16 %v1070
        %v3119 = vunpack.c.l.b16 %v1071
        %v3120 = vunpack.c.l.b16 %v1072
        %v3121 = vunpack.c.l.b16 %v1073
        %v3122 = vunpack.c.l.b16 %v1074
        %v3123 = vunpack.c.l.b16 %v1075
        %v3124 = vunpack.c.l.b16 %v1076
        %v3125 = vunpack.c.l.b16 %v1077
        %v3126 = vunpack.c.l.b16 %v1078
        %v3127 = vunpack.c.l.b16 %v1079
        %v3128 = vunpack.c.l.b16 %v1080
        %v3129 = vunpack.c.l.b16 %v1081
        %v3130 = vunpack.c.l.b16 %v1082
        %v3131 = vunpack.c.l.b16 %v1083
        %v3132 = vunpack.c.l.b16 %v1084
        %v3133 = vunpack.c.l.b16 %v1085
        %v3134 = vunpack.c.l.b16 %v1086
        %v3135 = vunpack.c.l.b16 %v1087
        %v3136 = vunpack.c.l.b16 %v1088
        %v3137 = vunpack.c.l.b16 %v1089
        %v3138 = vunpack.c.l.b16 %v1090
        %v3139 = vunpack.c.l.b16 %v1091
        %v3140 = vunpack.c.l.b16 %v1092
        %v3141 = vunpack.c.l.b16 %v1093
        %v3142 = vunpack.c.l.b16 %v1094
        %v3143 = vunpack.c.l.b16 %v1095
        %v3144 = vunpack.c.l.b16 %v1096
        %v3145 = vunpack.c.l.b16 %v1097
        %v3146 = vunpack.c.l.b16 %v1098
        %v3147 = vunpack.c.l.b16 %v1099
        %v3148 = vunpack.c.l.b16 %v1100
        %v3149 = vunpack.c.l.b16 %v1101
        %v3150 = vunpack.c.l.b16 %v1102
        %v3151 = vunpack.c.l.b16 %v1103
        %v3152 = vunpack.c.l.b16 %v1104
        %v3153 = vunpack.c.l.b16 %v1105
        %v3154 = vunpack.c.l.b16 %v1106
        %v3155 = vunpack.c.l.b16 %v1107
        %v3156 = vunpack.c.l.b16 %v1108
        %v3157 = vunpack.c.l.b16 %v1109
        %v3158 = vunpack.c.l.b16 %v1110
        %v3159 = vunpack.c.l.b16 %v1111
        %v3160 = vunpack.c.l.b16 %v1112
        %v3161 = vunpack.c.l.b16 %v1113
        %v3162 = vunpack.c.l.b16 %v1114
        %v3163 = vunpack.c.l.b16 %v1115
        %v3164 = vunpack.c.l.b16 %v1116
        %v3165 = vunpack.c.l.b16 %v1117
        %v3166 = vunpack.c.l.b16 %v1118
        %v3167 = vunpack.c.l.b16 %v1119
        %v3168 = vunpack.c.l.b16 %v1120
        %v3169 = vunpack.c.l.b16 %v1121
        %v3170 = vunpack.c.l.b16 %v1122
        %v3171 = vunpack.c.l.b16 %v1123
        %v3172 = vunpack.c.l.b16 %v1124
        %v3173 = vunpack.c.l.b16 %v1125
        %v3174 = vunpack.c.l.b16 %v1126
        %v3175 = vunpack.c.l.b16 %v1127
        %v3176 = vunpack.c.l.b16 %v1128
        %v3177 = vunpack.c.l.b16 %v1129
        %v3178 = vunpack.c.l.b16 %v1130
        %v3179 = vunpack.c.l.b16 %v1131
        %v3180 = vunpack.c.l.b16 %v1132
        %v3181 = vunpack.c.l.b16 %v1133
        %v3182 = vunpack.c.l.b16 %v1134
        %v3183 = vunpack.c.l.b16 %v1135
        %v3184 = vunpack.c.l.b16 %v1136
        %v3185 = vunpack.c.l.b16 %v1137
        %v3186 = vunpack.c.l.b16 %v1138
        %v3187 = vunpack.c.l.b16 %v1139
        %v3188 = vunpack.c.l.b16 %v1140
        %v3189 = vunpack.c.l.b16 %v1141
        %v3190 = vunpack.c.l.b16 %v1142
        %v3191 = vunpack.c.l.b16 %v1143
        %v3192 = vunpack.c.l.b16 %v1144
        %v3193 = vunpack.c.l.b16 %v1145
        %v3194 = vunpack.c.l.b16 %v1146
        %v3195 = vunpack.c.l.b16 %v1147
        %v3196 = vunpack.c.l.b16 %v1148
        %v3197 = vunpack.c.l.b16 %v1149
        %v3198 = vunpack.c.l.b16 %v1150
        %v3199 = vunpack.c.l.b16 %v1151
        %v3200 = vunpack.c.l.b16 %v1152
        %v3201 = vunpack.c.l.b16 %v1153
        %v3202 = vunpack.c.l.b16 %v1154
        %v3203 = vunpack.c.l.b16 %v1155
        %v3204 = vunpack.c.l.b16 %v1156
        %v3205 = vunpack.c.l.b16 %v1157
        %v3206 = vunpack.c.l.b16 %v1158
        %v3207 = vunpack.c.l.b16 %v1159
        %v3208 = vunpack.c.l.b16 %v1160
        %v3209 = vunpack.c.l.b16 %v1161
        %v3210 = vunpack.c.l.b16 %v1162
        %v3211 = vunpack.c.l.b16 %v1163
        %v3212 = vunpack.c.l.b16 %v1164
        %v3213 = vunpack.c.l.b16 %v1165
        %v3214 = vunpack.c.l.b16 %v1166
        %v3215 = vunpack.c.l.b16 %v1167
        %v3216 = vunpack.c.l.b16 %v1168
        %v3217 = vunpack.c.l.b16 %v1169
        %v3218 = vunpack.c.l.b16 %v1170
        %v3219 = vunpack.c.l.b16 %v1171
        %v3220 = vunpack.c.l.b16 %v1172
        %v3221 = vunpack.c.l.b16 %v1173
        %v3222 = vunpack.c.l.b16 %v1174
        %v3223 = vunpack.c.l.b16 %v1175
        %v3224 = vunpack.c.l.b16 %v1176
        %v3225 = vunpack.c.l.b16 %v1177
        %v3226 = vunpack.c.l.b16 %v1178
        %v3227 = vunpack.c.l.b16 %v1179
        %v3228 = vunpack.c.l.b16 %v1180
        %v3229 = vunpack.c.l.b16 %v1181
        %v3230 = vunpack.c.l.b16 %v1182
        %v3231 = vunpack.c.l.b16 %v1183
        %v3232 = vunpack.c.l.b16 %v1184
        %v3233 = vunpack.c.l.b16 %v1185
        %v3234 = vunpack.c.l.b16 %v1186
        %v3235 = vunpack.c.l.b16 %v1187
        %v3236 = vunpack.c.l.b16 %v1188
        %v3237 = vunpack.c.l.b16 %v1189
        %v3238 = vunpack.c.l.b16 %v1190
        %v3239 = vunpack.c.l.b16 %v1191
        %v3240 = vunpack.c.l.b16 %v1192
        %v3241 = vunpack.c.l.b16 %v1193
        %v3242 = vunpack.c.l.b16 %v1194
        %v3243 = vunpack.c.l.b16 %v1195
        %v3244 = vunpack.c.l.b16 %v1196
        %v3245 = vunpack.c.l.b16 %v1197
        %v3246 = vunpack.c.l.b16 %v1198
        %v3247 = vunpack.c.l.b16 %v1199
        %v3248 = vunpack.c.l.b16 %v1200
        %v3249 = vunpack.c.l.b16 %v1201
        %v3250 = vunpack.c.l.b16 %v1202
        %v3251 = vunpack.c.l.b16 %v1203
        %v3252 = vunpack.c.l.b16 %v1204
        %v3253 = vunpack.c.l.b16 %v1205
        %v3254 = vunpack.c.l.b16 %v1206
        %v3255 = vunpack.c.l.b16 %v1207
        %v3256 = vunpack.c.l.b16 %v1208
        %v3257 = vunpack.c.l.b16 %v1209
        %v3258 = vunpack.c.l.b16 %v1210
        %v3259 = vunpack.c.l.b16 %v1211
        %v3260 = vunpack.c.l.b16 %v1212
        %v3261 = vunpack.c.l.b16 %v1213
        %v3262 = vunpack.c.l.b16 %v1214
        %v3263 = vunpack.c.l.b16 %v1215
        %v3264 = vunpack.c.l.b16 %v1216
        %v3265 = vunpack.c.l.b16 %v1217
        %v3266 = vunpack.c.l.b16 %v1218
        %v3267 = vunpack.c.l.b16 %v1219
        %v3268 = vunpack.c.l.b16 %v1220
        %v3269 = vunpack.c.l.b16 %v1221
        %v3270 = vunpack.c.l.b16 %v1222
        %v3271 = vunpack.c.l.b16 %v1223
        %v3272 = vunpack.c.l.b16 %v1224
        %v3273 = vunpack.c.l.b16 %v1225
        %v3274 = vunpack.c.l.b16 %v1226
        %v3275 = vunpack.c.l.b16 %v1227
        %v3276 = vunpack.c.l.b16 %v1228
        %v3277 = vunpack.c.l.b16 %v1229
        %v3278 = vunpack.c.l.b16 %v1230
        %v3279 = vunpack.c.l.b16 %v1231
        %v3280 = vunpack.c.l.b16 %v1232
        %v3281 = vunpack.c.l.b16 %v1233
        %v3282 = vunpack.c.l.b16 %v1234
        %v3283 = vunpack.c.l.b16 %v1235
        %v3284 = vunpack.c.l.b16 %v1236
        %v3285 = vunpack.c.l.b16 %v1237
        %v3286 = vunpack.c.l.b16 %v1238
        %v3287 = vunpack.c.l.b16 %v1239
        %v3288 = vunpack.c.l.b16 %v1240
        %v3289 = vunpack.c.l.b16 %v1241
        %v3290 = vunpack.c.l.b16 %v1242
        %v3291 = vunpack.c.l.b16 %v1243
        %v3292 = vunpack.c.l.b16 %v1244
        %v3293 = vunpack.c.l.b16 %v1245
        %v3294 = vunpack.c.l.b16 %v1246
        %v3295 = vunpack.c.l.b16 %v1247
        %v3296 = vunpack.c.l.b16 %v1248
        %v3297 = vunpack.c.l.b16 %v1249
        %v3298 = vunpack.c.l.b16 %v1250
        %v3299 = vunpack.c.l.b16 %v1251
        %v3300 = vunpack.c.l.b16 %v1252
        %v3301 = vunpack.c.l.b16 %v1253
        %v3302 = vunpack.c.l.b16 %v1254
        %v3303 = vunpack.c.l.b16 %v1255
        %v3304 = vunpack.c.l.b16 %v1256
        %v3305 = vunpack.c.l.b16 %v1257
        %v3306 = vunpack.c.l.b16 %v1258
        %v3307 = vunpack.c.l.b16 %v1259
        %v3308 = vunpack.c.l.b16 %v1260
        %v3309 = vunpack.c.l.b16 %v1261
        %v3310 = vunpack.c.l.b16 %v1262
        %v3311 = vunpack.c.l.b16 %v1263
        %v3312 = vunpack.c.l.b16 %v1264
        %v3313 = vunpack.c.l.b16 %v1265
        %v3314 = vunpack.c.l.b16 %v1266
        %v3315 = vunpack.c.l.b16 %v1267
        %v3316 = vunpack.c.l.b16 %v1268
        %v3317 = vunpack.c.l.b16 %v1269
        %v3318 = vunpack.c.l.b16 %v1270
        %v3319 = vunpack.c.l.b16 %v1271
        %v3320 = vunpack.c.l.b16 %v1272
        %v3321 = vunpack.c.l.b16 %v1273
        %v3322 = vunpack.c.l.b16 %v1274
        %v3323 = vunpack.c.l.b16 %v1275
        %v3324 = vunpack.c.l.b16 %v1276
        %v3325 = vunpack.c.l.b16 %v1277
        %v3326 = vunpack.c.l.b16 %v1278
        %v3327 = vunpack.c.l.b16 %v1279
        %v3328 = vunpack.c.l.b16 %v1280
        %v3329 = vunpack.c.l.b16 %v1281
        %v3330 = vunpack.c.l.b16 %v1282
        %v3331 = vunpack.c.l.b16 %v1283
        %v3332 = vunpack.c.l.b16 %v1284
        %v3333 = vunpack.c.l.b16 %v1285
        %v3334 = vunpack.c.l.b16 %v1286
        %v3335 = vunpack.c.l.b16 %v1287
        %v3336 = vunpack.c.l.b16 %v1288
        %v3337 = vunpack.c.l.b16 %v1289
        %v3338 = vunpack.c.l.b16 %v1290
        %v3339 = vunpack.c.l.b16 %v1291
        %v3340 = vunpack.c.l.b16 %v1292
        %v3341 = vunpack.c.l.b16 %v1293
        %v3342 = vunpack.c.l.b16 %v1294
        %v3343 = vunpack.c.l.b16 %v1295
        %v3344 = vunpack.c.l.b16 %v1296
        %v3345 = vunpack.c.l.b16 %v1297
        %v3346 = vunpack.c.l.b16 %v1298
        %v3347 = vunpack.c.l.b16 %v1299
        %v3348 = vunpack.c.l.b16 %v1300
        %v3349 = vunpack.c.l.b16 %v1301
        %v3350 = vunpack.c.l.b16 %v1302
        %v3351 = vunpack.c.l.b16 %v1303
        %v3352 = vunpack.c.l.b16 %v1304
        %v3353 = vunpack.c.l.b16 %v1305
        %v3354 = vunpack.c.l.b16 %v1306
        %v3355 = vunpack.c.l.b16 %v1307
        %v3356 = vunpack.c.l.b16 %v1308
        %v3357 = vunpack.c.l.b16 %v1309
        %v3358 = vunpack.c.l.b16 %v1310
        %v3359 = vunpack.c.l.b16 %v1311
        %v3360 = vunpack.c.l.b16 %v1312
        %v3361 = vunpack.c.l.b16 %v1313
        %v3362 = vunpack.c.l.b16 %v1314
        %v3363 = vunpack.c.l.b16 %v1315
        %v3364 = vunpack.c.l.b16 %v1316
        %v3365 = vunpack.c.l.b16 %v1317
        %v3366 = vunpack.c.l.b16 %v1318
        %v3367 = vunpack.c.l.b16 %v1319
        %v3368 = vunpack.c.l.b16 %v1320
        %v3369 = vunpack.c.l.b16 %v1321
        %v3370 = vunpack.c.l.b16 %v1322
        %v3371 = vunpack.c.l.b16 %v1323
        %v3372 = vunpack.c.l.b16 %v1324
        %v3373 = vunpack.c.l.b16 %v1325
        %v3374 = vunpack.c.l.b16 %v1326
        %v3375 = vunpack.c.l.b16 %v1327
        %v3376 = vunpack.c.l.b16 %v1328
        %v3377 = vunpack.c.l.b16 %v1329
        %v3378 = vunpack.c.l.b16 %v1330
        %v3379 = vunpack.c.l.b16 %v1331
        %v3380 = vunpack.c.l.b16 %v1332
        %v3381 = vunpack.c.l.b16 %v1333
        %v3382 = vunpack.c.l.b16 %v1334
        %v3383 = vunpack.c.l.b16 %v1335
        %v3384 = vunpack.c.l.b16 %v1336
        %v3385 = vunpack.c.l.b16 %v1337
        %v3386 = vunpack.c.l.b16 %v1338
        %v3387 = vunpack.c.l.b16 %v1339
        %v3388 = vunpack.c.l.b16 %v1340
        %v3389 = vunpack.c.l.b16 %v1341
        %v3390 = vunpack.c.l.b16 %v1342
        %v3391 = vunpack.c.l.b16 %v1343
        %v3392 = vunpack.c.l.b16 %v1344
        %v3393 = vunpack.c.l.b16 %v1345
        %v3394 = vunpack.c.l.b16 %v1346
        %v3395 = vunpack.c.l.b16 %v1347
        %v3396 = vunpack.c.l.b16 %v1348
        %v3397 = vunpack.c.l.b16 %v1349
        %v3398 = vunpack.c.l.b16 %v1350
        %v3399 = vunpack.c.l.b16 %v1351
        %v3400 = vunpack.c.l.b16 %v1352
        %v3401 = vunpack.c.l.b16 %v1353
        %v3402 = vunpack.c.l.b16 %v1354
        %v3403 = vunpack.c.l.b16 %v1355
        %v3404 = vunpack.c.l.b16 %v1356
        %v3405 = vunpack.c.l.b16 %v1357
        %v3406 = vunpack.c.l.b16 %v1358
        %v3407 = vunpack.c.l.b16 %v1359
        %v3408 = vunpack.c.l.b16 %v1360
        %v3409 = vunpack.c.l.b16 %v1361
        %v3410 = vunpack.c.l.b16 %v1362
        %v3411 = vunpack.c.l.b16 %v1363
        %v3412 = vunpack.c.l.b16 %v1364
        %v3413 = vunpack.c.l.b16 %v1365
        %v3414 = vunpack.c.l.b16 %v1366
        %v3415 = vunpack.c.l.b16 %v1367
        %v3416 = vunpack.c.l.b16 %v1368
        %v3417 = vunpack.c.l.b16 %v1369
        %v3418 = vunpack.c.l.b16 %v1370
        %v3419 = vunpack.c.l.b16 %v1371
        %v3420 = vunpack.c.l.b16 %v1372
        %v3421 = vunpack.c.l.b16 %v1373
        %v3422 = vunpack.c.l.b16 %v1374
        %v3423 = vunpack.c.l.b16 %v1375
        %v3424 = vunpack.c.l.b16 %v1376
        %v3425 = vunpack.c.l.b16 %v1377
        %v3426 = vunpack.c.l.b16 %v1378
        %v3427 = vunpack.c.l.b16 %v1379
        %v3428 = vunpack.c.l.b16 %v1380
        %v3429 = vunpack.c.l.b16 %v1381
        %v3430 = vunpack.c.l.b16 %v1382
        %v3431 = vunpack.c.l.b16 %v1383
        %v3432 = vunpack.c.l.b16 %v1384
        %v3433 = vunpack.c.l.b16 %v1385
        %v3434 = vunpack.c.l.b16 %v1386
        %v3435 = vunpack.c.l.b16 %v1387
        %v3436 = vunpack.c.l.b16 %v1388
        %v3437 = vunpack.c.l.b16 %v1389
        %v3438 = vunpack.c.l.b16 %v1390
        %v3439 = vunpack.c.l.b16 %v1391
        %v3440 = vunpack.c.l.b16 %v1392
        %v3441 = vunpack.c.l.b16 %v1393
        %v3442 = vunpack.c.l.b16 %v1394
        %v3443 = vunpack.c.l.b16 %v1395
        %v3444 = vunpack.c.l.b16 %v1396
        %v3445 = vunpack.c.l.b16 %v1397
        %v3446 = vunpack.c.l.b16 %v1398
        %v3447 = vunpack.c.l.b16 %v1399
        %v3448 = vunpack.c.l.b16 %v1400
        %v3449 = vunpack.c.l.b16 %v1401
        %v3450 = vunpack.c.l.b16 %v1402
        %v3451 = vunpack.c.l.b16 %v1403
        %v3452 = vunpack.c.l.b16 %v1404
        %v3453 = vunpack.c.l.b16 %v1405
        %v3454 = vunpack.c.l.b16 %v1406
        %v3455 = vunpack.c.l.b16 %v1407
        %v3456 = vunpack.c.l.b16 %v1408
        %v3457 = vunpack.c.l.b16 %v1409
        %v3458 = vunpack.c.l.b16 %v1410
        %v3459 = vunpack.c.l.b16 %v1411
        %v3460 = vunpack.c.l.b16 %v1412
        %v3461 = vunpack.c.l.b16 %v1413
        %v3462 = vunpack.c.l.b16 %v1414
        %v3463 = vunpack.c.l.b16 %v1415
        %v3464 = vunpack.c.l.b16 %v1416
        %v3465 = vunpack.c.l.b16 %v1417
        %v3466 = vunpack.c.l.b16 %v1418
        %v3467 = vunpack.c.l.b16 %v1419
        %v3468 = vunpack.c.l.b16 %v1420
        %v3469 = vunpack.c.l.b16 %v1421
        %v3470 = vunpack.c.l.b16 %v1422
        %v3471 = vunpack.c.l.b16 %v1423
        %v3472 = vunpack.c.l.b16 %v1424
        %v3473 = vunpack.c.l.b16 %v1425
        %v3474 = vunpack.c.l.b16 %v1426
        %v3475 = vunpack.c.l.b16 %v1427
        %v3476 = vunpack.c.l.b16 %v1428
        %v3477 = vunpack.c.l.b16 %v1429
        %v3478 = vunpack.c.l.b16 %v1430
        %v3479 = vunpack.c.l.b16 %v1431
        %v3480 = vunpack.c.l.b16 %v1432
        %v3481 = vunpack.c.l.b16 %v1433
        %v3482 = vunpack.c.l.b16 %v1434
        %v3483 = vunpack.c.l.b16 %v1435
        %v3484 = vunpack.c.l.b16 %v1436
        %v3485 = vunpack.c.l.b16 %v1437
        %v3486 = vunpack.c.l.b16 %v1438
        %v3487 = vunpack.c.l.b16 %v1439
        %v3488 = vunpack.c.l.b16 %v1440
        %v3489 = vunpack.c.l.b16 %v1441
        %v3490 = vunpack.c.l.b16 %v1442
        %v3491 = vunpack.c.l.b16 %v1443
        %v3492 = vunpack.c.l.b16 %v1444
        %v3493 = vunpack.c.l.b16 %v1445
        %v3494 = vunpack.c.l.b16 %v1446
        %v3495 = vunpack.c.l.b16 %v1447
        %v3496 = vunpack.c.l.b16 %v1448
        %v3497 = vunpack.c.l.b16 %v1449
        %v3498 = vunpack.c.l.b16 %v1450
        %v3499 = vunpack.c.l.b16 %v1451
        %v3500 = vunpack.c.l.b16 %v1452
        %v3501 = vunpack.c.l.b16 %v1453
        %v3502 = vunpack.c.l.b16 %v1454
        %v3503 = vunpack.c.l.b16 %v1455
        %v3504 = vunpack.c.l.b16 %v1456
        %v3505 = vunpack.c.l.b16 %v1457
        %v3506 = vunpack.c.l.b16 %v1458
        %v3507 = vunpack.c.l.b16 %v1459
        %v3508 = vunpack.c.l.b16 %v1460
        %v3509 = vunpack.c.l.b16 %v1461
        %v3510 = vunpack.c.l.b16 %v1462
        %v3511 = vunpack.c.l.b16 %v1463
        %v3512 = vunpack.c.l.b16 %v1464
        %v3513 = vunpack.c.l.b16 %v1465
        %v3514 = vunpack.c.l.b16 %v1466
        %v3515 = vunpack.c.l.b16 %v1467
        %v3516 = vunpack.c.l.b16 %v1468
        %v3517 = vunpack.c.l.b16 %v1469
        %v3518 = vunpack.c.l.b16 %v1470
        %v3519 = vunpack.c.l.b16 %v1471
        %v3520 = vunpack.c.l.b16 %v1472
        %v3521 = vunpack.c.l.b16 %v1473
        %v3522 = vunpack.c.l.b16 %v1474
        %v3523 = vunpack.c.l.b16 %v1475
        %v3524 = vunpack.c.l.b16 %v1476
        %v3525 = vunpack.c.l.b16 %v1477
        %v3526 = vunpack.c.l.b16 %v1478
        %v3527 = vunpack.c.l.b16 %v1479
        %v3528 = vunpack.c.l.b16 %v1480
        %v3529 = vunpack.c.l.b16 %v1481
        %v3530 = vunpack.c.l.b16 %v1482
        %v3531 = vunpack.c.l.b16 %v1483
        %v3532 = vunpack.c.l.b16 %v1484
        %v3533 = vunpack.c.l.b16 %v1485
        %v3534 = vunpack.c.l.b16 %v1486
        %v3535 = vunpack.c.l.b16 %v1487
        %v3536 = vunpack.c.l.b16 %v1488
        %v3537 = vunpack.c.l.b16 %v1489
        %v3538 = vunpack.c.l.b16 %v1490
        %v3539 = vunpack.c.l.b16 %v1491
        %v3540 = vunpack.c.l.b16 %v1492
        %v3541 = vunpack.c.l.b16 %v1493
        %v3542 = vunpack.c.l.b16 %v1494
        %v3543 = vunpack.c.l.b16 %v1495
        %v3544 = vunpack.c.l.b16 %v1496
        %v3545 = vunpack.c.l.b16 %v1497
        %v3546 = vunpack.c.l.b16 %v1498
        %v3547 = vunpack.c.l.b16 %v1499
        %v3548 = vunpack.c.l.b16 %v1500
        %v3549 = vunpack.c.l.b16 %v1501
        %v3550 = vunpack.c.l.b16 %v1502
        %v3551 = vunpack.c.l.b16 %v1503
        %v3552 = vunpack.c.l.b16 %v1504
        %v3553 = vunpack.c.l.b16 %v1505
        %v3554 = vunpack.c.l.b16 %v1506
        %v3555 = vunpack.c.l.b16 %v1507
        %v3556 = vunpack.c.l.b16 %v1508
        %v3557 = vunpack.c.l.b16 %v1509
        %v3558 = vunpack.c.l.b16 %v1510
        %v3559 = vunpack.c.l.b16 %v1511
        %v3560 = vunpack.c.l.b16 %v1512
        %v3561 = vunpack.c.l.b16 %v1513
        %v3562 = vunpack.c.l.b16 %v1514
        %v3563 = vunpack.c.l.b16 %v1515
        %v3564 = vunpack.c.l.b16 %v1516
        %v3565 = vunpack.c.l.b16 %v1517
        %v3566 = vunpack.c.l.b16 %v1518
        %v3567 = vunpack.c.l.b16 %v1519
        %v3568 = vunpack.c.l.b16 %v1520
        %v3569 = vunpack.c.l.b16 %v1521
        %v3570 = vunpack.c.l.b16 %v1522
        %v3571 = vunpack.c.l.b16 %v1523
        %v3572 = vunpack.c.l.b16 %v1524
        %v3573 = vunpack.c.l.b16 %v1525
        %v3574 = vunpack.c.l.b16 %v1526
        %v3575 = vunpack.c.l.b16 %v1527
        %v3576 = vunpack.c.l.b16 %v1528
        %v3577 = vunpack.c.l.b16 %v1529
        %v3578 = vunpack.c.l.b16 %v1530
        %v3579 = vunpack.c.l.b16 %v1531
        %v3580 = vunpack.c.l.b16 %v1532
        %v3581 = vunpack.c.l.b16 %v1533
        %v3582 = vunpack.c.l.b16 %v1534
        %v3583 = vunpack.c.l.b16 %v1535
        %v3584 = vunpack.c.l.b16 %v1536
        %v3585 = vunpack.c.l.b16 %v1537
        %v3586 = vunpack.c.l.b16 %v1538
        %v3587 = vunpack.c.l.b16 %v1539
        %v3588 = vunpack.c.l.b16 %v1540
        %v3589 = vunpack.c.l.b16 %v1541
        %v3590 = vunpack.c.l.b16 %v1542
        %v3591 = vunpack.c.l.b16 %v1543
        %v3592 = vunpack.c.l.b16 %v1544
        %v3593 = vunpack.c.l.b16 %v1545
        %v3594 = vunpack.c.l.b16 %v1546
        %v3595 = vunpack.c.l.b16 %v1547
        %v3596 = vunpack.c.l.b16 %v1548
        %v3597 = vunpack.c.l.b16 %v1549
        %v3598 = vunpack.c.l.b16 %v1550
        %v3599 = vunpack.c.l.b16 %v1551
        %v3600 = vunpack.c.l.b16 %v1552
        %v3601 = vunpack.c.l.b16 %v1553
        %v3602 = vunpack.c.l.b16 %v1554
        %v3603 = vunpack.c.l.b16 %v1555
        %v3604 = vunpack.c.l.b16 %v1556
        %v3605 = vunpack.c.l.b16 %v1557
        %v3606 = vunpack.c.l.b16 %v1558
        %v3607 = vunpack.c.l.b16 %v1559
        %v3608 = vunpack.c.l.b16 %v1560
        %v3609 = vunpack.c.l.b16 %v1561
        %v3610 = vunpack.c.l.b16 %v1562
        %v3611 = vunpack.c.l.b16 %v1563
        %v3612 = vunpack.c.l.b16 %v1564
        %v3613 = vunpack.c.l.b16 %v1565
        %v3614 = vunpack.c.l.b16 %v1566
        %v3615 = vunpack.c.l.b16 %v1567
        %v3616 = vunpack.c.l.b16 %v1568
        %v3617 = vunpack.c.l.b16 %v1569
        %v3618 = vunpack.c.l.b16 %v1570
        %v3619 = vunpack.c.l.b16 %v1571
        %v3620 = vunpack.c.l.b16 %v1572
        %v3621 = vunpack.c.l.b16 %v1573
        %v3622 = vunpack.c.l.b16 %v1574
        %v3623 = vunpack.c.l.b16 %v1575
        %v3624 = vunpack.c.l.b16 %v1576
        %v3625 = vunpack.c.l.b16 %v1577
        %v3626 = vunpack.c.l.b16 %v1578
        %v3627 = vunpack.c.l.b16 %v1579
        %v3628 = vunpack.c.l.b16 %v1580
        %v3629 = vunpack.c.l.b16 %v1581
        %v3630 = vunpack.c.l.b16 %v1582
        %v3631 = vunpack.c.l.b16 %v1583
        %v3632 = vunpack.c.l.b16 %v1584
        %v3633 = vunpack.c.l.b16 %v1585
        %v3634 = vunpack.c.l.b16 %v1586
        %v3635 = vunpack.c.l.b16 %v1587
        %v3636 = vunpack.c.l.b16 %v1588
        %v3637 = vunpack.c.l.b16 %v1589
        %v3638 = vunpack.c.l.b16 %v1590
        %v3639 = vunpack.c.l.b16 %v1591
        %v3640 = vunpack.c.l.b16 %v1592
        %v3641 = vunpack.c.l.b16 %v1593
        %v3642 = vunpack.c.l.b16 %v1594
        %v3643 = vunpack.c.l.b16 %v1595
        %v3644 = vunpack.c.l.b16 %v1596
        %v3645 = vunpack.c.l.b16 %v1597
        %v3646 = vunpack.c.l.b16 %v1598
        %v3647 = vunpack.c.l.b16 %v1599
        %v3648 = vunpack.c.l.b16 %v1600
        %v3649 = vunpack.c.l.b16 %v1601
        %v3650 = vunpack.c.l.b16 %v1602
        %v3651 = vunpack.c.l.b16 %v1603
        %v3652 = vunpack.c.l.b16 %v1604
        %v3653 = vunpack.c.l.b16 %v1605
        %v3654 = vunpack.c.l.b16 %v1606
        %v3655 = vunpack.c.l.b16 %v1607
        %v3656 = vunpack.c.l.b16 %v1608
        %v3657 = vunpack.c.l.b16 %v1609
        %v3658 = vunpack.c.l.b16 %v1610
        %v3659 = vunpack.c.l.b16 %v1611
        %v3660 = vunpack.c.l.b16 %v1612
        %v3661 = vunpack.c.l.b16 %v1613
        %v3662 = vunpack.c.l.b16 %v1614
        %v3663 = vunpack.c.l.b16 %v1615
        %v3664 = vunpack.c.l.b16 %v1616
        %v3665 = vunpack.c.l.b16 %v1617
        %v3666 = vunpack.c.l.b16 %v1618
        %v3667 = vunpack.c.l.b16 %v1619
        %v3668 = vunpack.c.l.b16 %v1620
        %v3669 = vunpack.c.l.b16 %v1621
        %v3670 = vunpack.c.l.b16 %v1622
        %v3671 = vunpack.c.l.b16 %v1623
        %v3672 = vunpack.c.l.b16 %v1624
        %v3673 = vunpack.c.l.b16 %v1625
        %v3674 = vunpack.c.l.b16 %v1626
        %v3675 = vunpack.c.l.b16 %v1627
        %v3676 = vunpack.c.l.b16 %v1628
        %v3677 = vunpack.c.l.b16 %v1629
        %v3678 = vunpack.c.l.b16 %v1630
        %v3679 = vunpack.c.l.b16 %v1631
        %v3680 = vunpack.c.l.b16 %v1632
        %v3681 = vunpack.c.l.b16 %v1633
        %v3682 = vunpack.c.l.b16 %v1634
        %v3683 = vunpack.c.l.b16 %v1635
        %v3684 = vunpack.c.l.b16 %v1636
        %v3685 = vunpack.c.l.b16 %v1637
        %v3686 = vunpack.c.l.b16 %v1638
        %v3687 = vunpack.c.l.b16 %v1639
        %v3688 = vunpack.c.l.b16 %v1640
        %v3689 = vunpack.c.l.b16 %v1641
        %v3690 = vunpack.c.l.b16 %v1642
        %v3691 = vunpack.c.l.b16 %v1643
        %v3692 = vunpack.c.l.b16 %v1644
        %v3693 = vunpack.c.l.b16 %v1645
        %v3694 = vunpack.c.l.b16 %v1646
        %v3695 = vunpack.c.l.b16 %v1647
        %v3696 = vunpack.c.l.b16 %v1648
        %v3697 = vunpack.c.l.b16 %v1649
        %v3698 = vunpack.c.l.b16 %v1650
        %v3699 = vunpack.c.l.b16 %v1651
        %v3700 = vunpack.c.l.b16 %v1652
        %v3701 = vunpack.c.l.b16 %v1653
        %v3702 = vunpack.c.l.b16 %v1654
        %v3703 = vunpack.c.l.b16 %v1655
        %v3704 = vunpack.c.l.b16 %v1656
        %v3705 = vunpack.c.l.b16 %v1657
        %v3706 = vunpack.c.l.b16 %v1658
        %v3707 = vunpack.c.l.b16 %v1659
        %v3708 = vunpack.c.l.b16 %v1660
        %v3709 = vunpack.c.l.b16 %v1661
        %v3710 = vunpack.c.l.b16 %v1662
        %v3711 = vunpack.c.l.b16 %v1663
        %v3712 = vunpack.c.l.b16 %v1664
        %v3713 = vunpack.c.l.b16 %v1665
        %v3714 = vunpack.c.l.b16 %v1666
        %v3715 = vunpack.c.l.b16 %v1667
        %v3716 = vunpack.c.l.b16 %v1668
        %v3717 = vunpack.c.l.b16 %v1669
        %v3718 = vunpack.c.l.b16 %v1670
        %v3719 = vunpack.c.l.b16 %v1671
        %v3720 = vunpack.c.l.b16 %v1672
        %v3721 = vunpack.c.l.b16 %v1673
        %v3722 = vunpack.c.l.b16 %v1674
        %v3723 = vunpack.c.l.b16 %v1675
        %v3724 = vunpack.c.l.b16 %v1676
        %v3725 = vunpack.c.l.b16 %v1677
        %v3726 = vunpack.c.l.b16 %v1678
        %v3727 = vunpack.c.l.b16 %v1679
        %v3728 = vunpack.c.l.b16 %v1680
        %v3729 = vunpack.c.l.b16 %v1681
        %v3730 = vunpack.c.l.b16 %v1682
        %v3731 = vunpack.c.l.b16 %v1683
        %v3732 = vunpack.c.l.b16 %v1684
        %v3733 = vunpack.c.l.b16 %v1685
        %v3734 = vunpack.c.l.b16 %v1686
        %v3735 = vunpack.c.l.b16 %v1687
        %v3736 = vunpack.c.l.b16 %v1688
        %v3737 = vunpack.c.l.b16 %v1689
        %v3738 = vunpack.c.l.b16 %v1690
        %v3739 = vunpack.c.l.b16 %v1691
        %v3740 = vunpack.c.l.b16 %v1692
        %v3741 = vunpack.c.l.b16 %v1693
        %v3742 = vunpack.c.l.b16 %v1694
        %v3743 = vunpack.c.l.b16 %v1695
        %v3744 = vunpack.c.l.b16 %v1696
        %v3745 = vunpack.c.l.b16 %v1697
        %v3746 = vunpack.c.l.b16 %v1698
        %v3747 = vunpack.c.l.b16 %v1699
        %v3748 = vunpack.c.l.b16 %v1700
        %v3749 = vunpack.c.l.b16 %v1701
        %v3750 = vunpack.c.l.b16 %v1702
        %v3751 = vunpack.c.l.b16 %v1703
        %v3752 = vunpack.c.l.b16 %v1704
        %v3753 = vunpack.c.l.b16 %v1705
        %v3754 = vunpack.c.l.b16 %v1706
        %v3755 = vunpack.c.l.b16 %v1707
        %v3756 = vunpack.c.l.b16 %v1708
        %v3757 = vunpack.c.l.b16 %v1709
        %v3758 = vunpack.c.l.b16 %v1710
        %v3759 = vunpack.c.l.b16 %v1711
        %v3760 = vunpack.c.l.b16 %v1712
        %v3761 = vunpack.c.l.b16 %v1713
        %v3762 = vunpack.c.l.b16 %v1714
        %v3763 = vunpack.c.l.b16 %v1715
        %v3764 = vunpack.c.l.b16 %v1716
        %v3765 = vunpack.c.l.b16 %v1717
        %v3766 = vunpack.c.l.b16 %v1718
        %v3767 = vunpack.c.l.b16 %v1719
        %v3768 = vunpack.c.l.b16 %v1720
        %v3769 = vunpack.c.l.b16 %v1721
        %v3770 = vunpack.c.l.b16 %v1722
        %v3771 = vunpack.c.l.b16 %v1723
        %v3772 = vunpack.c.l.b16 %v1724
        %v3773 = vunpack.c.l.b16 %v1725
        %v3774 = vunpack.c.l.b16 %v1726
        %v3775 = vunpack.c.l.b16 %v1727
        %v3776 = vunpack.c.l.b16 %v1728
        %v3777 = vunpack.c.l.b16 %v1729
        %v3778 = vunpack.c.l.b16 %v1730
        %v3779 = vunpack.c.l.b16 %v1731
        %v3780 = vunpack.c.l.b16 %v1732
        %v3781 = vunpack.c.l.b16 %v1733
        %v3782 = vunpack.c.l.b16 %v1734
        %v3783 = vunpack.c.l.b16 %v1735
        %v3784 = vunpack.c.l.b16 %v1736
        %v3785 = vunpack.c.l.b16 %v1737
        %v3786 = vunpack.c.l.b16 %v1738
        %v3787 = vunpack.c.l.b16 %v1739
        %v3788 = vunpack.c.l.b16 %v1740
        %v3789 = vunpack.c.l.b16 %v1741
        %v3790 = vunpack.c.l.b16 %v1742
        %v3791 = vunpack.c.l.b16 %v1743
        %v3792 = vunpack.c.l.b16 %v1744
        %v3793 = vunpack.c.l.b16 %v1745
        %v3794 = vunpack.c.l.b16 %v1746
        %v3795 = vunpack.c.l.b16 %v1747
        %v3796 = vunpack.c.l.b16 %v1748
        %v3797 = vunpack.c.l.b16 %v1749
        %v3798 = vunpack.c.l.b16 %v1750
        %v3799 = vunpack.c.l.b16 %v1751
        %v3800 = vunpack.c.l.b16 %v1752
        %v3801 = vunpack.c.l.b16 %v1753
        %v3802 = vunpack.c.l.b16 %v1754
        %v3803 = vunpack.c.l.b16 %v1755
        %v3804 = vunpack.c.l.b16 %v1756
        %v3805 = vunpack.c.l.b16 %v1757
        %v3806 = vunpack.c.l.b16 %v1758
        %v3807 = vunpack.c.l.b16 %v1759
        %v3808 = vunpack.c.l.b16 %v1760
        %v3809 = vunpack.c.l.b16 %v1761
        %v3810 = vunpack.c.l.b16 %v1762
        %v3811 = vunpack.c.l.b16 %v1763
        %v3812 = vunpack.c.l.b16 %v1764
        %v3813 = vunpack.c.l.b16 %v1765
        %v3814 = vunpack.c.l.b16 %v1766
        %v3815 = vunpack.c.l.b16 %v1767
        %v3816 = vunpack.c.l.b16 %v1768
        %v3817 = vunpack.c.l.b16 %v1769
        %v3818 = vunpack.c.l.b16 %v1770
        %v3819 = vunpack.c.l.b16 %v1771
        %v3820 = vunpack.c.l.b16 %v1772
        %v3821 = vunpack.c.l.b16 %v1773
        %v3822 = vunpack.c.l.b16 %v1774
        %v3823 = vunpack.c.l.b16 %v1775
        %v3824 = vunpack.c.l.b16 %v1776
        %v3825 = vunpack.c.l.b16 %v1777
        %v3826 = vunpack.c.l.b16 %v1778
        %v3827 = vunpack.c.l.b16 %v1779
        %v3828 = vunpack.c.l.b16 %v1780
        %v3829 = vunpack.c.l.b16 %v1781
        %v3830 = vunpack.c.l.b16 %v1782
        %v3831 = vunpack.c.l.b16 %v1783
        %v3832 = vunpack.c.l.b16 %v1784
        %v3833 = vunpack.c.l.b16 %v1785
        %v3834 = vunpack.c.l.b16 %v1786
        %v3835 = vunpack.c.l.b16 %v1787
        %v3836 = vunpack.c.l.b16 %v1788
        %v3837 = vunpack.c.l.b16 %v1789
        %v3838 = vunpack.c.l.b16 %v1790
        %v3839 = vunpack.c.l.b16 %v1791
        %v3840 = vunpack.c.l.b16 %v1792
        %v3841 = vunpack.c.l.b16 %v1793
        %v3842 = vunpack.c.l.b16 %v1794
        %v3843 = vunpack.c.l.b16 %v1795
        %v3844 = vunpack.c.l.b16 %v1796
        %v3845 = vunpack.c.l.b16 %v1797
        %v3846 = vunpack.c.l.b16 %v1798
        %v3847 = vunpack.c.l.b16 %v1799
        %v3848 = vunpack.c.l.b16 %v1800
        %v3849 = vunpack.c.l.b16 %v1801
        %v3850 = vunpack.c.l.b16 %v1802
        %v3851 = vunpack.c.l.b16 %v1803
        %v3852 = vpack.c.b16 %v2829, %v2828
        %v3853 = vpack.c.b16 %v2831, %v2830
        %v3854 = vpack.c.b16 %v2833, %v2832
        %v3855 = vpack.c.b16 %v2835, %v2834
        %v3856 = vpack.c.b16 %v2837, %v2836
        %v3857 = vpack.c.b16 %v2839, %v2838
        %v3858 = vpack.c.b16 %v2841, %v2840
        %v3859 = vpack.c.b16 %v2843, %v2842
        %v3860 = vpack.c.b16 %v2845, %v2844
        %v3861 = vpack.c.b16 %v2847, %v2846
        %v3862 = vpack.c.b16 %v2849, %v2848
        %v3863 = vpack.c.b16 %v2851, %v2850
        %v3864 = vpack.c.b16 %v2853, %v2852
        %v3865 = vpack.c.b16 %v2855, %v2854
        %v3866 = vpack.c.b16 %v2857, %v2856
        %v3867 = vpack.c.b16 %v2859, %v2858
        %v3868 = vpack.c.b16 %v2861, %v2860
        %v3869 = vpack.c.b16 %v2863, %v2862
        %v3870 = vpack.c.b16 %v2865, %v2864
        %v3871 = vpack.c.b16 %v2867, %v2866
        %v3872 = vpack.c.b16 %v2869, %v2868
        %v3873 = vpack.c.b16 %v2871, %v2870
        %v3874 = vpack.c.b16 %v2873, %v2872
        %v3875 = vpack.c.b16 %v2875, %v2874
        %v3876 = vpack.c.b16 %v2877, %v2876
        %v3877 = vpack.c.b16 %v2879, %v2878
        %v3878 = vpack.c.b16 %v2881, %v2880
        %v3879 = vpack.c.b16 %v2883, %v2882
        %v3880 = vpack.c.b16 %v2885, %v2884
        %v3881 = vpack.c.b16 %v2887, %v2886
        %v3882 = vpack.c.b16 %v2889, %v2888
        %v3883 = vpack.c.b16 %v2891, %v2890
        %v3884 = vpack.c.b16 %v2893, %v2892
        %v3885 = vpack.c.b16 %v2895, %v2894
        %v3886 = vpack.c.b16 %v2897, %v2896
        %v3887 = vpack.c.b16 %v2899, %v2898
        %v3888 = vpack.c.b16 %v2901, %v2900
        %v3889 = vpack.c.b16 %v2903, %v2902
        %v3890 = vpack.c.b16 %v2905, %v2904
        %v3891 = vpack.c.b16 %v2907, %v2906
        %v3892 = vpack.c.b16 %v2909, %v2908
        %v3893 = vpack.c.b16 %v2911, %v2910
        %v3894 = vpack.c.b16 %v2913, %v2912
        %v3895 = vpack.c.b16 %v2915, %v2914
        %v3896 = vpack.c.b16 %v2917, %v2916
        %v3897 = vpack.c.b16 %v2919, %v2918
        %v3898 = vpack.c.b16 %v2921, %v2920
        %v3899 = vpack.c.b16 %v2923, %v2922
        %v3900 = vpack.c.b16 %v2925, %v2924
        %v3901 = vpack.c.b16 %v2927, %v2926
        %v3902 = vpack.c.b16 %v2929, %v2928
        %v3903 = vpack.c.b16 %v2931, %v2930
        %v3904 = vpack.c.b16 %v2933, %v2932
        %v3905 = vpack.c.b16 %v2935, %v2934
        %v3906 = vpack.c.b16 %v2937, %v2936
        %v3907 = vpack.c.b16 %v2939, %v2938
        %v3908 = vpack.c.b16 %v2941, %v2940
        %v3909 = vpack.c.b16 %v2943, %v2942
        %v3910 = vpack.c.b16 %v2945, %v2944
        %v3911 = vpack.c.b16 %v2947, %v2946
        %v3912 = vpack.c.b16 %v2949, %v2948
        %v3913 = vpack.c.b16 %v2951, %v2950
        %v3914 = vpack.c.b16 %v2953, %v2952
        %v3915 = vpack.c.b16 %v2955, %v2954
        %v3916 = vpack.c.b16 %v2957, %v2956
        %v3917 = vpack.c.b16 %v2959, %v2958
        %v3918 = vpack.c.b16 %v2961, %v2960
        %v3919 = vpack.c.b16 %v2963, %v2962
        %v3920 = vpack.c.b16 %v2965, %v2964
        %v3921 = vpack.c.b16 %v2967, %v2966
        %v3922 = vpack.c.b16 %v2969, %v2968
        %v3923 = vpack.c.b16 %v2971, %v2970
        %v3924 = vpack.c.b16 %v2973, %v2972
        %v3925 = vpack.c.b16 %v2975, %v2974
        %v3926 = vpack.c.b16 %v2977, %v2976
        %v3927 = vpack.c.b16 %v2979, %v2978
        %v3928 = vpack.c.b16 %v2981, %v2980
        %v3929 = vpack.c.b16 %v2983, %v2982
        %v3930 = vpack.c.b16 %v2985, %v2984
        %v3931 = vpack.c.b16 %v2987, %v2986
        %v3932 = vpack.c.b16 %v2989, %v2988
        %v3933 = vpack.c.b16 %v2991, %v2990
        %v3934 = vpack.c.b16 %v2993, %v2992
        %v3935 = vpack.c.b16 %v2995, %v2994
        %v3936 = vpack.c.b16 %v2997, %v2996
        %v3937 = vpack.c.b16 %v2999, %v2998
        %v3938 = vpack.c.b16 %v3001, %v3000
        %v3939 = vpack.c.b16 %v3003, %v3002
        %v3940 = vpack.c.b16 %v3005, %v3004
        %v3941 = vpack.c.b16 %v3007, %v3006
        %v3942 = vpack.c.b16 %v3009, %v3008
        %v3943 = vpack.c.b16 %v3011, %v3010
        %v3944 = vpack.c.b16 %v3013, %v3012
        %v3945 = vpack.c.b16 %v3015, %v3014
        %v3946 = vpack.c.b16 %v3017, %v3016
        %v3947 = vpack.c.b16 %v3019, %v3018
        %v3948 = vpack.c.b16 %v3021, %v3020
        %v3949 = vpack.c.b16 %v3023, %v3022
        %v3950 = vpack.c.b16 %v3025, %v3024
        %v3951 = vpack.c.b16 %v3027, %v3026
        %v3952 = vpack.c.b16 %v3029, %v3028
        %v3953 = vpack.c.b16 %v3031, %v3030
        %v3954 = vpack.c.b16 %v3033, %v3032
        %v3955 = vpack.c.b16 %v3035, %v3034
        %v3956 = vpack.c.b16 %v3037, %v3036
        %v3957 = vpack.c.b16 %v3039, %v3038
        %v3958 = vpack.c.b16 %v3041, %v3040
        %v3959 = vpack.c.b16 %v3043, %v3042
        %v3960 = vpack.c.b16 %v3045, %v3044
        %v3961 = vpack.c.b16 %v3047, %v3046
        %v3962 = vpack.c.b16 %v3049, %v3048
        %v3963 = vpack.c.b16 %v3051, %v3050
        %v3964 = vpack.c.b16 %v3053, %v3052
        %v3965 = vpack.c.b16 %v3055, %v3054
        %v3966 = vpack.c.b16 %v3057, %v3056
        %v3967 = vpack.c.b16 %v3059, %v3058
        %v3968 = vpack.c.b16 %v3061, %v3060
        %v3969 = vpack.c.b16 %v3063, %v3062
        %v3970 = vpack.c.b16 %v3065, %v3064
        %v3971 = vpack.c.b16 %v3067, %v3066
        %v3972 = vpack.c.b16 %v3069, %v3068
        %v3973 = vpack.c.b16 %v3071, %v3070
        %v3974 = vpack.c.b16 %v3073, %v3072
        %v3975 = vpack.c.b16 %v3075, %v3074
        %v3976 = vpack.c.b16 %v3077, %v3076
        %v3977 = vpack.c.b16 %v3079, %v3078
        %v3978 = vpack.c.b16 %v3081, %v3080
        %v3979 = vpack.c.b16 %v3083, %v3082
        %v3980 = vpack.c.b16 %v3085, %v3084
        %v3981 = vpack.c.b16 %v3087, %v3086
        %v3982 = vpack.c.b16 %v3089, %v3088
        %v3983 = vpack.c.b16 %v3091, %v3090
        %v3984 = vpack.c.b16 %v3093, %v3092
        %v3985 = vpack.c.b16 %v3095, %v3094
        %v3986 = vpack.c.b16 %v3097, %v3096
        %v3987 = vpack.c.b16 %v3099, %v3098
        %v3988 = vpack.c.b16 %v3101, %v3100
        %v3989 = vpack.c.b16 %v3103, %v3102
        %v3990 = vpack.c.b16 %v3105, %v3104
        %v3991 = vpack.c.b16 %v3107, %v3106
        %v3992 = vpack.c.b16 %v3109, %v3108
        %v3993 = vpack.c.b16 %v3111, %v3110
        %v3994 = vpack.c.b16 %v3113, %v3112
        %v3995 = vpack.c.b16 %v3115, %v3114
        %v3996 = vpack.c.b16 %v3117, %v3116
        %v3997 = vpack.c.b16 %v3119, %v3118
        %v3998 = vpack.c.b16 %v3121, %v3120
        %v3999 = vpack.c.b16 %v3123, %v3122
        %v4000 = vpack.c.b16 %v3125, %v3124
        %v4001 = vpack.c.b16 %v3127, %v3126
        %v4002 = vpack.c.b16 %v3129, %v3128
        %v4003 = vpack.c.b16 %v3131, %v3130
        %v4004 = vpack.c.b16 %v3133, %v3132
        %v4005 = vpack.c.b16 %v3135, %v3134
        %v4006 = vpack.c.b16 %v3137, %v3136
        %v4007 = vpack.c.b16 %v3139, %v3138
        %v4008 = vpack.c.b16 %v3141, %v3140
        %v4009 = vpack.c.b16 %v3143, %v3142
        %v4010 = vpack.c.b16 %v3145, %v3144
        %v4011 = vpack.c.b16 %v3147, %v3146
        %v4012 = vpack.c.b16 %v3149, %v3148
        %v4013 = vpack.c.b16 %v3151, %v3150
        %v4014 = vpack.c.b16 %v3153, %v3152
        %v4015 = vpack.c.b16 %v3155, %v3154
        %v4016 = vpack.c.b16 %v3157, %v3156
        %v4017 = vpack.c.b16 %v3159, %v3158
        %v4018 = vpack.c.b16 %v3161, %v3160
        %v4019 = vpack.c.b16 %v3163, %v3162
        %v4020 = vpack.c.b16 %v3165, %v3164
        %v4021 = vpack.c.b16 %v3167, %v3166
        %v4022 = vpack.c.b16 %v3169, %v3168
        %v4023 = vpack.c.b16 %v3171, %v3170
        %v4024 = vpack.c.b16 %v3173, %v3172
        %v4025 = vpack.c.b16 %v3175, %v3174
        %v4026 = vpack.c.b16 %v3177, %v3176
        %v4027 = vpack.c.b16 %v3179, %v3178
        %v4028 = vpack.c.b16 %v3181, %v3180
        %v4029 = vpack.c.b16 %v3183, %v3182
        %v4030 = vpack.c.b16 %v3185, %v3184
        %v4031 = vpack.c.b16 %v3187, %v3186
        %v4032 = vpack.c.b16 %v3189, %v3188
        %v4033 = vpack.c.b16 %v3191, %v3190
        %v4034 = vpack.c.b16 %v3193, %v3192
        %v4035 = vpack.c.b16 %v3195, %v3194
        %v4036 = vpack.c.b16 %v3197, %v3196
        %v4037 = vpack.c.b16 %v3199, %v3198
        %v4038 = vpack.c.b16 %v3201, %v3200
        %v4039 = vpack.c.b16 %v3203, %v3202
        %v4040 = vpack.c.b16 %v3205, %v3204
        %v4041 = vpack.c.b16 %v3207, %v3206
        %v4042 = vpack.c.b16 %v3209, %v3208
        %v4043 = vpack.c.b16 %v3211, %v3210
        %v4044 = vpack.c.b16 %v3213, %v3212
        %v4045 = vpack.c.b16 %v3215, %v3214
        %v4046 = vpack.c.b16 %v3217, %v3216
        %v4047 = vpack.c.b16 %v3219, %v3218
        %v4048 = vpack.c.b16 %v3221, %v3220
        %v4049 = vpack.c.b16 %v3223, %v3222
        %v4050 = vpack.c.b16 %v3225, %v3224
        %v4051 = vpack.c.b16 %v3227, %v3226
        %v4052 = vpack.c.b16 %v3229, %v3228
        %v4053 = vpack.c.b16 %v3231, %v3230
        %v4054 = vpack.c.b16 %v3233, %v3232
        %v4055 = vpack.c.b16 %v3235, %v3234
        %v4056 = vpack.c.b16 %v3237, %v3236
        %v4057 = vpack.c.b16 %v3239, %v3238
        %v4058 = vpack.c.b16 %v3241, %v3240
        %v4059 = vpack.c.b16 %v3243, %v3242
        %v4060 = vpack.c.b16 %v3245, %v3244
        %v4061 = vpack.c.b16 %v3247, %v3246
        %v4062 = vpack.c.b16 %v3249, %v3248
        %v4063 = vpack.c.b16 %v3251, %v3250
        %v4064 = vpack.c.b16 %v3253, %v3252
        %v4065 = vpack.c.b16 %v3255, %v3254
        %v4066 = vpack.c.b16 %v3257, %v3256
        %v4067 = vpack.c.b16 %v3259, %v3258
        %v4068 = vpack.c.b16 %v3261, %v3260
        %v4069 = vpack.c.b16 %v3263, %v3262
        %v4070 = vpack.c.b16 %v3265, %v3264
        %v4071 = vpack.c.b16 %v3267, %v3266
        %v4072 = vpack.c.b16 %v3269, %v3268
        %v4073 = vpack.c.b16 %v3271, %v3270
        %v4074 = vpack.c.b16 %v3273, %v3272
        %v4075 = vpack.c.b16 %v3275, %v3274
        %v4076 = vpack.c.b16 %v3277, %v3276
        %v4077 = vpack.c.b16 %v3279, %v3278
        %v4078 = vpack.c.b16 %v3281, %v3280
        %v4079 = vpack.c.b16 %v3283, %v3282
        %v4080 = vpack.c.b16 %v3285, %v3284
        %v4081 = vpack.c.b16 %v3287, %v3286
        %v4082 = vpack.c.b16 %v3289, %v3288
        %v4083 = vpack.c.b16 %v3291, %v3290
        %v4084 = vpack.c.b16 %v3293, %v3292
        %v4085 = vpack.c.b16 %v3295, %v3294
        %v4086 = vpack.c.b16 %v3297, %v3296
        %v4087 = vpack.c.b16 %v3299, %v3298
        %v4088 = vpack.c.b16 %v3301, %v3300
        %v4089 = vpack.c.b16 %v3303, %v3302
        %v4090 = vpack.c.b16 %v3305, %v3304
        %v4091 = vpack.c.b16 %v3307, %v3306
        %v4092 = vpack.c.b16 %v3309, %v3308
        %v4093 = vpack.c.b16 %v3311, %v3310
        %v4094 = vpack.c.b16 %v3313, %v3312
        %v4095 = vpack.c.b16 %v3315, %v3314
        %v4096 = vpack.c.b16 %v3317, %v3316
        %v4097 = vpack.c.b16 %v3319, %v3318
        %v4098 = vpack.c.b16 %v3321, %v3320
        %v4099 = vpack.c.b16 %v3323, %v3322
        %v4100 = vpack.c.b16 %v3325, %v3324
        %v4101 = vpack.c.b16 %v3327, %v3326
        %v4102 = vpack.c.b16 %v3329, %v3328
        %v4103 = vpack.c.b16 %v3331, %v3330
        %v4104 = vpack.c.b16 %v3333, %v3332
        %v4105 = vpack.c.b16 %v3335, %v3334
        %v4106 = vpack.c.b16 %v3337, %v3336
        %v4107 = vpack.c.b16 %v3339, %v3338
        %v4108 = vpack.c.b16 %v3341, %v3340
        %v4109 = vpack.c.b16 %v3343, %v3342
        %v4110 = vpack.c.b16 %v3345, %v3344
        %v4111 = vpack.c.b16 %v3347, %v3346
        %v4112 = vpack.c.b16 %v3349, %v3348
        %v4113 = vpack.c.b16 %v3351, %v3350
        %v4114 = vpack.c.b16 %v3353, %v3352
        %v4115 = vpack.c.b16 %v3355, %v3354
        %v4116 = vpack.c.b16 %v3357, %v3356
        %v4117 = vpack.c.b16 %v3359, %v3358
        %v4118 = vpack.c.b16 %v3361, %v3360
        %v4119 = vpack.c.b16 %v3363, %v3362
        %v4120 = vpack.c.b16 %v3365, %v3364
        %v4121 = vpack.c.b16 %v3367, %v3366
        %v4122 = vpack.c.b16 %v3369, %v3368
        %v4123 = vpack.c.b16 %v3371, %v3370
        %v4124 = vpack.c.b16 %v3373, %v3372
        %v4125 = vpack.c.b16 %v3375, %v3374
        %v4126 = vpack.c.b16 %v3377, %v3376
        %v4127 = vpack.c.b16 %v3379, %v3378
        %v4128 = vpack.c.b16 %v3381, %v3380
        %v4129 = vpack.c.b16 %v3383, %v3382
        %v4130 = vpack.c.b16 %v3385, %v3384
        %v4131 = vpack.c.b16 %v3387, %v3386
        %v4132 = vpack.c.b16 %v3389, %v3388
        %v4133 = vpack.c.b16 %v3391, %v3390
        %v4134 = vpack.c.b16 %v3393, %v3392
        %v4135 = vpack.c.b16 %v3395, %v3394
        %v4136 = vpack.c.b16 %v3397, %v3396
        %v4137 = vpack.c.b16 %v3399, %v3398
        %v4138 = vpack.c.b16 %v3401, %v3400
        %v4139 = vpack.c.b16 %v3403, %v3402
        %v4140 = vpack.c.b16 %v3405, %v3404
        %v4141 = vpack.c.b16 %v3407, %v3406
        %v4142 = vpack.c.b16 %v3409, %v3408
        %v4143 = vpack.c.b16 %v3411, %v3410
        %v4144 = vpack.c.b16 %v3413, %v3412
        %v4145 = vpack.c.b16 %v3415, %v3414
        %v4146 = vpack.c.b16 %v3417, %v3416
        %v4147 = vpack.c.b16 %v3419, %v3418
        %v4148 = vpack.c.b16 %v3421, %v3420
        %v4149 = vpack.c.b16 %v3423, %v3422
        %v4150 = vpack.c.b16 %v3425, %v3424
        %v4151 = vpack.c.b16 %v3427, %v3426
        %v4152 = vpack.c.b16 %v3429, %v3428
        %v4153 = vpack.c.b16 %v3431, %v3430
        %v4154 = vpack.c.b16 %v3433, %v3432
        %v4155 = vpack.c.b16 %v3435, %v3434
        %v4156 = vpack.c.b16 %v3437, %v3436
        %v4157 = vpack.c.b16 %v3439, %v3438
        %v4158 = vpack.c.b16 %v3441, %v3440
        %v4159 = vpack.c.b16 %v3443, %v3442
        %v4160 = vpack.c.b16 %v3445, %v3444
        %v4161 = vpack.c.b16 %v3447, %v3446
        %v4162 = vpack.c.b16 %v3449, %v3448
        %v4163 = vpack.c.b16 %v3451, %v3450
        %v4164 = vpack.c.b16 %v3453, %v3452
        %v4165 = vpack.c.b16 %v3455, %v3454
        %v4166 = vpack.c.b16 %v3457, %v3456
        %v4167 = vpack.c.b16 %v3459, %v3458
        %v4168 = vpack.c.b16 %v3461, %v3460
        %v4169 = vpack.c.b16 %v3463, %v3462
        %v4170 = vpack.c.b16 %v3465, %v3464
        %v4171 = vpack.c.b16 %v3467, %v3466
        %v4172 = vpack.c.b16 %v3469, %v3468
        %v4173 = vpack.c.b16 %v3471, %v3470
        %v4174 = vpack.c.b16 %v3473, %v3472
        %v4175 = vpack.c.b16 %v3475, %v3474
        %v4176 = vpack.c.b16 %v3477, %v3476
        %v4177 = vpack.c.b16 %v3479, %v3478
        %v4178 = vpack.c.b16 %v3481, %v3480
        %v4179 = vpack.c.b16 %v3483, %v3482
        %v4180 = vpack.c.b16 %v3485, %v3484
        %v4181 = vpack.c.b16 %v3487, %v3486
        %v4182 = vpack.c.b16 %v3489, %v3488
        %v4183 = vpack.c.b16 %v3491, %v3490
        %v4184 = vpack.c.b16 %v3493, %v3492
        %v4185 = vpack.c.b16 %v3495, %v3494
        %v4186 = vpack.c.b16 %v3497, %v3496
        %v4187 = vpack.c.b16 %v3499, %v3498
        %v4188 = vpack.c.b16 %v3501, %v3500
        %v4189 = vpack.c.b16 %v3503, %v3502
        %v4190 = vpack.c.b16 %v3505, %v3504
        %v4191 = vpack.c.b16 %v3507, %v3506
        %v4192 = vpack.c.b16 %v3509, %v3508
        %v4193 = vpack.c.b16 %v3511, %v3510
        %v4194 = vpack.c.b16 %v3513, %v3512
        %v4195 = vpack.c.b16 %v3515, %v3514
        %v4196 = vpack.c.b16 %v3517, %v3516
        %v4197 = vpack.c.b16 %v3519, %v3518
        %v4198 = vpack.c.b16 %v3521, %v3520
        %v4199 = vpack.c.b16 %v3523, %v3522
        %v4200 = vpack.c.b16 %v3525, %v3524
        %v4201 = vpack.c.b16 %v3527, %v3526
        %v4202 = vpack.c.b16 %v3529, %v3528
        %v4203 = vpack.c.b16 %v3531, %v3530
        %v4204 = vpack.c.b16 %v3533, %v3532
        %v4205 = vpack.c.b16 %v3535, %v3534
        %v4206 = vpack.c.b16 %v3537, %v3536
        %v4207 = vpack.c.b16 %v3539, %v3538
        %v4208 = vpack.c.b16 %v3541, %v3540
        %v4209 = vpack.c.b16 %v3543, %v3542
        %v4210 = vpack.c.b16 %v3545, %v3544
        %v4211 = vpack.c.b16 %v3547, %v3546
        %v4212 = vpack.c.b16 %v3549, %v3548
        %v4213 = vpack.c.b16 %v3551, %v3550
        %v4214 = vpack.c.b16 %v3553, %v3552
        %v4215 = vpack.c.b16 %v3555, %v3554
        %v4216 = vpack.c.b16 %v3557, %v3556
        %v4217 = vpack.c.b16 %v3559, %v3558
        %v4218 = vpack.c.b16 %v3561, %v3560
        %v4219 = vpack.c.b16 %v3563, %v3562
        %v4220 = vpack.c.b16 %v3565, %v3564
        %v4221 = vpack.c.b16 %v3567, %v3566
        %v4222 = vpack.c.b16 %v3569, %v3568
        %v4223 = vpack.c.b16 %v3571, %v3570
        %v4224 = vpack.c.b16 %v3573, %v3572
        %v4225 = vpack.c.b16 %v3575, %v3574
        %v4226 = vpack.c.b16 %v3577, %v3576
        %v4227 = vpack.c.b16 %v3579, %v3578
        %v4228 = vpack.c.b16 %v3581, %v3580
        %v4229 = vpack.c.b16 %v3583, %v3582
        %v4230 = vpack.c.b16 %v3585, %v3584
        %v4231 = vpack.c.b16 %v3587, %v3586
        %v4232 = vpack.c.b16 %v3589, %v3588
        %v4233 = vpack.c.b16 %v3591, %v3590
        %v4234 = vpack.c.b16 %v3593, %v3592
        %v4235 = vpack.c.b16 %v3595, %v3594
        %v4236 = vpack.c.b16 %v3597, %v3596
        %v4237 = vpack.c.b16 %v3599, %v3598
        %v4238 = vpack.c.b16 %v3601, %v3600
        %v4239 = vpack.c.b16 %v3603, %v3602
        %v4240 = vpack.c.b16 %v3605, %v3604
        %v4241 = vpack.c.b16 %v3607, %v3606
        %v4242 = vpack.c.b16 %v3609, %v3608
        %v4243 = vpack.c.b16 %v3611, %v3610
        %v4244 = vpack.c.b16 %v3613, %v3612
        %v4245 = vpack.c.b16 %v3615, %v3614
        %v4246 = vpack.c.b16 %v3617, %v3616
        %v4247 = vpack.c.b16 %v3619, %v3618
        %v4248 = vpack.c.b16 %v3621, %v3620
        %v4249 = vpack.c.b16 %v3623, %v3622
        %v4250 = vpack.c.b16 %v3625, %v3624
        %v4251 = vpack.c.b16 %v3627, %v3626
        %v4252 = vpack.c.b16 %v3629, %v3628
        %v4253 = vpack.c.b16 %v3631, %v3630
        %v4254 = vpack.c.b16 %v3633, %v3632
        %v4255 = vpack.c.b16 %v3635, %v3634
        %v4256 = vpack.c.b16 %v3637, %v3636
        %v4257 = vpack.c.b16 %v3639, %v3638
        %v4258 = vpack.c.b16 %v3641, %v3640
        %v4259 = vpack.c.b16 %v3643, %v3642
        %v4260 = vpack.c.b16 %v3645, %v3644
        %v4261 = vpack.c.b16 %v3647, %v3646
        %v4262 = vpack.c.b16 %v3649, %v3648
        %v4263 = vpack.c.b16 %v3651, %v3650
        %v4264 = vpack.c.b16 %v3653, %v3652
        %v4265 = vpack.c.b16 %v3655, %v3654
        %v4266 = vpack.c.b16 %v3657, %v3656
        %v4267 = vpack.c.b16 %v3659, %v3658
        %v4268 = vpack.c.b16 %v3661, %v3660
        %v4269 = vpack.c.b16 %v3663, %v3662
        %v4270 = vpack.c.b16 %v3665, %v3664
        %v4271 = vpack.c.b16 %v3667, %v3666
        %v4272 = vpack.c.b16 %v3669, %v3668
        %v4273 = vpack.c.b16 %v3671, %v3670
        %v4274 = vpack.c.b16 %v3673, %v3672
        %v4275 = vpack.c.b16 %v3675, %v3674
        %v4276 = vpack.c.b16 %v3677, %v3676
        %v4277 = vpack.c.b16 %v3679, %v3678
        %v4278 = vpack.c.b16 %v3681, %v3680
        %v4279 = vpack.c.b16 %v3683, %v3682
        %v4280 = vpack.c.b16 %v3685, %v3684
        %v4281 = vpack.c.b16 %v3687, %v3686
        %v4282 = vpack.c.b16 %v3689, %v3688
        %v4283 = vpack.c.b16 %v3691, %v3690
        %v4284 = vpack.c.b16 %v3693, %v3692
        %v4285 = vpack.c.b16 %v3695, %v3694
        %v4286 = vpack.c.b16 %v3697, %v3696
        %v4287 = vpack.c.b16 %v3699, %v3698
        %v4288 = vpack.c.b16 %v3701, %v3700
        %v4289 = vpack.c.b16 %v3703, %v3702
        %v4290 = vpack.c.b16 %v3705, %v3704
        %v4291 = vpack.c.b16 %v3707, %v3706
        %v4292 = vpack.c.b16 %v3709, %v3708
        %v4293 = vpack.c.b16 %v3711, %v3710
        %v4294 = vpack.c.b16 %v3713, %v3712
        %v4295 = vpack.c.b16 %v3715, %v3714
        %v4296 = vpack.c.b16 %v3717, %v3716
        %v4297 = vpack.c.b16 %v3719, %v3718
        %v4298 = vpack.c.b16 %v3721, %v3720
        %v4299 = vpack.c.b16 %v3723, %v3722
        %v4300 = vpack.c.b16 %v3725, %v3724
        %v4301 = vpack.c.b16 %v3727, %v3726
        %v4302 = vpack.c.b16 %v3729, %v3728
        %v4303 = vpack.c.b16 %v3731, %v3730
        %v4304 = vpack.c.b16 %v3733, %v3732
        %v4305 = vpack.c.b16 %v3735, %v3734
        %v4306 = vpack.c.b16 %v3737, %v3736
        %v4307 = vpack.c.b16 %v3739, %v3738
        %v4308 = vpack.c.b16 %v3741, %v3740
        %v4309 = vpack.c.b16 %v3743, %v3742
        %v4310 = vpack.c.b16 %v3745, %v3744
        %v4311 = vpack.c.b16 %v3747, %v3746
        %v4312 = vpack.c.b16 %v3749, %v3748
        %v4313 = vpack.c.b16 %v3751, %v3750
        %v4314 = vpack.c.b16 %v3753, %v3752
        %v4315 = vpack.c.b16 %v3755, %v3754
        %v4316 = vpack.c.b16 %v3757, %v3756
        %v4317 = vpack.c.b16 %v3759, %v3758
        %v4318 = vpack.c.b16 %v3761, %v3760
        %v4319 = vpack.c.b16 %v3763, %v3762
        %v4320 = vpack.c.b16 %v3765, %v3764
        %v4321 = vpack.c.b16 %v3767, %v3766
        %v4322 = vpack.c.b16 %v3769, %v3768
        %v4323 = vpack.c.b16 %v3771, %v3770
        %v4324 = vpack.c.b16 %v3773, %v3772
        %v4325 = vpack.c.b16 %v3775, %v3774
        %v4326 = vpack.c.b16 %v3777, %v3776
        %v4327 = vpack.c.b16 %v3779, %v3778
        %v4328 = vpack.c.b16 %v3781, %v3780
        %v4329 = vpack.c.b16 %v3783, %v3782
        %v4330 = vpack.c.b16 %v3785, %v3784
        %v4331 = vpack.c.b16 %v3787, %v3786
        %v4332 = vpack.c.b16 %v3789, %v3788
        %v4333 = vpack.c.b16 %v3791, %v3790
        %v4334 = vpack.c.b16 %v3793, %v3792
        %v4335 = vpack.c.b16 %v3795, %v3794
        %v4336 = vpack.c.b16 %v3797, %v3796
        %v4337 = vpack.c.b16 %v3799, %v3798
        %v4338 = vpack.c.b16 %v3801, %v3800
        %v4339 = vpack.c.b16 %v3803, %v3802
        %v4340 = vpack.c.b16 %v3805, %v3804
        %v4341 = vpack.c.b16 %v3807, %v3806
        %v4342 = vpack.c.b16 %v3809, %v3808
        %v4343 = vpack.c.b16 %v3811, %v3810
        %v4344 = vpack.c.b16 %v3813, %v3812
        %v4345 = vpack.c.b16 %v3815, %v3814
        %v4346 = vpack.c.b16 %v3817, %v3816
        %v4347 = vpack.c.b16 %v3819, %v3818
        %v4348 = vpack.c.b16 %v3821, %v3820
        %v4349 = vpack.c.b16 %v3823, %v3822
        %v4350 = vpack.c.b16 %v3825, %v3824
        %v4351 = vpack.c.b16 %v3827, %v3826
        %v4352 = vpack.c.b16 %v3829, %v3828
        %v4353 = vpack.c.b16 %v3831, %v3830
        %v4354 = vpack.c.b16 %v3833, %v3832
        %v4355 = vpack.c.b16 %v3835, %v3834
        %v4356 = vpack.c.b16 %v3837, %v3836
        %v4357 = vpack.c.b16 %v3839, %v3838
        %v4358 = vpack.c.b16 %v3841, %v3840
        %v4359 = vpack.c.b16 %v3843, %v3842
        %v4360 = vpack.c.b16 %v3845, %v3844
        %v4361 = vpack.c.b16 %v3847, %v3846
        %v4362 = vpack.c.b16 %v3849, %v3848
        %v4363 = vpack.c.b16 %v3851, %v3850
        %4876 = vmatprep.subr.bf16.mxu0 0
        %4877 = vmatpush1.bf16.msra.mxu0 %v3852
        %4878 = vmatprep.subr.bf16.mxu0 0
        %4879 = vmatpush1.bf16.msra.mxu0 %v3853
        %4880 = vmatprep.subr.bf16.mxu0 0
        %4881 = vmatpush1.bf16.msra.mxu0 %v3854
        %4882 = vmatprep.subr.bf16.mxu0 0
        %4883 = vmatpush1.bf16.msra.mxu0 %v3855
        %4884 = vmatprep.subr.bf16.mxu0 0
        %4885 = vmatpush1.bf16.msra.mxu0 %v3856
        %4886 = vmatprep.subr.bf16.mxu0 0
        %4887 = vmatpush1.bf16.msra.mxu0 %v3857
        %4888 = vmatprep.subr.bf16.mxu0 0
        %4889 = vmatpush1.bf16.msra.mxu0 %v3858
        %4890 = vmatprep.subr.bf16.mxu0 0
        %4891 = vmatpush1.bf16.msra.mxu0 %v3859
        %4892 = vmatprep.subr.bf16.mxu0 0
        %4893 = vmatpush1.bf16.msra.mxu0 %v3860
        %4894 = vmatprep.subr.bf16.mxu0 0
        %4895 = vmatpush1.bf16.msra.mxu0 %v3861
        %4896 = vmatprep.subr.bf16.mxu0 0
        %4897 = vmatpush1.bf16.msra.mxu0 %v3862
        %4898 = vmatprep.subr.bf16.mxu0 0
        %4899 = vmatpush1.bf16.msra.mxu0 %v3863
        %4900 = vmatprep.subr.bf16.mxu0 0
        %4901 = vmatpush1.bf16.msra.mxu0 %v3864
        %4902 = vmatprep.subr.bf16.mxu0 0
        %4903 = vmatpush1.bf16.msra.mxu0 %v3865
        %4904 = vmatprep.subr.bf16.mxu0 0
        %4905 = vmatpush1.bf16.msra.mxu0 %v3866
        %4906 = vmatprep.subr.bf16.mxu0 0
        %4907 = vmatpush1.bf16.msra.mxu0 %v3867
        %4908 = vmatprep.mubr.bf16.mxu0 %v716
        %4909 = vmatmul.mubr.bf16.gmra.mrb[0].mxu0 %v715
        %v4910 = vpop.f32.mrb[0].mxu0
        %v4911 = vadd.f32 0.0, %v4910
        %v4912 = vpop.f32.mrb[0].mxu0
        %v4913 = vpop.f32.mrb[0].mxu0
        %v4914 = vpop.f32.mrb[0].mxu0
        %4915 = vdwg.mxu0
        %4916 = vmatprep.subr.bf16.mxu0 0
        %4917 = vmatpush1.bf16.msra.mxu0 %v3868
        %4918 = vmatprep.subr.bf16.mxu0 0
        %4919 = vmatpush1.bf16.msra.mxu0 %v3869
        %4920 = vmatprep.subr.bf16.mxu0 0
        %4921 = vmatpush1.bf16.msra.mxu0 %v3870
        %4922 = vmatprep.subr.bf16.mxu0 0
        %4923 = vmatpush1.bf16.msra.mxu0 %v3871
        %4924 = vmatprep.subr.bf16.mxu0 0
        %4925 = vmatpush1.bf16.msra.mxu0 %v3872
        %4926 = vmatprep.subr.bf16.mxu0 0
        %4927 = vmatpush1.bf16.msra.mxu0 %v3873
        %4928 = vmatprep.subr.bf16.mxu0 0
        %4929 = vmatpush1.bf16.msra.mxu0 %v3874
        %4930 = vmatprep.subr.bf16.mxu0 0
        %4931 = vmatpush1.bf16.msra.mxu0 %v3875
        %4932 = vmatprep.subr.bf16.mxu0 0
        %4933 = vmatpush1.bf16.msra.mxu0 %v3876
        %4934 = vmatprep.subr.bf16.mxu0 0
        %4935 = vmatpush1.bf16.msra.mxu0 %v3877
        %4936 = vmatprep.subr.bf16.mxu0 0
        %4937 = vmatpush1.bf16.msra.mxu0 %v3878
        %4938 = vmatprep.subr.bf16.mxu0 0
        %4939 = vmatpush1.bf16.msra.mxu0 %v3879
        %4940 = vmatprep.subr.bf16.mxu0 0
        %4941 = vmatpush1.bf16.msra.mxu0 %v3880
        %4942 = vmatprep.subr.bf16.mxu0 0
        %4943 = vmatpush1.bf16.msra.mxu0 %v3881
        %4944 = vmatprep.subr.bf16.mxu0 0
        %4945 = vmatpush1.bf16.msra.mxu0 %v3882
        %4946 = vmatprep.subr.bf16.mxu0 0
        %4947 = vmatpush1.bf16.msra.mxu0 %v3883
        %4948 = vmatprep.mubr.bf16.mxu0 %v718
        %4949 = vmatmul.mubr.bf16.gmra.mrb[0].mxu0 %v717
        %v4950 = vpop.f32.mrb[0].mxu0
        %v4951 = vadd.f32 %v4911, %v4950
        %v4952 = vpop.f32.mrb[0].mxu0
        %v4953 = vpop.f32.mrb[0].mxu0
        %v4954 = vpop.f32.mrb[0].mxu0
        %4955 = vdwg.mxu0
        %4956 = vmatprep.subr.bf16.mxu0 0
        %4957 = vmatpush1.bf16.msra.mxu0 %v3884
        %4958 = vmatprep.subr.bf16.mxu0 0
        %4959 = vmatpush1.bf16.msra.mxu0 %v3885
        %4960 = vmatprep.subr.bf16.mxu0 0
        %4961 = vmatpush1.bf16.msra.mxu0 %v3886
        %4962 = vmatprep.subr.bf16.mxu0 0
        %4963 = vmatpush1.bf16.msra.mxu0 %v3887
        %4964 = vmatprep.subr.bf16.mxu0 0
        %4965 = vmatpush1.bf16.msra.mxu0 %v3888
        %4966 = vmatprep.subr.bf16.mxu0 0
        %4967 = vmatpush1.bf16.msra.mxu0 %v3889
        %4968 = vmatprep.subr.bf16.mxu0 0
        %4969 = vmatpush1.bf16.msra.mxu0 %v3890
        %4970 = vmatprep.subr.bf16.mxu0 0
        %4971 = vmatpush1.bf16.msra.mxu0 %v3891
        %4972 = vmatprep.subr.bf16.mxu0 0
        %4973 = vmatpush1.bf16.msra.mxu0 %v3892
        %4974 = vmatprep.subr.bf16.mxu0 0
        %4975 = vmatpush1.bf16.msra.mxu0 %v3893
        %4976 = vmatprep.subr.bf16.mxu0 0
        %4977 = vmatpush1.bf16.msra.mxu0 %v3894
        %4978 = vmatprep.subr.bf16.mxu0 0
        %4979 = vmatpush1.bf16.msra.mxu0 %v3895
        %4980 = vmatprep.subr.bf16.mxu0 0
        %4981 = vmatpush1.bf16.msra.mxu0 %v3896
        %4982 = vmatprep.subr.bf16.mxu0 0
        %4983 = vmatpush1.bf16.msra.mxu0 %v3897
        %4984 = vmatprep.subr.bf16.mxu0 0
        %4985 = vmatpush1.bf16.msra.mxu0 %v3898
        %4986 = vmatprep.subr.bf16.mxu0 0
        %4987 = vmatpush1.bf16.msra.mxu0 %v3899
        %4988 = vmatprep.mubr.bf16.mxu0 %v720
        %4989 = vmatmul.mubr.bf16.gmra.mrb[0].mxu0 %v719
        %v4990 = vpop.f32.mrb[0].mxu0
        %v4991 = vadd.f32 %v4951, %v4990
        %v4992 = vpop.f32.mrb[0].mxu0
        %v4993 = vpop.f32.mrb[0].mxu0
        %v4994 = vpop.f32.mrb[0].mxu0
        %4995 = vdwg.mxu0
        %4996 = vmatprep.subr.bf16.mxu0 0
        %4997 = vmatpush1.bf16.msra.mxu0 %v3900
        %4998 = vmatprep.subr.bf16.mxu0 0
        %4999 = vmatpush1.bf16.msra.mxu0 %v3901
        %5000 = vmatprep.subr.bf16.mxu0 0
        %5001 = vmatpush1.bf16.msra.mxu0 %v3902
        %5002 = vmatprep.subr.bf16.mxu0 0
        %5003 = vmatpush1.bf16.msra.mxu0 %v3903
        %5004 = vmatprep.subr.bf16.mxu0 0
        %5005 = vmatpush1.bf16.msra.mxu0 %v3904
        %5006 = vmatprep.subr.bf16.mxu0 0
        %5007 = vmatpush1.bf16.msra.mxu0 %v3905
        %5008 = vmatprep.subr.bf16.mxu0 0
        %5009 = vmatpush1.bf16.msra.mxu0 %v3906
        %5010 = vmatprep.subr.bf16.mxu0 0
        %5011 = vmatpush1.bf16.msra.mxu0 %v3907
        %5012 = vmatprep.subr.bf16.mxu0 0
        %5013 = vmatpush1.bf16.msra.mxu0 %v3908
        %5014 = vmatprep.subr.bf16.mxu0 0
        %5015 = vmatpush1.bf16.msra.mxu0 %v3909
        %5016 = vmatprep.subr.bf16.mxu0 0
        %5017 = vmatpush1.bf16.msra.mxu0 %v3910
        %5018 = vmatprep.subr.bf16.mxu0 0
        %5019 = vmatpush1.bf16.msra.mxu0 %v3911
        %5020 = vmatprep.subr.bf16.mxu0 0
        %5021 = vmatpush1.bf16.msra.mxu0 %v3912
        %5022 = vmatprep.subr.bf16.mxu0 0
        %5023 = vmatpush1.bf16.msra.mxu0 %v3913
        %5024 = vmatprep.subr.bf16.mxu0 0
        %5025 = vmatpush1.bf16.msra.mxu0 %v3914
        %5026 = vmatprep.subr.bf16.mxu0 0
        %5027 = vmatpush1.bf16.msra.mxu0 %v3915
        %5028 = vmatprep.mubr.bf16.mxu0 %v722
        %5029 = vmatmul.mubr.bf16.gmra.mrb[0].mxu0 %v721
        %v5030 = vpop.f32.mrb[0].mxu0
        %v5031 = vadd.f32 %v4991, %v5030
        %v5032 = vpop.f32.mrb[0].mxu0
        %v5033 = vpop.f32.mrb[0].mxu0
        %v5034 = vpop.f32.mrb[0].mxu0
        %5035 = vdwg.mxu0
        %5036 = vmatprep.subr.bf16.mxu0 0
        %5037 = vmatpush1.bf16.msra.mxu0 %v3916
        %5038 = vmatprep.subr.bf16.mxu0 0
        %5039 = vmatpush1.bf16.msra.mxu0 %v3917
        %5040 = vmatprep.subr.bf16.mxu0 0
        %5041 = vmatpush1.bf16.msra.mxu0 %v3918
        %5042 = vmatprep.subr.bf16.mxu0 0
        %5043 = vmatpush1.bf16.msra.mxu0 %v3919
        %5044 = vmatprep.subr.bf16.mxu0 0
        %5045 = vmatpush1.bf16.msra.mxu0 %v3920
        %5046 = vmatprep.subr.bf16.mxu0 0
        %5047 = vmatpush1.bf16.msra.mxu0 %v3921
        %5048 = vmatprep.subr.bf16.mxu0 0
        %5049 = vmatpush1.bf16.msra.mxu0 %v3922
        %5050 = vmatprep.subr.bf16.mxu0 0
        %5051 = vmatpush1.bf16.msra.mxu0 %v3923
        %5052 = vmatprep.subr.bf16.mxu0 0
        %5053 = vmatpush1.bf16.msra.mxu0 %v3924
        %5054 = vmatprep.subr.bf16.mxu0 0
        %5055 = vmatpush1.bf16.msra.mxu0 %v3925
        %5056 = vmatprep.subr.bf16.mxu0 0
        %5057 = vmatpush1.bf16.msra.mxu0 %v3926
        %5058 = vmatprep.subr.bf16.mxu0 0
        %5059 = vmatpush1.bf16.msra.mxu0 %v3927
        %5060 = vmatprep.subr.bf16.mxu0 0
        %5061 = vmatpush1.bf16.msra.mxu0 %v3928
        %5062 = vmatprep.subr.bf16.mxu0 0
        %5063 = vmatpush1.bf16.msra.mxu0 %v3929
        %5064 = vmatprep.subr.bf16.mxu0 0
        %5065 = vmatpush1.bf16.msra.mxu0 %v3930
        %5066 = vmatprep.subr.bf16.mxu0 0
        %5067 = vmatpush1.bf16.msra.mxu0 %v3931
        %5068 = vmatprep.mubr.bf16.mxu0 %v724
        %5069 = vmatmul.mubr.bf16.gmra.mrb[0].mxu0 %v723
        %v5070 = vpop.f32.mrb[0].mxu0
        %v5071 = vadd.f32 %v5031, %v5070
        %v5072 = vpop.f32.mrb[0].mxu0
        %v5073 = vpop.f32.mrb[0].mxu0
        %v5074 = vpop.f32.mrb[0].mxu0
        %5075 = vdwg.mxu0
        %5076 = vmatprep.subr.bf16.mxu0 0
        %5077 = vmatpush1.bf16.msra.mxu0 %v3932
        %5078 = vmatprep.subr.bf16.mxu0 0
        %5079 = vmatpush1.bf16.msra.mxu0 %v3933
        %5080 = vmatprep.subr.bf16.mxu0 0
        %5081 = vmatpush1.bf16.msra.mxu0 %v3934
        %5082 = vmatprep.subr.bf16.mxu0 0
        %5083 = vmatpush1.bf16.msra.mxu0 %v3935
        %5084 = vmatprep.subr.bf16.mxu0 0
        %5085 = vmatpush1.bf16.msra.mxu0 %v3936
        %5086 = vmatprep.subr.bf16.mxu0 0
        %5087 = vmatpush1.bf16.msra.mxu0 %v3937
        %5088 = vmatprep.subr.bf16.mxu0 0
        %5089 = vmatpush1.bf16.msra.mxu0 %v3938
        %5090 = vmatprep.subr.bf16.mxu0 0
        %5091 = vmatpush1.bf16.msra.mxu0 %v3939
        %5092 = vmatprep.subr.bf16.mxu0 0
        %5093 = vmatpush1.bf16.msra.mxu0 %v3940
        %5094 = vmatprep.subr.bf16.mxu0 0
        %5095 = vmatpush1.bf16.msra.mxu0 %v3941
        %5096 = vmatprep.subr.bf16.mxu0 0
        %5097 = vmatpush1.bf16.msra.mxu0 %v3942
        %5098 = vmatprep.subr.bf16.mxu0 0
        %5099 = vmatpush1.bf16.msra.mxu0 %v3943
        %5100 = vmatprep.subr.bf16.mxu0 0
        %5101 = vmatpush1.bf16.msra.mxu0 %v3944
        %5102 = vmatprep.subr.bf16.mxu0 0
        %5103 = vmatpush1.bf16.msra.mxu0 %v3945
        %5104 = vmatprep.subr.bf16.mxu0 0
        %5105 = vmatpush1.bf16.msra.mxu0 %v3946
        %5106 = vmatprep.subr.bf16.mxu0 0
        %5107 = vmatpush1.bf16.msra.mxu0 %v3947
        %5108 = vmatprep.mubr.bf16.mxu0 %v726
        %5109 = vmatmul.mubr.bf16.gmra.mrb[0].mxu0 %v725
        %v5110 = vpop.f32.mrb[0].mxu0
        %v5111 = vadd.f32 %v5071, %v5110
        %v5112 = vpop.f32.mrb[0].mxu0
        %v5113 = vpop.f32.mrb[0].mxu0
        %v5114 = vpop.f32.mrb[0].mxu0
        %5115 = vdwg.mxu0
        %5116 = vmatprep.subr.bf16.mxu0 0
        %5117 = vmatpush1.bf16.msra.mxu0 %v3948
        %5118 = vmatprep.subr.bf16.mxu0 0
        %5119 = vmatpush1.bf16.msra.mxu0 %v3949
        %5120 = vmatprep.subr.bf16.mxu0 0
        %5121 = vmatpush1.bf16.msra.mxu0 %v3950
        %5122 = vmatprep.subr.bf16.mxu0 0
        %5123 = vmatpush1.bf16.msra.mxu0 %v3951
        %5124 = vmatprep.subr.bf16.mxu0 0
        %5125 = vmatpush1.bf16.msra.mxu0 %v3952
        %5126 = vmatprep.subr.bf16.mxu0 0
        %5127 = vmatpush1.bf16.msra.mxu0 %v3953
        %5128 = vmatprep.subr.bf16.mxu0 0
        %5129 = vmatpush1.bf16.msra.mxu0 %v3954
        %5130 = vmatprep.subr.bf16.mxu0 0
        %5131 = vmatpush1.bf16.msra.mxu0 %v3955
        %5132 = vmatprep.subr.bf16.mxu0 0
        %5133 = vmatpush1.bf16.msra.mxu0 %v3956
        %5134 = vmatprep.subr.bf16.mxu0 0
        %5135 = vmatpush1.bf16.msra.mxu0 %v3957
        %5136 = vmatprep.subr.bf16.mxu0 0
        %5137 = vmatpush1.bf16.msra.mxu0 %v3958
        %5138 = vmatprep.subr.bf16.mxu0 0
        %5139 = vmatpush1.bf16.msra.mxu0 %v3959
        %5140 = vmatprep.subr.bf16.mxu0 0
        %5141 = vmatpush1.bf16.msra.mxu0 %v3960
        %5142 = vmatprep.subr.bf16.mxu0 0
        %5143 = vmatpush1.bf16.msra.mxu0 %v3961
        %5144 = vmatprep.subr.bf16.mxu0 0
        %5145 = vmatpush1.bf16.msra.mxu0 %v3962
        %5146 = vmatprep.subr.bf16.mxu0 0
        %5147 = vmatpush1.bf16.msra.mxu0 %v3963
        %5148 = vmatprep.mubr.bf16.mxu0 %v728
        %5149 = vmatmul.mubr.bf16.gmra.mrb[0].mxu0 %v727
        %v5150 = vpop.f32.mrb[0].mxu0
        %v5151 = vadd.f32 %v5111, %v5150
        %v5152 = vpop.f32.mrb[0].mxu0
        %v5153 = vpop.f32.mrb[0].mxu0
        %v5154 = vpop.f32.mrb[0].mxu0
        %5155 = vdwg.mxu0
        %5156 = vmatprep.subr.bf16.mxu0 0
        %5157 = vmatpush1.bf16.msra.mxu0 %v3964
        %5158 = vmatprep.subr.bf16.mxu0 0
        %5159 = vmatpush1.bf16.msra.mxu0 %v3965
        %5160 = vmatprep.subr.bf16.mxu0 0
        %5161 = vmatpush1.bf16.msra.mxu0 %v3966
        %5162 = vmatprep.subr.bf16.mxu0 0
        %5163 = vmatpush1.bf16.msra.mxu0 %v3967
        %5164 = vmatprep.subr.bf16.mxu0 0
        %5165 = vmatpush1.bf16.msra.mxu0 %v3968
        %5166 = vmatprep.subr.bf16.mxu0 0
        %5167 = vmatpush1.bf16.msra.mxu0 %v3969
        %5168 = vmatprep.subr.bf16.mxu0 0
        %5169 = vmatpush1.bf16.msra.mxu0 %v3970
        %5170 = vmatprep.subr.bf16.mxu0 0
        %5171 = vmatpush1.bf16.msra.mxu0 %v3971
        %5172 = vmatprep.subr.bf16.mxu0 0
        %5173 = vmatpush1.bf16.msra.mxu0 %v3972
        %5174 = vmatprep.subr.bf16.mxu0 0
        %5175 = vmatpush1.bf16.msra.mxu0 %v3973
        %5176 = vmatprep.subr.bf16.mxu0 0
        %5177 = vmatpush1.bf16.msra.mxu0 %v3974
        %5178 = vmatprep.subr.bf16.mxu0 0
        %5179 = vmatpush1.bf16.msra.mxu0 %v3975
        %5180 = vmatprep.subr.bf16.mxu0 0
        %5181 = vmatpush1.bf16.msra.mxu0 %v3976
        %5182 = vmatprep.subr.bf16.mxu0 0
        %5183 = vmatpush1.bf16.msra.mxu0 %v3977
        %5184 = vmatprep.subr.bf16.mxu0 0
        %5185 = vmatpush1.bf16.msra.mxu0 %v3978
        %5186 = vmatprep.subr.bf16.mxu0 0
        %5187 = vmatpush1.bf16.msra.mxu0 %v3979
        %5188 = vmatprep.mubr.bf16.mxu0 %v730
        %5189 = vmatmul.mubr.bf16.gmra.mrb[0].mxu0 %v729
        %v5190 = vpop.f32.mrb[0].mxu0
        %v5191 = vadd.f32 %v5151, %v5190
        %v5192 = vpop.f32.mrb[0].mxu0
        %v5193 = vpop.f32.mrb[0].mxu0
        %v5194 = vpop.f32.mrb[0].mxu0
        %5195 = vdwg.mxu0
        %5196 = vmatprep.subr.bf16.mxu0 0
        %5197 = vmatpush1.bf16.msra.mxu0 %v3980
        %5198 = vmatprep.subr.bf16.mxu0 0
        %5199 = vmatpush1.bf16.msra.mxu0 %v3981
        %5200 = vmatprep.subr.bf16.mxu0 0
        %5201 = vmatpush1.bf16.msra.mxu0 %v3982
        %5202 = vmatprep.subr.bf16.mxu0 0
        %5203 = vmatpush1.bf16.msra.mxu0 %v3983
        %5204 = vmatprep.subr.bf16.mxu0 0
        %5205 = vmatpush1.bf16.msra.mxu0 %v3984
        %5206 = vmatprep.subr.bf16.mxu0 0
        %5207 = vmatpush1.bf16.msra.mxu0 %v3985
        %5208 = vmatprep.subr.bf16.mxu0 0
        %5209 = vmatpush1.bf16.msra.mxu0 %v3986
        %5210 = vmatprep.subr.bf16.mxu0 0
        %5211 = vmatpush1.bf16.msra.mxu0 %v3987
        %5212 = vmatprep.subr.bf16.mxu0 0
        %5213 = vmatpush1.bf16.msra.mxu0 %v3988
        %5214 = vmatprep.subr.bf16.mxu0 0
        %5215 = vmatpush1.bf16.msra.mxu0 %v3989
        %5216 = vmatprep.subr.bf16.mxu0 0
        %5217 = vmatpush1.bf16.msra.mxu0 %v3990
        %5218 = vmatprep.subr.bf16.mxu0 0
        %5219 = vmatpush1.bf16.msra.mxu0 %v3991
        %5220 = vmatprep.subr.bf16.mxu0 0
        %5221 = vmatpush1.bf16.msra.mxu0 %v3992
        %5222 = vmatprep.subr.bf16.mxu0 0
        %5223 = vmatpush1.bf16.msra.mxu0 %v3993
        %5224 = vmatprep.subr.bf16.mxu0 0
        %5225 = vmatpush1.bf16.msra.mxu0 %v3994
        %5226 = vmatprep.subr.bf16.mxu0 0
        %5227 = vmatpush1.bf16.msra.mxu0 %v3995
        %5228 = vmatprep.mubr.bf16.mxu0 %v732
        %5229 = vmatmul.mubr.bf16.gmra.mrb[0].mxu0 %v731
        %v5230 = vpop.f32.mrb[0].mxu0
        %v5231 = vadd.f32 %v5191, %v5230
        %v5232 = vpop.f32.mrb[0].mxu0
        %v5233 = vpop.f32.mrb[0].mxu0
        %v5234 = vpop.f32.mrb[0].mxu0
        %5235 = vdwg.mxu0
        %5236 = vmatprep.subr.bf16.mxu0 0
        %5237 = vmatpush1.bf16.msra.mxu0 %v3996
        %5238 = vmatprep.subr.bf16.mxu0 0
        %5239 = vmatpush1.bf16.msra.mxu0 %v3997
        %5240 = vmatprep.subr.bf16.mxu0 0
        %5241 = vmatpush1.bf16.msra.mxu0 %v3998
        %5242 = vmatprep.subr.bf16.mxu0 0
        %5243 = vmatpush1.bf16.msra.mxu0 %v3999
        %5244 = vmatprep.subr.bf16.mxu0 0
        %5245 = vmatpush1.bf16.msra.mxu0 %v4000
        %5246 = vmatprep.subr.bf16.mxu0 0
        %5247 = vmatpush1.bf16.msra.mxu0 %v4001
        %5248 = vmatprep.subr.bf16.mxu0 0
        %5249 = vmatpush1.bf16.msra.mxu0 %v4002
        %5250 = vmatprep.subr.bf16.mxu0 0
        %5251 = vmatpush1.bf16.msra.mxu0 %v4003
        %5252 = vmatprep.subr.bf16.mxu0 0
        %5253 = vmatpush1.bf16.msra.mxu0 %v4004
        %5254 = vmatprep.subr.bf16.mxu0 0
        %5255 = vmatpush1.bf16.msra.mxu0 %v4005
        %5256 = vmatprep.subr.bf16.mxu0 0
        %5257 = vmatpush1.bf16.msra.mxu0 %v4006
        %5258 = vmatprep.subr.bf16.mxu0 0
        %5259 = vmatpush1.bf16.msra.mxu0 %v4007
        %5260 = vmatprep.subr.bf16.mxu0 0
        %5261 = vmatpush1.bf16.msra.mxu0 %v4008
        %5262 = vmatprep.subr.bf16.mxu0 0
        %5263 = vmatpush1.bf16.msra.mxu0 %v4009
        %5264 = vmatprep.subr.bf16.mxu0 0
        %5265 = vmatpush1.bf16.msra.mxu0 %v4010
        %5266 = vmatprep.subr.bf16.mxu0 0
        %5267 = vmatpush1.bf16.msra.mxu0 %v4011
        %5268 = vmatprep.mubr.bf16.mxu0 %v734
        %5269 = vmatmul.mubr.bf16.gmra.mrb[0].mxu0 %v733
        %v5270 = vpop.f32.mrb[0].mxu0
        %v5271 = vadd.f32 %v5231, %v5270
        %v5272 = vpop.f32.mrb[0].mxu0
        %v5273 = vpop.f32.mrb[0].mxu0
        %v5274 = vpop.f32.mrb[0].mxu0
        %5275 = vdwg.mxu0
        %5276 = vmatprep.subr.bf16.mxu0 0
        %5277 = vmatpush1.bf16.msra.mxu0 %v4012
        %5278 = vmatprep.subr.bf16.mxu0 0
        %5279 = vmatpush1.bf16.msra.mxu0 %v4013
        %5280 = vmatprep.subr.bf16.mxu0 0
        %5281 = vmatpush1.bf16.msra.mxu0 %v4014
        %5282 = vmatprep.subr.bf16.mxu0 0
        %5283 = vmatpush1.bf16.msra.mxu0 %v4015
        %5284 = vmatprep.subr.bf16.mxu0 0
        %5285 = vmatpush1.bf16.msra.mxu0 %v4016
        %5286 = vmatprep.subr.bf16.mxu0 0
        %5287 = vmatpush1.bf16.msra.mxu0 %v4017
        %5288 = vmatprep.subr.bf16.mxu0 0
        %5289 = vmatpush1.bf16.msra.mxu0 %v4018
        %5290 = vmatprep.subr.bf16.mxu0 0
        %5291 = vmatpush1.bf16.msra.mxu0 %v4019
        %5292 = vmatprep.subr.bf16.mxu0 0
        %5293 = vmatpush1.bf16.msra.mxu0 %v4020
        %5294 = vmatprep.subr.bf16.mxu0 0
        %5295 = vmatpush1.bf16.msra.mxu0 %v4021
        %5296 = vmatprep.subr.bf16.mxu0 0
        %5297 = vmatpush1.bf16.msra.mxu0 %v4022
        %5298 = vmatprep.subr.bf16.mxu0 0
        %5299 = vmatpush1.bf16.msra.mxu0 %v4023
        %5300 = vmatprep.subr.bf16.mxu0 0
        %5301 = vmatpush1.bf16.msra.mxu0 %v4024
        %5302 = vmatprep.subr.bf16.mxu0 0
        %5303 = vmatpush1.bf16.msra.mxu0 %v4025
        %5304 = vmatprep.subr.bf16.mxu0 0
        %5305 = vmatpush1.bf16.msra.mxu0 %v4026
        %5306 = vmatprep.subr.bf16.mxu0 0
        %5307 = vmatpush1.bf16.msra.mxu0 %v4027
        %5308 = vmatprep.mubr.bf16.mxu0 %v736
        %5309 = vmatmul.mubr.bf16.gmra.mrb[0].mxu0 %v735
        %v5310 = vpop.f32.mrb[0].mxu0
        %v5311 = vadd.f32 %v5271, %v5310
        %v5312 = vpop.f32.mrb[0].mxu0
        %v5313 = vpop.f32.mrb[0].mxu0
        %v5314 = vpop.f32.mrb[0].mxu0
        %5315 = vdwg.mxu0
        %5316 = vmatprep.subr.bf16.mxu0 0
        %5317 = vmatpush1.bf16.msra.mxu0 %v4028
        %5318 = vmatprep.subr.bf16.mxu0 0
        %5319 = vmatpush1.bf16.msra.mxu0 %v4029
        %5320 = vmatprep.subr.bf16.mxu0 0
        %5321 = vmatpush1.bf16.msra.mxu0 %v4030
        %5322 = vmatprep.subr.bf16.mxu0 0
        %5323 = vmatpush1.bf16.msra.mxu0 %v4031
        %5324 = vmatprep.subr.bf16.mxu0 0
        %5325 = vmatpush1.bf16.msra.mxu0 %v4032
        %5326 = vmatprep.subr.bf16.mxu0 0
        %5327 = vmatpush1.bf16.msra.mxu0 %v4033
        %5328 = vmatprep.subr.bf16.mxu0 0
        %5329 = vmatpush1.bf16.msra.mxu0 %v4034
        %5330 = vmatprep.subr.bf16.mxu0 0
        %5331 = vmatpush1.bf16.msra.mxu0 %v4035
        %5332 = vmatprep.subr.bf16.mxu0 0
        %5333 = vmatpush1.bf16.msra.mxu0 %v4036
        %5334 = vmatprep.subr.bf16.mxu0 0
        %5335 = vmatpush1.bf16.msra.mxu0 %v4037
        %5336 = vmatprep.subr.bf16.mxu0 0
        %5337 = vmatpush1.bf16.msra.mxu0 %v4038
        %5338 = vmatprep.subr.bf16.mxu0 0
        %5339 = vmatpush1.bf16.msra.mxu0 %v4039
        %5340 = vmatprep.subr.bf16.mxu0 0
        %5341 = vmatpush1.bf16.msra.mxu0 %v4040
        %5342 = vmatprep.subr.bf16.mxu0 0
        %5343 = vmatpush1.bf16.msra.mxu0 %v4041
        %5344 = vmatprep.subr.bf16.mxu0 0
        %5345 = vmatpush1.bf16.msra.mxu0 %v4042
        %5346 = vmatprep.subr.bf16.mxu0 0
        %5347 = vmatpush1.bf16.msra.mxu0 %v4043
        %5348 = vmatprep.mubr.bf16.mxu0 %v738
        %5349 = vmatmul.mubr.bf16.gmra.mrb[0].mxu0 %v737
        %v5350 = vpop.f32.mrb[0].mxu0
        %v5351 = vadd.f32 %v5311, %v5350
        %v5352 = vpop.f32.mrb[0].mxu0
        %v5353 = vpop.f32.mrb[0].mxu0
        %v5354 = vpop.f32.mrb[0].mxu0
        %5355 = vdwg.mxu0
        %5356 = vmatprep.subr.bf16.mxu0 0
        %5357 = vmatpush1.bf16.msra.mxu0 %v4044
        %5358 = vmatprep.subr.bf16.mxu0 0
        %5359 = vmatpush1.bf16.msra.mxu0 %v4045
        %5360 = vmatprep.subr.bf16.mxu0 0
        %5361 = vmatpush1.bf16.msra.mxu0 %v4046
        %5362 = vmatprep.subr.bf16.mxu0 0
        %5363 = vmatpush1.bf16.msra.mxu0 %v4047
        %5364 = vmatprep.subr.bf16.mxu0 0
        %5365 = vmatpush1.bf16.msra.mxu0 %v4048
        %5366 = vmatprep.subr.bf16.mxu0 0
        %5367 = vmatpush1.bf16.msra.mxu0 %v4049
        %5368 = vmatprep.subr.bf16.mxu0 0
        %5369 = vmatpush1.bf16.msra.mxu0 %v4050
        %5370 = vmatprep.subr.bf16.mxu0 0
        %5371 = vmatpush1.bf16.msra.mxu0 %v4051
        %5372 = vmatprep.subr.bf16.mxu0 0
        %5373 = vmatpush1.bf16.msra.mxu0 %v4052
        %5374 = vmatprep.subr.bf16.mxu0 0
        %5375 = vmatpush1.bf16.msra.mxu0 %v4053
        %5376 = vmatprep.subr.bf16.mxu0 0
        %5377 = vmatpush1.bf16.msra.mxu0 %v4054
        %5378 = vmatprep.subr.bf16.mxu0 0
        %5379 = vmatpush1.bf16.msra.mxu0 %v4055
        %5380 = vmatprep.subr.bf16.mxu0 0
        %5381 = vmatpush1.bf16.msra.mxu0 %v4056
        %5382 = vmatprep.subr.bf16.mxu0 0
        %5383 = vmatpush1.bf16.msra.mxu0 %v4057
        %5384 = vmatprep.subr.bf16.mxu0 0
        %5385 = vmatpush1.bf16.msra.mxu0 %v4058
        %5386 = vmatprep.subr.bf16.mxu0 0
        %5387 = vmatpush1.bf16.msra.mxu0 %v4059
        %5388 = vmatprep.mubr.bf16.mxu0 %v740
        %5389 = vmatmul.mubr.bf16.gmra.mrb[0].mxu0 %v739
        %v5390 = vpop.f32.mrb[0].mxu0
        %v5391 = vadd.f32 %v5351, %v5390
        %v5392 = vpop.f32.mrb[0].mxu0
        %v5393 = vpop.f32.mrb[0].mxu0
        %v5394 = vpop.f32.mrb[0].mxu0
        %5395 = vdwg.mxu0
        %5396 = vmatprep.subr.bf16.mxu0 0
        %5397 = vmatpush1.bf16.msra.mxu0 %v4060
        %5398 = vmatprep.subr.bf16.mxu0 0
        %5399 = vmatpush1.bf16.msra.mxu0 %v4061
        %5400 = vmatprep.subr.bf16.mxu0 0
        %5401 = vmatpush1.bf16.msra.mxu0 %v4062
        %5402 = vmatprep.subr.bf16.mxu0 0
        %5403 = vmatpush1.bf16.msra.mxu0 %v4063
        %5404 = vmatprep.subr.bf16.mxu0 0
        %5405 = vmatpush1.bf16.msra.mxu0 %v4064
        %5406 = vmatprep.subr.bf16.mxu0 0
        %5407 = vmatpush1.bf16.msra.mxu0 %v4065
        %5408 = vmatprep.subr.bf16.mxu0 0
        %5409 = vmatpush1.bf16.msra.mxu0 %v4066
        %5410 = vmatprep.subr.bf16.mxu0 0
        %5411 = vmatpush1.bf16.msra.mxu0 %v4067
        %5412 = vmatprep.subr.bf16.mxu0 0
        %5413 = vmatpush1.bf16.msra.mxu0 %v4068
        %5414 = vmatprep.subr.bf16.mxu0 0
        %5415 = vmatpush1.bf16.msra.mxu0 %v4069
        %5416 = vmatprep.subr.bf16.mxu0 0
        %5417 = vmatpush1.bf16.msra.mxu0 %v4070
        %5418 = vmatprep.subr.bf16.mxu0 0
        %5419 = vmatpush1.bf16.msra.mxu0 %v4071
        %5420 = vmatprep.subr.bf16.mxu0 0
        %5421 = vmatpush1.bf16.msra.mxu0 %v4072
        %5422 = vmatprep.subr.bf16.mxu0 0
        %5423 = vmatpush1.bf16.msra.mxu0 %v4073
        %5424 = vmatprep.subr.bf16.mxu0 0
        %5425 = vmatpush1.bf16.msra.mxu0 %v4074
        %5426 = vmatprep.subr.bf16.mxu0 0
        %5427 = vmatpush1.bf16.msra.mxu0 %v4075
        %5428 = vmatprep.mubr.bf16.mxu0 %v742
        %5429 = vmatmul.mubr.bf16.gmra.mrb[0].mxu0 %v741
        %v5430 = vpop.f32.mrb[0].mxu0
        %v5431 = vadd.f32 %v5391, %v5430
        %v5432 = vpop.f32.mrb[0].mxu0
        %v5433 = vpop.f32.mrb[0].mxu0
        %v5434 = vpop.f32.mrb[0].mxu0
        %5435 = vdwg.mxu0
        %5436 = vmatprep.subr.bf16.mxu0 0
        %5437 = vmatpush1.bf16.msra.mxu0 %v4076
        %5438 = vmatprep.subr.bf16.mxu0 0
        %5439 = vmatpush1.bf16.msra.mxu0 %v4077
        %5440 = vmatprep.subr.bf16.mxu0 0
        %5441 = vmatpush1.bf16.msra.mxu0 %v4078
        %5442 = vmatprep.subr.bf16.mxu0 0
        %5443 = vmatpush1.bf16.msra.mxu0 %v4079
        %5444 = vmatprep.subr.bf16.mxu0 0
        %5445 = vmatpush1.bf16.msra.mxu0 %v4080
        %5446 = vmatprep.subr.bf16.mxu0 0
        %5447 = vmatpush1.bf16.msra.mxu0 %v4081
        %5448 = vmatprep.subr.bf16.mxu0 0
        %5449 = vmatpush1.bf16.msra.mxu0 %v4082
        %5450 = vmatprep.subr.bf16.mxu0 0
        %5451 = vmatpush1.bf16.msra.mxu0 %v4083
        %5452 = vmatprep.subr.bf16.mxu0 0
        %5453 = vmatpush1.bf16.msra.mxu0 %v4084
        %5454 = vmatprep.subr.bf16.mxu0 0
        %5455 = vmatpush1.bf16.msra.mxu0 %v4085
        %5456 = vmatprep.subr.bf16.mxu0 0
        %5457 = vmatpush1.bf16.msra.mxu0 %v4086
        %5458 = vmatprep.subr.bf16.mxu0 0
        %5459 = vmatpush1.bf16.msra.mxu0 %v4087
        %5460 = vmatprep.subr.bf16.mxu0 0
        %5461 = vmatpush1.bf16.msra.mxu0 %v4088
        %5462 = vmatprep.subr.bf16.mxu0 0
        %5463 = vmatpush1.bf16.msra.mxu0 %v4089
        %5464 = vmatprep.subr.bf16.mxu0 0
        %5465 = vmatpush1.bf16.msra.mxu0 %v4090
        %5466 = vmatprep.subr.bf16.mxu0 0
        %5467 = vmatpush1.bf16.msra.mxu0 %v4091
        %5468 = vmatprep.mubr.bf16.mxu0 %v744
        %5469 = vmatmul.mubr.bf16.gmra.mrb[0].mxu0 %v743
        %v5470 = vpop.f32.mrb[0].mxu0
        %v5471 = vadd.f32 %v5431, %v5470
        %v5472 = vpop.f32.mrb[0].mxu0
        %v5473 = vpop.f32.mrb[0].mxu0
        %v5474 = vpop.f32.mrb[0].mxu0
        %5475 = vdwg.mxu0
        %5476 = vmatprep.subr.bf16.mxu0 0
        %5477 = vmatpush1.bf16.msra.mxu0 %v4092
        %5478 = vmatprep.subr.bf16.mxu0 0
        %5479 = vmatpush1.bf16.msra.mxu0 %v4093
        %5480 = vmatprep.subr.bf16.mxu0 0
        %5481 = vmatpush1.bf16.msra.mxu0 %v4094
        %5482 = vmatprep.subr.bf16.mxu0 0
        %5483 = vmatpush1.bf16.msra.mxu0 %v4095
        %5484 = vmatprep.subr.bf16.mxu0 0
        %5485 = vmatpush1.bf16.msra.mxu0 %v4096
        %5486 = vmatprep.subr.bf16.mxu0 0
        %5487 = vmatpush1.bf16.msra.mxu0 %v4097
        %5488 = vmatprep.subr.bf16.mxu0 0
        %5489 = vmatpush1.bf16.msra.mxu0 %v4098
        %5490 = vmatprep.subr.bf16.mxu0 0
        %5491 = vmatpush1.bf16.msra.mxu0 %v4099
        %5492 = vmatprep.subr.bf16.mxu0 0
        %5493 = vmatpush1.bf16.msra.mxu0 %v4100
        %5494 = vmatprep.subr.bf16.mxu0 0
        %5495 = vmatpush1.bf16.msra.mxu0 %v4101
        %5496 = vmatprep.subr.bf16.mxu0 0
        %5497 = vmatpush1.bf16.msra.mxu0 %v4102
        %5498 = vmatprep.subr.bf16.mxu0 0
        %5499 = vmatpush1.bf16.msra.mxu0 %v4103
        %5500 = vmatprep.subr.bf16.mxu0 0
        %5501 = vmatpush1.bf16.msra.mxu0 %v4104
        %5502 = vmatprep.subr.bf16.mxu0 0
        %5503 = vmatpush1.bf16.msra.mxu0 %v4105
        %5504 = vmatprep.subr.bf16.mxu0 0
        %5505 = vmatpush1.bf16.msra.mxu0 %v4106
        %5506 = vmatprep.subr.bf16.mxu0 0
        %5507 = vmatpush1.bf16.msra.mxu0 %v4107
        %5508 = vmatprep.mubr.bf16.mxu0 %v746
        %5509 = vmatmul.mubr.bf16.gmra.mrb[0].mxu0 %v745
        %v5510 = vpop.f32.mrb[0].mxu0
        %v5511 = vadd.f32 %v5471, %v5510
        %v5512 = vpop.f32.mrb[0].mxu0
        %v5513 = vpop.f32.mrb[0].mxu0
        %v5514 = vpop.f32.mrb[0].mxu0
        %5515 = vdwg.mxu0
        %5516 = vmatprep.subr.bf16.mxu0 0
        %5517 = vmatpush1.bf16.msra.mxu0 %v4108
        %5518 = vmatprep.subr.bf16.mxu0 0
        %5519 = vmatpush1.bf16.msra.mxu0 %v4109
        %5520 = vmatprep.subr.bf16.mxu0 0
        %5521 = vmatpush1.bf16.msra.mxu0 %v4110
        %5522 = vmatprep.subr.bf16.mxu0 0
        %5523 = vmatpush1.bf16.msra.mxu0 %v4111
        %5524 = vmatprep.subr.bf16.mxu0 0
        %5525 = vmatpush1.bf16.msra.mxu0 %v4112
        %5526 = vmatprep.subr.bf16.mxu0 0
        %5527 = vmatpush1.bf16.msra.mxu0 %v4113
        %5528 = vmatprep.subr.bf16.mxu0 0
        %5529 = vmatpush1.bf16.msra.mxu0 %v4114
        %5530 = vmatprep.subr.bf16.mxu0 0
        %5531 = vmatpush1.bf16.msra.mxu0 %v4115
        %5532 = vmatprep.subr.bf16.mxu0 0
        %5533 = vmatpush1.bf16.msra.mxu0 %v4116
        %5534 = vmatprep.subr.bf16.mxu0 0
        %5535 = vmatpush1.bf16.msra.mxu0 %v4117
        %5536 = vmatprep.subr.bf16.mxu0 0
        %5537 = vmatpush1.bf16.msra.mxu0 %v4118
        %5538 = vmatprep.subr.bf16.mxu0 0
        %5539 = vmatpush1.bf16.msra.mxu0 %v4119
        %5540 = vmatprep.subr.bf16.mxu0 0
        %5541 = vmatpush1.bf16.msra.mxu0 %v4120
        %5542 = vmatprep.subr.bf16.mxu0 0
        %5543 = vmatpush1.bf16.msra.mxu0 %v4121
        %5544 = vmatprep.subr.bf16.mxu0 0
        %5545 = vmatpush1.bf16.msra.mxu0 %v4122
        %5546 = vmatprep.subr.bf16.mxu0 0
        %5547 = vmatpush1.bf16.msra.mxu0 %v4123
        %5548 = vmatprep.mubr.bf16.mxu0 %v748
        %5549 = vmatmul.mubr.bf16.gmra.mrb[0].mxu0 %v747
        %v5550 = vpop.f32.mrb[0].mxu0
        %v5551 = vadd.f32 %v5511, %v5550
        %v5552 = vpop.f32.mrb[0].mxu0
        %v5553 = vpop.f32.mrb[0].mxu0
        %v5554 = vpop.f32.mrb[0].mxu0
        %5555 = vdwg.mxu0
        %5556 = vmatprep.subr.bf16.mxu0 0
        %5557 = vmatpush1.bf16.msra.mxu0 %v4124
        %5558 = vmatprep.subr.bf16.mxu0 0
        %5559 = vmatpush1.bf16.msra.mxu0 %v4125
        %5560 = vmatprep.subr.bf16.mxu0 0
        %5561 = vmatpush1.bf16.msra.mxu0 %v4126
        %5562 = vmatprep.subr.bf16.mxu0 0
        %5563 = vmatpush1.bf16.msra.mxu0 %v4127
        %5564 = vmatprep.subr.bf16.mxu0 0
        %5565 = vmatpush1.bf16.msra.mxu0 %v4128
        %5566 = vmatprep.subr.bf16.mxu0 0
        %5567 = vmatpush1.bf16.msra.mxu0 %v4129
        %5568 = vmatprep.subr.bf16.mxu0 0
        %5569 = vmatpush1.bf16.msra.mxu0 %v4130
        %5570 = vmatprep.subr.bf16.mxu0 0
        %5571 = vmatpush1.bf16.msra.mxu0 %v4131
        %5572 = vmatprep.subr.bf16.mxu0 0
        %5573 = vmatpush1.bf16.msra.mxu0 %v4132
        %5574 = vmatprep.subr.bf16.mxu0 0
        %5575 = vmatpush1.bf16.msra.mxu0 %v4133
        %5576 = vmatprep.subr.bf16.mxu0 0
        %5577 = vmatpush1.bf16.msra.mxu0 %v4134
        %5578 = vmatprep.subr.bf16.mxu0 0
        %5579 = vmatpush1.bf16.msra.mxu0 %v4135
        %5580 = vmatprep.subr.bf16.mxu0 0
        %5581 = vmatpush1.bf16.msra.mxu0 %v4136
        %5582 = vmatprep.subr.bf16.mxu0 0
        %5583 = vmatpush1.bf16.msra.mxu0 %v4137
        %5584 = vmatprep.subr.bf16.mxu0 0
        %5585 = vmatpush1.bf16.msra.mxu0 %v4138
        %5586 = vmatprep.subr.bf16.mxu0 0
        %5587 = vmatpush1.bf16.msra.mxu0 %v4139
        %5588 = vmatprep.mubr.bf16.mxu0 %v750
        %5589 = vmatmul.mubr.bf16.gmra.mrb[0].mxu0 %v749
        %v5590 = vpop.f32.mrb[0].mxu0
        %v5591 = vadd.f32 %v5551, %v5590
        %v5592 = vpop.f32.mrb[0].mxu0
        %v5593 = vpop.f32.mrb[0].mxu0
        %v5594 = vpop.f32.mrb[0].mxu0
        %5595 = vdwg.mxu0
        %5596 = vmatprep.subr.bf16.mxu0 0
        %5597 = vmatpush1.bf16.msra.mxu0 %v4140
        %5598 = vmatprep.subr.bf16.mxu0 0
        %5599 = vmatpush1.bf16.msra.mxu0 %v4141
        %5600 = vmatprep.subr.bf16.mxu0 0
        %5601 = vmatpush1.bf16.msra.mxu0 %v4142
        %5602 = vmatprep.subr.bf16.mxu0 0
        %5603 = vmatpush1.bf16.msra.mxu0 %v4143
        %5604 = vmatprep.subr.bf16.mxu0 0
        %5605 = vmatpush1.bf16.msra.mxu0 %v4144
        %5606 = vmatprep.subr.bf16.mxu0 0
        %5607 = vmatpush1.bf16.msra.mxu0 %v4145
        %5608 = vmatprep.subr.bf16.mxu0 0
        %5609 = vmatpush1.bf16.msra.mxu0 %v4146
        %5610 = vmatprep.subr.bf16.mxu0 0
        %5611 = vmatpush1.bf16.msra.mxu0 %v4147
        %5612 = vmatprep.subr.bf16.mxu0 0
        %5613 = vmatpush1.bf16.msra.mxu0 %v4148
        %5614 = vmatprep.subr.bf16.mxu0 0
        %5615 = vmatpush1.bf16.msra.mxu0 %v4149
        %5616 = vmatprep.subr.bf16.mxu0 0
        %5617 = vmatpush1.bf16.msra.mxu0 %v4150
        %5618 = vmatprep.subr.bf16.mxu0 0
        %5619 = vmatpush1.bf16.msra.mxu0 %v4151
        %5620 = vmatprep.subr.bf16.mxu0 0
        %5621 = vmatpush1.bf16.msra.mxu0 %v4152
        %5622 = vmatprep.subr.bf16.mxu0 0
        %5623 = vmatpush1.bf16.msra.mxu0 %v4153
        %5624 = vmatprep.subr.bf16.mxu0 0
        %5625 = vmatpush1.bf16.msra.mxu0 %v4154
        %5626 = vmatprep.subr.bf16.mxu0 0
        %5627 = vmatpush1.bf16.msra.mxu0 %v4155
        %5628 = vmatprep.mubr.bf16.mxu0 %v752
        %5629 = vmatmul.mubr.bf16.gmra.mrb[0].mxu0 %v751
        %v5630 = vpop.f32.mrb[0].mxu0
        %v5631 = vadd.f32 %v5591, %v5630
        %v5632 = vpop.f32.mrb[0].mxu0
        %v5633 = vpop.f32.mrb[0].mxu0
        %v5634 = vpop.f32.mrb[0].mxu0
        %5635 = vdwg.mxu0
        %5636 = vmatprep.subr.bf16.mxu0 0
        %5637 = vmatpush1.bf16.msra.mxu0 %v4156
        %5638 = vmatprep.subr.bf16.mxu0 0
        %5639 = vmatpush1.bf16.msra.mxu0 %v4157
        %5640 = vmatprep.subr.bf16.mxu0 0
        %5641 = vmatpush1.bf16.msra.mxu0 %v4158
        %5642 = vmatprep.subr.bf16.mxu0 0
        %5643 = vmatpush1.bf16.msra.mxu0 %v4159
        %5644 = vmatprep.subr.bf16.mxu0 0
        %5645 = vmatpush1.bf16.msra.mxu0 %v4160
        %5646 = vmatprep.subr.bf16.mxu0 0
        %5647 = vmatpush1.bf16.msra.mxu0 %v4161
        %5648 = vmatprep.subr.bf16.mxu0 0
        %5649 = vmatpush1.bf16.msra.mxu0 %v4162
        %5650 = vmatprep.subr.bf16.mxu0 0
        %5651 = vmatpush1.bf16.msra.mxu0 %v4163
        %5652 = vmatprep.subr.bf16.mxu0 0
        %5653 = vmatpush1.bf16.msra.mxu0 %v4164
        %5654 = vmatprep.subr.bf16.mxu0 0
        %5655 = vmatpush1.bf16.msra.mxu0 %v4165
        %5656 = vmatprep.subr.bf16.mxu0 0
        %5657 = vmatpush1.bf16.msra.mxu0 %v4166
        %5658 = vmatprep.subr.bf16.mxu0 0
        %5659 = vmatpush1.bf16.msra.mxu0 %v4167
        %5660 = vmatprep.subr.bf16.mxu0 0
        %5661 = vmatpush1.bf16.msra.mxu0 %v4168
        %5662 = vmatprep.subr.bf16.mxu0 0
        %5663 = vmatpush1.bf16.msra.mxu0 %v4169
        %5664 = vmatprep.subr.bf16.mxu0 0
        %5665 = vmatpush1.bf16.msra.mxu0 %v4170
        %5666 = vmatprep.subr.bf16.mxu0 0
        %5667 = vmatpush1.bf16.msra.mxu0 %v4171
        %5668 = vmatprep.mubr.bf16.mxu0 %v754
        %5669 = vmatmul.mubr.bf16.gmra.mrb[0].mxu0 %v753
        %v5670 = vpop.f32.mrb[0].mxu0
        %v5671 = vadd.f32 %v5631, %v5670
        %v5672 = vpop.f32.mrb[0].mxu0
        %v5673 = vpop.f32.mrb[0].mxu0
        %v5674 = vpop.f32.mrb[0].mxu0
        %5675 = vdwg.mxu0
        %5676 = vmatprep.subr.bf16.mxu0 0
        %5677 = vmatpush1.bf16.msra.mxu0 %v4172
        %5678 = vmatprep.subr.bf16.mxu0 0
        %5679 = vmatpush1.bf16.msra.mxu0 %v4173
        %5680 = vmatprep.subr.bf16.mxu0 0
        %5681 = vmatpush1.bf16.msra.mxu0 %v4174
        %5682 = vmatprep.subr.bf16.mxu0 0
        %5683 = vmatpush1.bf16.msra.mxu0 %v4175
        %5684 = vmatprep.subr.bf16.mxu0 0
        %5685 = vmatpush1.bf16.msra.mxu0 %v4176
        %5686 = vmatprep.subr.bf16.mxu0 0
        %5687 = vmatpush1.bf16.msra.mxu0 %v4177
        %5688 = vmatprep.subr.bf16.mxu0 0
        %5689 = vmatpush1.bf16.msra.mxu0 %v4178
        %5690 = vmatprep.subr.bf16.mxu0 0
        %5691 = vmatpush1.bf16.msra.mxu0 %v4179
        %5692 = vmatprep.subr.bf16.mxu0 0
        %5693 = vmatpush1.bf16.msra.mxu0 %v4180
        %5694 = vmatprep.subr.bf16.mxu0 0
        %5695 = vmatpush1.bf16.msra.mxu0 %v4181
        %5696 = vmatprep.subr.bf16.mxu0 0
        %5697 = vmatpush1.bf16.msra.mxu0 %v4182
        %5698 = vmatprep.subr.bf16.mxu0 0
        %5699 = vmatpush1.bf16.msra.mxu0 %v4183
        %5700 = vmatprep.subr.bf16.mxu0 0
        %5701 = vmatpush1.bf16.msra.mxu0 %v4184
        %5702 = vmatprep.subr.bf16.mxu0 0
        %5703 = vmatpush1.bf16.msra.mxu0 %v4185
        %5704 = vmatprep.subr.bf16.mxu0 0
        %5705 = vmatpush1.bf16.msra.mxu0 %v4186
        %5706 = vmatprep.subr.bf16.mxu0 0
        %5707 = vmatpush1.bf16.msra.mxu0 %v4187
        %5708 = vmatprep.mubr.bf16.mxu0 %v756
        %5709 = vmatmul.mubr.bf16.gmra.mrb[0].mxu0 %v755
        %v5710 = vpop.f32.mrb[0].mxu0
        %v5711 = vadd.f32 %v5671, %v5710
        %v5712 = vpop.f32.mrb[0].mxu0
        %v5713 = vpop.f32.mrb[0].mxu0
        %v5714 = vpop.f32.mrb[0].mxu0
        %5715 = vdwg.mxu0
        %5716 = vmatprep.subr.bf16.mxu0 0
        %5717 = vmatpush1.bf16.msra.mxu0 %v4188
        %5718 = vmatprep.subr.bf16.mxu0 0
        %5719 = vmatpush1.bf16.msra.mxu0 %v4189
        %5720 = vmatprep.subr.bf16.mxu0 0
        %5721 = vmatpush1.bf16.msra.mxu0 %v4190
        %5722 = vmatprep.subr.bf16.mxu0 0
        %5723 = vmatpush1.bf16.msra.mxu0 %v4191
        %5724 = vmatprep.subr.bf16.mxu0 0
        %5725 = vmatpush1.bf16.msra.mxu0 %v4192
        %5726 = vmatprep.subr.bf16.mxu0 0
        %5727 = vmatpush1.bf16.msra.mxu0 %v4193
        %5728 = vmatprep.subr.bf16.mxu0 0
        %5729 = vmatpush1.bf16.msra.mxu0 %v4194
        %5730 = vmatprep.subr.bf16.mxu0 0
        %5731 = vmatpush1.bf16.msra.mxu0 %v4195
        %5732 = vmatprep.subr.bf16.mxu0 0
        %5733 = vmatpush1.bf16.msra.mxu0 %v4196
        %5734 = vmatprep.subr.bf16.mxu0 0
        %5735 = vmatpush1.bf16.msra.mxu0 %v4197
        %5736 = vmatprep.subr.bf16.mxu0 0
        %5737 = vmatpush1.bf16.msra.mxu0 %v4198
        %5738 = vmatprep.subr.bf16.mxu0 0
        %5739 = vmatpush1.bf16.msra.mxu0 %v4199
        %5740 = vmatprep.subr.bf16.mxu0 0
        %5741 = vmatpush1.bf16.msra.mxu0 %v4200
        %5742 = vmatprep.subr.bf16.mxu0 0
        %5743 = vmatpush1.bf16.msra.mxu0 %v4201
        %5744 = vmatprep.subr.bf16.mxu0 0
        %5745 = vmatpush1.bf16.msra.mxu0 %v4202
        %5746 = vmatprep.subr.bf16.mxu0 0
        %5747 = vmatpush1.bf16.msra.mxu0 %v4203
        %5748 = vmatprep.mubr.bf16.mxu0 %v758
        %5749 = vmatmul.mubr.bf16.gmra.mrb[0].mxu0 %v757
        %v5750 = vpop.f32.mrb[0].mxu0
        %v5751 = vadd.f32 %v5711, %v5750
        %v5752 = vpop.f32.mrb[0].mxu0
        %v5753 = vpop.f32.mrb[0].mxu0
        %v5754 = vpop.f32.mrb[0].mxu0
        %5755 = vdwg.mxu0
        %5756 = vmatprep.subr.bf16.mxu0 0
        %5757 = vmatpush1.bf16.msra.mxu0 %v4204
        %5758 = vmatprep.subr.bf16.mxu0 0
        %5759 = vmatpush1.bf16.msra.mxu0 %v4205
        %5760 = vmatprep.subr.bf16.mxu0 0
        %5761 = vmatpush1.bf16.msra.mxu0 %v4206
        %5762 = vmatprep.subr.bf16.mxu0 0
        %5763 = vmatpush1.bf16.msra.mxu0 %v4207
        %5764 = vmatprep.subr.bf16.mxu0 0
        %5765 = vmatpush1.bf16.msra.mxu0 %v4208
        %5766 = vmatprep.subr.bf16.mxu0 0
        %5767 = vmatpush1.bf16.msra.mxu0 %v4209
        %5768 = vmatprep.subr.bf16.mxu0 0
        %5769 = vmatpush1.bf16.msra.mxu0 %v4210
        %5770 = vmatprep.subr.bf16.mxu0 0
        %5771 = vmatpush1.bf16.msra.mxu0 %v4211
        %5772 = vmatprep.subr.bf16.mxu0 0
        %5773 = vmatpush1.bf16.msra.mxu0 %v4212
        %5774 = vmatprep.subr.bf16.mxu0 0
        %5775 = vmatpush1.bf16.msra.mxu0 %v4213
        %5776 = vmatprep.subr.bf16.mxu0 0
        %5777 = vmatpush1.bf16.msra.mxu0 %v4214
        %5778 = vmatprep.subr.bf16.mxu0 0
        %5779 = vmatpush1.bf16.msra.mxu0 %v4215
        %5780 = vmatprep.subr.bf16.mxu0 0
        %5781 = vmatpush1.bf16.msra.mxu0 %v4216
        %5782 = vmatprep.subr.bf16.mxu0 0
        %5783 = vmatpush1.bf16.msra.mxu0 %v4217
        %5784 = vmatprep.subr.bf16.mxu0 0
        %5785 = vmatpush1.bf16.msra.mxu0 %v4218
        %5786 = vmatprep.subr.bf16.mxu0 0
        %5787 = vmatpush1.bf16.msra.mxu0 %v4219
        %5788 = vmatprep.mubr.bf16.mxu0 %v760
        %5789 = vmatmul.mubr.bf16.gmra.mrb[0].mxu0 %v759
        %v5790 = vpop.f32.mrb[0].mxu0
        %v5791 = vadd.f32 %v5751, %v5790
        %v5792 = vpop.f32.mrb[0].mxu0
        %v5793 = vpop.f32.mrb[0].mxu0
        %v5794 = vpop.f32.mrb[0].mxu0
        %5795 = vdwg.mxu0
        %5796 = vmatprep.subr.bf16.mxu0 0
        %5797 = vmatpush1.bf16.msra.mxu0 %v4220
        %5798 = vmatprep.subr.bf16.mxu0 0
        %5799 = vmatpush1.bf16.msra.mxu0 %v4221
        %5800 = vmatprep.subr.bf16.mxu0 0
        %5801 = vmatpush1.bf16.msra.mxu0 %v4222
        %5802 = vmatprep.subr.bf16.mxu0 0
        %5803 = vmatpush1.bf16.msra.mxu0 %v4223
        %5804 = vmatprep.subr.bf16.mxu0 0
        %5805 = vmatpush1.bf16.msra.mxu0 %v4224
        %5806 = vmatprep.subr.bf16.mxu0 0
        %5807 = vmatpush1.bf16.msra.mxu0 %v4225
        %5808 = vmatprep.subr.bf16.mxu0 0
        %5809 = vmatpush1.bf16.msra.mxu0 %v4226
        %5810 = vmatprep.subr.bf16.mxu0 0
        %5811 = vmatpush1.bf16.msra.mxu0 %v4227
        %5812 = vmatprep.subr.bf16.mxu0 0
        %5813 = vmatpush1.bf16.msra.mxu0 %v4228
        %5814 = vmatprep.subr.bf16.mxu0 0
        %5815 = vmatpush1.bf16.msra.mxu0 %v4229
        %5816 = vmatprep.subr.bf16.mxu0 0
        %5817 = vmatpush1.bf16.msra.mxu0 %v4230
        %5818 = vmatprep.subr.bf16.mxu0 0
        %5819 = vmatpush1.bf16.msra.mxu0 %v4231
        %5820 = vmatprep.subr.bf16.mxu0 0
        %5821 = vmatpush1.bf16.msra.mxu0 %v4232
        %5822 = vmatprep.subr.bf16.mxu0 0
        %5823 = vmatpush1.bf16.msra.mxu0 %v4233
        %5824 = vmatprep.subr.bf16.mxu0 0
        %5825 = vmatpush1.bf16.msra.mxu0 %v4234
        %5826 = vmatprep.subr.bf16.mxu0 0
        %5827 = vmatpush1.bf16.msra.mxu0 %v4235
        %5828 = vmatprep.mubr.bf16.mxu0 %v762
        %5829 = vmatmul.mubr.bf16.gmra.mrb[0].mxu0 %v761
        %v5830 = vpop.f32.mrb[0].mxu0
        %v5831 = vadd.f32 %v5791, %v5830
        %v5832 = vpop.f32.mrb[0].mxu0
        %v5833 = vpop.f32.mrb[0].mxu0
        %v5834 = vpop.f32.mrb[0].mxu0
        %5835 = vdwg.mxu0
        %5836 = vmatprep.subr.bf16.mxu0 0
        %5837 = vmatpush1.bf16.msra.mxu0 %v4236
        %5838 = vmatprep.subr.bf16.mxu0 0
        %5839 = vmatpush1.bf16.msra.mxu0 %v4237
        %5840 = vmatprep.subr.bf16.mxu0 0
        %5841 = vmatpush1.bf16.msra.mxu0 %v4238
        %5842 = vmatprep.subr.bf16.mxu0 0
        %5843 = vmatpush1.bf16.msra.mxu0 %v4239
        %5844 = vmatprep.subr.bf16.mxu0 0
        %5845 = vmatpush1.bf16.msra.mxu0 %v4240
        %5846 = vmatprep.subr.bf16.mxu0 0
        %5847 = vmatpush1.bf16.msra.mxu0 %v4241
        %5848 = vmatprep.subr.bf16.mxu0 0
        %5849 = vmatpush1.bf16.msra.mxu0 %v4242
        %5850 = vmatprep.subr.bf16.mxu0 0
        %5851 = vmatpush1.bf16.msra.mxu0 %v4243
        %5852 = vmatprep.subr.bf16.mxu0 0
        %5853 = vmatpush1.bf16.msra.mxu0 %v4244
        %5854 = vmatprep.subr.bf16.mxu0 0
        %5855 = vmatpush1.bf16.msra.mxu0 %v4245
        %5856 = vmatprep.subr.bf16.mxu0 0
        %5857 = vmatpush1.bf16.msra.mxu0 %v4246
        %5858 = vmatprep.subr.bf16.mxu0 0
        %5859 = vmatpush1.bf16.msra.mxu0 %v4247
        %5860 = vmatprep.subr.bf16.mxu0 0
        %5861 = vmatpush1.bf16.msra.mxu0 %v4248
        %5862 = vmatprep.subr.bf16.mxu0 0
        %5863 = vmatpush1.bf16.msra.mxu0 %v4249
        %5864 = vmatprep.subr.bf16.mxu0 0
        %5865 = vmatpush1.bf16.msra.mxu0 %v4250
        %5866 = vmatprep.subr.bf16.mxu0 0
        %5867 = vmatpush1.bf16.msra.mxu0 %v4251
        %5868 = vmatprep.mubr.bf16.mxu0 %v764
        %5869 = vmatmul.mubr.bf16.gmra.mrb[0].mxu0 %v763
        %v5870 = vpop.f32.mrb[0].mxu0
        %v5871 = vadd.f32 %v5831, %v5870
        %v5872 = vpop.f32.mrb[0].mxu0
        %v5873 = vpop.f32.mrb[0].mxu0
        %v5874 = vpop.f32.mrb[0].mxu0
        %5875 = vdwg.mxu0
        %5876 = vmatprep.subr.bf16.mxu0 0
        %5877 = vmatpush1.bf16.msra.mxu0 %v4252
        %5878 = vmatprep.subr.bf16.mxu0 0
        %5879 = vmatpush1.bf16.msra.mxu0 %v4253
        %5880 = vmatprep.subr.bf16.mxu0 0
        %5881 = vmatpush1.bf16.msra.mxu0 %v4254
        %5882 = vmatprep.subr.bf16.mxu0 0
        %5883 = vmatpush1.bf16.msra.mxu0 %v4255
        %5884 = vmatprep.subr.bf16.mxu0 0
        %5885 = vmatpush1.bf16.msra.mxu0 %v4256
        %5886 = vmatprep.subr.bf16.mxu0 0
        %5887 = vmatpush1.bf16.msra.mxu0 %v4257
        %5888 = vmatprep.subr.bf16.mxu0 0
        %5889 = vmatpush1.bf16.msra.mxu0 %v4258
        %5890 = vmatprep.subr.bf16.mxu0 0
        %5891 = vmatpush1.bf16.msra.mxu0 %v4259
        %5892 = vmatprep.subr.bf16.mxu0 0
        %5893 = vmatpush1.bf16.msra.mxu0 %v4260
        %5894 = vmatprep.subr.bf16.mxu0 0
        %5895 = vmatpush1.bf16.msra.mxu0 %v4261
        %5896 = vmatprep.subr.bf16.mxu0 0
        %5897 = vmatpush1.bf16.msra.mxu0 %v4262
        %5898 = vmatprep.subr.bf16.mxu0 0
        %5899 = vmatpush1.bf16.msra.mxu0 %v4263
        %5900 = vmatprep.subr.bf16.mxu0 0
        %5901 = vmatpush1.bf16.msra.mxu0 %v4264
        %5902 = vmatprep.subr.bf16.mxu0 0
        %5903 = vmatpush1.bf16.msra.mxu0 %v4265
        %5904 = vmatprep.subr.bf16.mxu0 0
        %5905 = vmatpush1.bf16.msra.mxu0 %v4266
        %5906 = vmatprep.subr.bf16.mxu0 0
        %5907 = vmatpush1.bf16.msra.mxu0 %v4267
        %5908 = vmatprep.mubr.bf16.mxu0 %v766
        %5909 = vmatmul.mubr.bf16.gmra.mrb[0].mxu0 %v765
        %v5910 = vpop.f32.mrb[0].mxu0
        %v5911 = vadd.f32 %v5871, %v5910
        %v5912 = vpop.f32.mrb[0].mxu0
        %v5913 = vpop.f32.mrb[0].mxu0
        %v5914 = vpop.f32.mrb[0].mxu0
        %5915 = vdwg.mxu0
        %5916 = vmatprep.subr.bf16.mxu0 0
        %5917 = vmatpush1.bf16.msra.mxu0 %v4268
        %5918 = vmatprep.subr.bf16.mxu0 0
        %5919 = vmatpush1.bf16.msra.mxu0 %v4269
        %5920 = vmatprep.subr.bf16.mxu0 0
        %5921 = vmatpush1.bf16.msra.mxu0 %v4270
        %5922 = vmatprep.subr.bf16.mxu0 0
        %5923 = vmatpush1.bf16.msra.mxu0 %v4271
        %5924 = vmatprep.subr.bf16.mxu0 0
        %5925 = vmatpush1.bf16.msra.mxu0 %v4272
        %5926 = vmatprep.subr.bf16.mxu0 0
        %5927 = vmatpush1.bf16.msra.mxu0 %v4273
        %5928 = vmatprep.subr.bf16.mxu0 0
        %5929 = vmatpush1.bf16.msra.mxu0 %v4274
        %5930 = vmatprep.subr.bf16.mxu0 0
        %5931 = vmatpush1.bf16.msra.mxu0 %v4275
        %5932 = vmatprep.subr.bf16.mxu0 0
        %5933 = vmatpush1.bf16.msra.mxu0 %v4276
        %5934 = vmatprep.subr.bf16.mxu0 0
        %5935 = vmatpush1.bf16.msra.mxu0 %v4277
        %5936 = vmatprep.subr.bf16.mxu0 0
        %5937 = vmatpush1.bf16.msra.mxu0 %v4278
        %5938 = vmatprep.subr.bf16.mxu0 0
        %5939 = vmatpush1.bf16.msra.mxu0 %v4279
        %5940 = vmatprep.subr.bf16.mxu0 0
        %5941 = vmatpush1.bf16.msra.mxu0 %v4280
        %5942 = vmatprep.subr.bf16.mxu0 0
        %5943 = vmatpush1.bf16.msra.mxu0 %v4281
        %5944 = vmatprep.subr.bf16.mxu0 0
        %5945 = vmatpush1.bf16.msra.mxu0 %v4282
        %5946 = vmatprep.subr.bf16.mxu0 0
        %5947 = vmatpush1.bf16.msra.mxu0 %v4283
        %5948 = vmatprep.mubr.bf16.mxu0 %v768
        %5949 = vmatmul.mubr.bf16.gmra.mrb[0].mxu0 %v767
        %v5950 = vpop.f32.mrb[0].mxu0
        %v5951 = vadd.f32 %v5911, %v5950
        %v5952 = vpop.f32.mrb[0].mxu0
        %v5953 = vpop.f32.mrb[0].mxu0
        %v5954 = vpop.f32.mrb[0].mxu0
        %5955 = vdwg.mxu0
        %5956 = vmatprep.subr.bf16.mxu0 0
        %5957 = vmatpush1.bf16.msra.mxu0 %v4284
        %5958 = vmatprep.subr.bf16.mxu0 0
        %5959 = vmatpush1.bf16.msra.mxu0 %v4285
        %5960 = vmatprep.subr.bf16.mxu0 0
        %5961 = vmatpush1.bf16.msra.mxu0 %v4286
        %5962 = vmatprep.subr.bf16.mxu0 0
        %5963 = vmatpush1.bf16.msra.mxu0 %v4287
        %5964 = vmatprep.subr.bf16.mxu0 0
        %5965 = vmatpush1.bf16.msra.mxu0 %v4288
        %5966 = vmatprep.subr.bf16.mxu0 0
        %5967 = vmatpush1.bf16.msra.mxu0 %v4289
        %5968 = vmatprep.subr.bf16.mxu0 0
        %5969 = vmatpush1.bf16.msra.mxu0 %v4290
        %5970 = vmatprep.subr.bf16.mxu0 0
        %5971 = vmatpush1.bf16.msra.mxu0 %v4291
        %5972 = vmatprep.subr.bf16.mxu0 0
        %5973 = vmatpush1.bf16.msra.mxu0 %v4292
        %5974 = vmatprep.subr.bf16.mxu0 0
        %5975 = vmatpush1.bf16.msra.mxu0 %v4293
        %5976 = vmatprep.subr.bf16.mxu0 0
        %5977 = vmatpush1.bf16.msra.mxu0 %v4294
        %5978 = vmatprep.subr.bf16.mxu0 0
        %5979 = vmatpush1.bf16.msra.mxu0 %v4295
        %5980 = vmatprep.subr.bf16.mxu0 0
        %5981 = vmatpush1.bf16.msra.mxu0 %v4296
        %5982 = vmatprep.subr.bf16.mxu0 0
        %5983 = vmatpush1.bf16.msra.mxu0 %v4297
        %5984 = vmatprep.subr.bf16.mxu0 0
        %5985 = vmatpush1.bf16.msra.mxu0 %v4298
        %5986 = vmatprep.subr.bf16.mxu0 0
        %5987 = vmatpush1.bf16.msra.mxu0 %v4299
        %5988 = vmatprep.mubr.bf16.mxu0 %v770
        %5989 = vmatmul.mubr.bf16.gmra.mrb[0].mxu0 %v769
        %v5990 = vpop.f32.mrb[0].mxu0
        %v5991 = vadd.f32 %v5951, %v5990
        %v5992 = vpop.f32.mrb[0].mxu0
        %v5993 = vpop.f32.mrb[0].mxu0
        %v5994 = vpop.f32.mrb[0].mxu0
        %5995 = vdwg.mxu0
        %5996 = vmatprep.subr.bf16.mxu0 0
        %5997 = vmatpush1.bf16.msra.mxu0 %v4300
        %5998 = vmatprep.subr.bf16.mxu0 0
        %5999 = vmatpush1.bf16.msra.mxu0 %v4301
        %6000 = vmatprep.subr.bf16.mxu0 0
        %6001 = vmatpush1.bf16.msra.mxu0 %v4302
        %6002 = vmatprep.subr.bf16.mxu0 0
        %6003 = vmatpush1.bf16.msra.mxu0 %v4303
        %6004 = vmatprep.subr.bf16.mxu0 0
        %6005 = vmatpush1.bf16.msra.mxu0 %v4304
        %6006 = vmatprep.subr.bf16.mxu0 0
        %6007 = vmatpush1.bf16.msra.mxu0 %v4305
        %6008 = vmatprep.subr.bf16.mxu0 0
        %6009 = vmatpush1.bf16.msra.mxu0 %v4306
        %6010 = vmatprep.subr.bf16.mxu0 0
        %6011 = vmatpush1.bf16.msra.mxu0 %v4307
        %6012 = vmatprep.subr.bf16.mxu0 0
        %6013 = vmatpush1.bf16.msra.mxu0 %v4308
        %6014 = vmatprep.subr.bf16.mxu0 0
        %6015 = vmatpush1.bf16.msra.mxu0 %v4309
        %6016 = vmatprep.subr.bf16.mxu0 0
        %6017 = vmatpush1.bf16.msra.mxu0 %v4310
        %6018 = vmatprep.subr.bf16.mxu0 0
        %6019 = vmatpush1.bf16.msra.mxu0 %v4311
        %6020 = vmatprep.subr.bf16.mxu0 0
        %6021 = vmatpush1.bf16.msra.mxu0 %v4312
        %6022 = vmatprep.subr.bf16.mxu0 0
        %6023 = vmatpush1.bf16.msra.mxu0 %v4313
        %6024 = vmatprep.subr.bf16.mxu0 0
        %6025 = vmatpush1.bf16.msra.mxu0 %v4314
        %6026 = vmatprep.subr.bf16.mxu0 0
        %6027 = vmatpush1.bf16.msra.mxu0 %v4315
        %6028 = vmatprep.mubr.bf16.mxu0 %v772
        %6029 = vmatmul.mubr.bf16.gmra.mrb[0].mxu0 %v771
        %v6030 = vpop.f32.mrb[0].mxu0
        %v6031 = vadd.f32 %v5991, %v6030
        %v6032 = vpop.f32.mrb[0].mxu0
        %v6033 = vpop.f32.mrb[0].mxu0
        %v6034 = vpop.f32.mrb[0].mxu0
        %6035 = vdwg.mxu0
        %6036 = vmatprep.subr.bf16.mxu0 0
        %6037 = vmatpush1.bf16.msra.mxu0 %v4316
        %6038 = vmatprep.subr.bf16.mxu0 0
        %6039 = vmatpush1.bf16.msra.mxu0 %v4317
        %6040 = vmatprep.subr.bf16.mxu0 0
        %6041 = vmatpush1.bf16.msra.mxu0 %v4318
        %6042 = vmatprep.subr.bf16.mxu0 0
        %6043 = vmatpush1.bf16.msra.mxu0 %v4319
        %6044 = vmatprep.subr.bf16.mxu0 0
        %6045 = vmatpush1.bf16.msra.mxu0 %v4320
        %6046 = vmatprep.subr.bf16.mxu0 0
        %6047 = vmatpush1.bf16.msra.mxu0 %v4321
        %6048 = vmatprep.subr.bf16.mxu0 0
        %6049 = vmatpush1.bf16.msra.mxu0 %v4322
        %6050 = vmatprep.subr.bf16.mxu0 0
        %6051 = vmatpush1.bf16.msra.mxu0 %v4323
        %6052 = vmatprep.subr.bf16.mxu0 0
        %6053 = vmatpush1.bf16.msra.mxu0 %v4324
        %6054 = vmatprep.subr.bf16.mxu0 0
        %6055 = vmatpush1.bf16.msra.mxu0 %v4325
        %6056 = vmatprep.subr.bf16.mxu0 0
        %6057 = vmatpush1.bf16.msra.mxu0 %v4326
        %6058 = vmatprep.subr.bf16.mxu0 0
        %6059 = vmatpush1.bf16.msra.mxu0 %v4327
        %6060 = vmatprep.subr.bf16.mxu0 0
        %6061 = vmatpush1.bf16.msra.mxu0 %v4328
        %6062 = vmatprep.subr.bf16.mxu0 0
        %6063 = vmatpush1.bf16.msra.mxu0 %v4329
        %6064 = vmatprep.subr.bf16.mxu0 0
        %6065 = vmatpush1.bf16.msra.mxu0 %v4330
        %6066 = vmatprep.subr.bf16.mxu0 0
        %6067 = vmatpush1.bf16.msra.mxu0 %v4331
        %6068 = vmatprep.mubr.bf16.mxu0 %v774
        %6069 = vmatmul.mubr.bf16.gmra.mrb[0].mxu0 %v773
        %v6070 = vpop.f32.mrb[0].mxu0
        %v6071 = vadd.f32 %v6031, %v6070
        %v6072 = vpop.f32.mrb[0].mxu0
        %v6073 = vpop.f32.mrb[0].mxu0
        %v6074 = vpop.f32.mrb[0].mxu0
        %6075 = vdwg.mxu0
        %6076 = vmatprep.subr.bf16.mxu0 0
        %6077 = vmatpush1.bf16.msra.mxu0 %v4332
        %6078 = vmatprep.subr.bf16.mxu0 0
        %6079 = vmatpush1.bf16.msra.mxu0 %v4333
        %6080 = vmatprep.subr.bf16.mxu0 0
        %6081 = vmatpush1.bf16.msra.mxu0 %v4334
        %6082 = vmatprep.subr.bf16.mxu0 0
        %6083 = vmatpush1.bf16.msra.mxu0 %v4335
        %6084 = vmatprep.subr.bf16.mxu0 0
        %6085 = vmatpush1.bf16.msra.mxu0 %v4336
        %6086 = vmatprep.subr.bf16.mxu0 0
        %6087 = vmatpush1.bf16.msra.mxu0 %v4337
        %6088 = vmatprep.subr.bf16.mxu0 0
        %6089 = vmatpush1.bf16.msra.mxu0 %v4338
        %6090 = vmatprep.subr.bf16.mxu0 0
        %6091 = vmatpush1.bf16.msra.mxu0 %v4339
        %6092 = vmatprep.subr.bf16.mxu0 0
        %6093 = vmatpush1.bf16.msra.mxu0 %v4340
        %6094 = vmatprep.subr.bf16.mxu0 0
        %6095 = vmatpush1.bf16.msra.mxu0 %v4341
        %6096 = vmatprep.subr.bf16.mxu0 0
        %6097 = vmatpush1.bf16.msra.mxu0 %v4342
        %6098 = vmatprep.subr.bf16.mxu0 0
        %6099 = vmatpush1.bf16.msra.mxu0 %v4343
        %6100 = vmatprep.subr.bf16.mxu0 0
        %6101 = vmatpush1.bf16.msra.mxu0 %v4344
        %6102 = vmatprep.subr.bf16.mxu0 0
        %6103 = vmatpush1.bf16.msra.mxu0 %v4345
        %6104 = vmatprep.subr.bf16.mxu0 0
        %6105 = vmatpush1.bf16.msra.mxu0 %v4346
        %6106 = vmatprep.subr.bf16.mxu0 0
        %6107 = vmatpush1.bf16.msra.mxu0 %v4347
        %6108 = vmatprep.mubr.bf16.mxu0 %v776
        %6109 = vmatmul.mubr.bf16.gmra.mrb[0].mxu0 %v775
        %v6110 = vpop.f32.mrb[0].mxu0
        %v6111 = vadd.f32 %v6071, %v6110
        %v6112 = vpop.f32.mrb[0].mxu0
        %v6113 = vpop.f32.mrb[0].mxu0
        %v6114 = vpop.f32.mrb[0].mxu0
        %6115 = vdwg.mxu0
        %6116 = vmatprep.subr.bf16.mxu0 0
        %6117 = vmatpush1.bf16.msra.mxu0 %v4348
        %6118 = vmatprep.subr.bf16.mxu0 0
        %6119 = vmatpush1.bf16.msra.mxu0 %v4349
        %6120 = vmatprep.subr.bf16.mxu0 0
        %6121 = vmatpush1.bf16.msra.mxu0 %v4350
        %6122 = vmatprep.subr.bf16.mxu0 0
        %6123 = vmatpush1.bf16.msra.mxu0 %v4351
        %6124 = vmatprep.subr.bf16.mxu0 0
        %6125 = vmatpush1.bf16.msra.mxu0 %v4352
        %6126 = vmatprep.subr.bf16.mxu0 0
        %6127 = vmatpush1.bf16.msra.mxu0 %v4353
        %6128 = vmatprep.subr.bf16.mxu0 0
        %6129 = vmatpush1.bf16.msra.mxu0 %v4354
        %6130 = vmatprep.subr.bf16.mxu0 0
        %6131 = vmatpush1.bf16.msra.mxu0 %v4355
        %6132 = vmatprep.subr.bf16.mxu0 0
        %6133 = vmatpush1.bf16.msra.mxu0 %v4356
        %6134 = vmatprep.subr.bf16.mxu0 0
        %6135 = vmatpush1.bf16.msra.mxu0 %v4357
        %6136 = vmatprep.subr.bf16.mxu0 0
        %6137 = vmatpush1.bf16.msra.mxu0 %v4358
        %6138 = vmatprep.subr.bf16.mxu0 0
        %6139 = vmatpush1.bf16.msra.mxu0 %v4359
        %6140 = vmatprep.subr.bf16.mxu0 0
        %6141 = vmatpush1.bf16.msra.mxu0 %v4360
        %6142 = vmatprep.subr.bf16.mxu0 0
        %6143 = vmatpush1.bf16.msra.mxu0 %v4361
        %6144 = vmatprep.subr.bf16.mxu0 0
        %6145 = vmatpush1.bf16.msra.mxu0 %v4362
        %6146 = vmatprep.subr.bf16.mxu0 0
        %6147 = vmatpush1.bf16.msra.mxu0 %v4363
        %6148 = vmatprep.mubr.bf16.mxu0 %v778
        %6149 = vmatmul.mubr.bf16.gmra.mrb[0].mxu0 %v777
        %v6150 = vpop.f32.mrb[0].mxu0
        %v6151 = vadd.f32 %v6111, %v6150
        %v6152 = vpop.f32.mrb[0].mxu0
        %v6153 = vpop.f32.mrb[0].mxu0
        %v6154 = vpop.f32.mrb[0].mxu0
        %6155 = vdwg.mxu0
        %v6156 = vadd.f32 %v779, %v6151
        %6157 = vst [vmem:[#allocation2] sm:$0x3] %v6156
        %p6158 = scmp.eq.s32.totalorder %s24, 1
        // Predicated region
        $region73: #{tpu_custom_call.1} parent=47 // pred_check
          %p6159 = pneg %p6158
        $region74: #{tpu_custom_call.1} parent=47 // pred_check_branch
          %6161 = sbr.rel (%p6159) target = $region76
        $region75: #{tpu_custom_call.1} parent=47 // pred_region
          %v6162 = vld [vmem:[#allocation2] sm:$0x3]
          %v6163 = vld [vmem:[#allocation8] sm:$0x1]
          %v6165 = vlaneseq
          %v6166 = vshrl.u32 %v6165, 7
          %v6167 = vsub.s32 0, %v6166
          %v6168 = vrot.slane %v6163, %v6167
          %v6170 = vadd.f32 %v6162, %v6168
          %v6171 = vmax.f32 %v6170, 0.0
          %v6172 = vld [vmem:[%s3] sm:$0xff]
          %v6173 = vld [vmem:[%s3 + $0x8] sm:$0xff]
          %v6174 = vld [vmem:[%s3 + $0x10] sm:$0xff]
          %v6175 = vld [vmem:[%s3 + $0x18] sm:$0xff]
          %v6176 = vld [vmem:[%s3 + $0x20] sm:$0xff]
          %v6177 = vld [vmem:[%s3 + $0x28] sm:$0xff]
          %v6178 = vld [vmem:[%s3 + $0x30] sm:$0xff]
          %v6179 = vld [vmem:[%s3 + $0x38] sm:$0xff]
          %v6180 = vld [vmem:[%s3 + $0x40] sm:$0xff]
          %v6181 = vld [vmem:[%s3 + $0x48] sm:$0xff]
          %v6182 = vld [vmem:[%s3 + $0x50] sm:$0xff]
          %v6183 = vld [vmem:[%s3 + $0x58] sm:$0xff]
          %v6184 = vld [vmem:[%s3 + $0x60] sm:$0xff]
          %v6185 = vld [vmem:[%s3 + $0x68] sm:$0xff]
          %v6186 = vld [vmem:[%s3 + $0x70] sm:$0xff]
          %v6187 = vld [vmem:[%s3 + $0x78] sm:$0xff]
          %v6188 = vld [vmem:[#allocation9] sm:$0x1]
          %v6190 = vlaneseq
          %v6191 = vshrl.u32 %v6190, 7
          %v6192 = vsub.s32 0, %v6191
          %v6193 = vrot.slane %v6188, %v6192
          %6195 = vmatprep.subr.mxu0 0.0
          %6196 = vmatpush1.msra.mxu0 %v6172
          %6197 = vmatprep.subr.mxu0 0.0
          %6198 = vmatpush1.msra.mxu0 %v6173
          %6199 = vmatprep.subr.mxu0 0.0
          %6200 = vmatpush1.msra.mxu0 %v6174
          %6201 = vmatprep.subr.mxu0 0.0
          %6202 = vmatpush1.msra.mxu0 %v6175
          %6203 = vmatprep.subr.mxu0 0.0
          %6204 = vmatpush1.msra.mxu0 %v6176
          %6205 = vmatprep.subr.mxu0 0.0
          %6206 = vmatpush1.msra.mxu0 %v6177
          %6207 = vmatprep.subr.mxu0 0.0
          %6208 = vmatpush1.msra.mxu0 %v6178
          %6209 = vmatprep.subr.mxu0 0.0
          %6210 = vmatpush1.msra.mxu0 %v6179
          %6211 = vmatprep.subr.mxu0 0.0
          %6212 = vmatpush1.msra.mxu0 %v6180
          %6213 = vmatprep.subr.mxu0 0.0
          %6214 = vmatpush1.msra.mxu0 %v6181
          %6215 = vmatprep.subr.mxu0 0.0
          %6216 = vmatpush1.msra.mxu0 %v6182
          %6217 = vmatprep.subr.mxu0 0.0
          %6218 = vmatpush1.msra.mxu0 %v6183
          %6219 = vmatprep.subr.mxu0 0.0
          %6220 = vmatpush1.msra.mxu0 %v6184
          %6221 = vmatprep.subr.mxu0 0.0
          %6222 = vmatpush1.msra.mxu0 %v6185
          %6223 = vmatprep.subr.mxu0 0.0
          %6224 = vmatpush1.msra.mxu0 %v6186
          %6225 = vmatprep.subr.mxu0 0.0
          %6226 = vmatpush1.msra.mxu0 %v6187
          %6227 = vmatprep.subr.mxu0 0.0
          %6228 = vmatpush1.msra.mxu0 0.0
          %6229 = vmatprep.subr.mxu0 0.0
          %6230 = vmatpush1.msra.mxu0 0.0
          %6231 = vmatprep.subr.mxu0 0.0
          %6232 = vmatpush1.msra.mxu0 0.0
          %6233 = vmatprep.subr.mxu0 0.0
          %6234 = vmatpush1.msra.mxu0 0.0
          %6235 = vmatprep.subr.mxu0 0.0
          %6236 = vmatpush1.msra.mxu0 0.0
          %6237 = vmatprep.subr.mxu0 0.0
          %6238 = vmatpush1.msra.mxu0 0.0
          %6239 = vmatprep.subr.mxu0 0.0
          %6240 = vmatpush1.msra.mxu0 0.0
          %6241 = vmatprep.subr.mxu0 0.0
          %6242 = vmatpush1.msra.mxu0 0.0
          %6243 = vmatprep.subr.mxu0 0.0
          %6244 = vmatpush1.msra.mxu0 0.0
          %6245 = vmatprep.subr.mxu0 0.0
          %6246 = vmatpush1.msra.mxu0 0.0
          %6247 = vmatprep.subr.mxu0 0.0
          %6248 = vmatpush1.msra.mxu0 0.0
          %6249 = vmatprep.subr.mxu0 0.0
          %6250 = vmatpush1.msra.mxu0 0.0
          %6251 = vmatprep.subr.mxu0 0.0
          %6252 = vmatpush1.msra.mxu0 0.0
          %6253 = vmatprep.subr.mxu0 0.0
          %6254 = vmatpush1.msra.mxu0 0.0
          %6255 = vmatprep.subr.mxu0 0.0
          %6256 = vmatpush1.msra.mxu0 0.0
          %6257 = vmatprep.subr.mxu0 0.0
          %6258 = vmatpush1.msra.mxu0 0.0
          %6259 = vmatprep.mubr.f32.mxu0 0.0
          %6260 = vmatmul.mubr.f32.gmra.mrb[0].mxu0 %v6171
          %v6261 = vpop.f32.mrb[0].mxu0
          %v6262 = vadd.f32 %v6193, %v6261
          %v6263 = vpop.f32.mrb[0].mxu0
          %6264 = vdwg.mxu0
          %v6265 = vmax.f32 %v6262, 0.0
          %v6266 = vld [vmem:[%s5] sm:$0xff]
          %v6267 = vld [vmem:[%s5 + $0x8] sm:$0xff]
          %v6268 = vld [vmem:[%s5 + $0x10] sm:$0xff]
          %v6269 = vld [vmem:[%s5 + $0x18] sm:$0xff]
          %v6270 = vld [vmem:[%s5 + $0x20] sm:$0xff]
          %v6271 = vld [vmem:[%s5 + $0x28] sm:$0xff]
          %v6272 = vld [vmem:[%s5 + $0x30] sm:$0xff]
          %v6273 = vld [vmem:[%s5 + $0x38] sm:$0xff]
          %v6274 = vld [vmem:[#allocation11] sm:$0x1]
          %v6276 = vlaneseq
          %v6277 = vshrl.u32 %v6276, 7
          %v6278 = vsub.s32 0, %v6277
          %v6279 = vrot.slane %v6274, %v6278
          %vm6281 = vcmask 523264
          %v6283 = vsel %vm6281, %v6265, 0
          %6285 = vmatprep.subr.mxu0 0.0
          %6286 = vmatpush1.msra.mxu0 %v6266
          %6287 = vmatprep.subr.mxu0 0.0
          %6288 = vmatpush1.msra.mxu0 %v6267
          %6289 = vmatprep.subr.mxu0 0.0
          %6290 = vmatpush1.msra.mxu0 %v6268
          %6291 = vmatprep.subr.mxu0 0.0
          %6292 = vmatpush1.msra.mxu0 %v6269
          %6293 = vmatprep.subr.mxu0 0.0
          %6294 = vmatpush1.msra.mxu0 %v6270
          %6295 = vmatprep.subr.mxu0 0.0
          %6296 = vmatpush1.msra.mxu0 %v6271
          %6297 = vmatprep.subr.mxu0 0.0
          %6298 = vmatpush1.msra.mxu0 %v6272
          %6299 = vmatprep.subr.mxu0 0.0
          %6300 = vmatpush1.msra.mxu0 %v6273
          %6301 = vmatprep.subr.mxu0 0.0
          %6302 = vmatpush1.msra.mxu0 0.0
          %6303 = vmatprep.subr.mxu0 0.0
          %6304 = vmatpush1.msra.mxu0 0.0
          %6305 = vmatprep.subr.mxu0 0.0
          %6306 = vmatpush1.msra.mxu0 0.0
          %6307 = vmatprep.subr.mxu0 0.0
          %6308 = vmatpush1.msra.mxu0 0.0
          %6309 = vmatprep.subr.mxu0 0.0
          %6310 = vmatpush1.msra.mxu0 0.0
          %6311 = vmatprep.subr.mxu0 0.0
          %6312 = vmatpush1.msra.mxu0 0.0
          %6313 = vmatprep.subr.mxu0 0.0
          %6314 = vmatpush1.msra.mxu0 0.0
          %6315 = vmatprep.subr.mxu0 0.0
          %6316 = vmatpush1.msra.mxu0 0.0
          %6317 = vmatprep.subr.mxu0 0.0
          %6318 = vmatpush1.msra.mxu0 0.0
          %6319 = vmatprep.subr.mxu0 0.0
          %6320 = vmatpush1.msra.mxu0 0.0
          %6321 = vmatprep.subr.mxu0 0.0
          %6322 = vmatpush1.msra.mxu0 0.0
          %6323 = vmatprep.subr.mxu0 0.0
          %6324 = vmatpush1.msra.mxu0 0.0
          %6325 = vmatprep.subr.mxu0 0.0
          %6326 = vmatpush1.msra.mxu0 0.0
          %6327 = vmatprep.subr.mxu0 0.0
          %6328 = vmatpush1.msra.mxu0 0.0
          %6329 = vmatprep.subr.mxu0 0.0
          %6330 = vmatpush1.msra.mxu0 0.0
          %6331 = vmatprep.subr.mxu0 0.0
          %6332 = vmatpush1.msra.mxu0 0.0
          %6333 = vmatprep.subr.mxu0 0.0
          %6334 = vmatpush1.msra.mxu0 0.0
          %6335 = vmatprep.subr.mxu0 0.0
          %6336 = vmatpush1.msra.mxu0 0.0
          %6337 = vmatprep.subr.mxu0 0.0
          %6338 = vmatpush1.msra.mxu0 0.0
          %6339 = vmatprep.subr.mxu0 0.0
          %6340 = vmatpush1.msra.mxu0 0.0
          %6341 = vmatprep.subr.mxu0 0.0
          %6342 = vmatpush1.msra.mxu0 0.0
          %6343 = vmatprep.subr.mxu0 0.0
          %6344 = vmatpush1.msra.mxu0 0.0
          %6345 = vmatprep.subr.mxu0 0.0
          %6346 = vmatpush1.msra.mxu0 0.0
          %6347 = vmatprep.subr.mxu0 0.0
          %6348 = vmatpush1.msra.mxu0 0.0
          %6349 = vmatprep.mubr.f32.mxu0 0.0
          %6350 = vmatmul.mubr.f32.gmra.mrb[0].mxu0 %v6283
          %v6351 = vpop.f32.mrb[0].mxu0
          %v6352 = vadd.f32 %v6279, %v6351
          %v6353 = vpop.f32.mrb[0].mxu0
          %6354 = vdwg.mxu0
          %vm6355 = vcmask 74752
          %6356 = vst.msk [vmem:[#allocation12] sm:$0x3] %vm6355, %v6352
        $region76: #{tpu_custom_call.1} parent=47 // pred_fallthru
          _
        // Predicated region
        $region77: #{tpu_custom_call.1} parent=47 // pred_check
          %p6357 = pneg %p189
        $region78: #{tpu_custom_call.1} parent=47 // pred_check_branch
          %6359 = sbr.rel (%p6357) target = $region80
        $region79: #{tpu_custom_call.1} parent=47 // pred_region
          %s6361 = ssub.s32 32, 32
          %6362 = vsyncadd [#allocation5], %s6361
          %s6364 = sshll.u32 [#allocation12], 4
          %s6365 = int_to_ptr.vmem [resolvable:$true] %s6364
          %6367 = dma.vmem_to_hbm [thread:$0]  %s6365, 32, %s7, [#allocation5]
        $region80: #{tpu_custom_call.1} parent=47 // pred_fallthru
          _
        // Predicated region
        $region81: #{tpu_custom_call.1} parent=47 // pred_check
          %p6368 = pneg %p189
        $region82: #{tpu_custom_call.1} parent=47 // pred_check_branch
          %6370 = sbr.rel (%p6368) target = $region84
        $region83: #{tpu_custom_call.1} parent=47 // pred_region
          %6371 = dma.done [#allocation5], 32
        $region84: #{tpu_custom_call.1} parent=47 // pred_fallthru
          _
      $region48: #{tpu_custom_call.1} parent=5 // pred_fallthru
        _
      %p6372 = scmp.le.s32.totalorder 2, %s19
      // Predicated region
      $region85: #{tpu_custom_call.1} parent=5 // pred_check
        %p6373 = pneg %p6372
      $region86: #{tpu_custom_call.1} parent=5 // pred_check_branch
        %6375 = sbr.rel (%p6373) target = $region88
      $region87: #{tpu_custom_call.1} parent=5 // pred_region
        %s6376 = ssub.s32 %s19, 2
      $region88: #{tpu_custom_call.1} parent=5 // pred_fallthru
        _
    $region6: #{tpu_custom_call.1} parent=1 // loop_footer
      %s23 = sadd.s32 1, %s19
    $region7: #{tpu_custom_call.1} parent=1 // loop_footer_branch
      %18 = sbr.rel target = $region3
    $region8: #{tpu_custom_call.1} parent=1 // loop_exit
      _
    %6377 = vsyncpa [#allocation4], 1
    %s6378 = scalar_lea.sflag [#allocation4], 1
    %6379 = vsyncpa %s6378, 1
    %6380 = vsyncpa [#allocation7], 1
    %s6381 = scalar_lea.sflag [#allocation7], 1
    %6382 = vsyncpa %s6381, 1
    %6383 = vsyncpa [#allocation10], 1
    %6384 = vsyncpa [#allocation5], 1
    %s6385 = scalar_lea.sflag [#allocation5], 1
    %6386 = vsyncpa %s6385, 1

</llo_original>
